<compile_context>
chip_gen: v7x
topology: tpu7x:2x2x1
jax: 0.10.0
libtpu: 0.0.40
codegen_flags: <defaults>
</compile_context>

<pallas_src>
import functools

import jax
import jax.numpy as jnp
from jax.experimental import pallas as pl
from jax.experimental.pallas import tpu as pltpu


def _round_up(n, m):
    return ((n + m - 1) // m) * m


def _pad_to(a, shape):
    """Zero-pad `a` up to `shape` (per-dim trailing pad)."""
    pads = [(0, s - d) for d, s in zip(a.shape, shape)]
    return jnp.pad(a, pads)


def decoder_kernel(x_ref, mask_ref,
                   pre_w_ref, pre_b_ref,
                   in_w_ref, in_b_ref,
                   rs_w_ref, rs_b_ref,
                   skip_last_w_ref, skip_last_b_ref,
                   proj_w_ref, proj_b_ref,
                   o_ref,
                   h_halo_ref, *,
                   kernel_size, dilation_rate, n_layers, halo):
    G = x_ref.shape[0]              # B * T_ext rows (batch folded into M)
    Hp = pre_w_ref.shape[1]         # lane-padded hidden width
    MELp = proj_w_ref.shape[1]      # lane-padded mel width
    bf16, f32 = jnp.bfloat16, jnp.float32

    # Hoisted mask broadcasts (reused by every layer; JAX does not CSE broadcasts).
    mask1 = mask_ref[...]                                   # (G, 1)  f32
    mask_h = jnp.broadcast_to(mask1, (G, Hp))               # (G, Hp)
    mask_m = mask_h if MELp == Hp else jnp.broadcast_to(mask1, (G, MELp))

    x = (x_ref[...] * mask1).astype(bf16)                   # (G, Cin)

    # pre: 1x1 conv == channel matmul (bf16 operands, f32 accumulation)
    h = (jnp.dot(x, pre_w_ref[...], preferred_element_type=f32)
         + pre_b_ref[...]) * mask_h                         # (G, Hp) f32

    # Zero ONLY the halo rows of the bf16 scratch (they are never written again;
    # the interior [halo, halo+G) is overwritten every layer).
    zeros_halo = jnp.zeros((halo, Hp), h_halo_ref.dtype)
    h_halo_ref[pl.ds(0, halo), :] = zeros_halo
    h_halo_ref[pl.ds(halo + G, halo), :] = zeros_halo

    output = jnp.zeros((G, Hp), f32)                        # skip accumulator

    for i in range(n_layers):                               # static unroll (small NL)
        d = dilation_rate ** i
        pad = d * (kernel_size - 1) // 2

        # Stage the (masked) residual stream into the halo buffer in bf16.
        h_halo_ref[pl.ds(halo, G), :] = h.astype(bf16)

        # Gather K dilated taps as a lane-concatenated (G, K*Hp) bf16 block.
        taps = [h_halo_ref[pl.ds(halo + j * d - pad, G), :]
                for j in range(kernel_size)]
        x_taps = jnp.concatenate(taps, axis=-1)             # (G, K*Hp) bf16

        # ONE fused gate matmul -> (G, 2*Hp); tanh/sigmoid split is a free slice
        # on the lane-128 vreg boundary.
        gates = (jnp.dot(x_taps, in_w_ref[i], preferred_element_type=f32)
                 + in_b_ref[i]).astype(bf16)                # (G, 2*Hp)
        acts = jnp.tanh(gates[:, :Hp]) * jax.nn.sigmoid(gates[:, Hp:])  # (G, Hp) bf16

        if i < n_layers - 1:
            # Fused res|skip 1x1 conv: one (Hp, 2*Hp) matmul.
            rs = (jnp.dot(acts, rs_w_ref[i], preferred_element_type=f32)
                  + rs_b_ref[i])                            # (G, 2*Hp) f32
            h = (h + rs[:, :Hp]) * mask_h                   # residual update
            output = output + rs[:, Hp:]                    # skip accumulation
        else:
            # Last layer has only a skip output (PyTorch WN res_skip last conv).
            output = output + (jnp.dot(acts, skip_last_w_ref[...],
                                       preferred_element_type=f32)
                               + skip_last_b_ref[...])

    wn_out = (output * mask_h).astype(bf16)                 # WN output mask

    # proj: 1x1 conv to (lane-padded) mel; lane-dense unmasked store.
    y = (jnp.dot(wn_out, proj_w_ref[...], preferred_element_type=f32)
         + proj_b_ref[...]) * mask_m                        # (G, MELp) f32
    o_ref[...] = y.astype(o_ref.dtype)


def decoder_forward(x, mask, params, *, hidden, kernel_size, dilation_rate,
                    n_layers, mel):
    assert n_layers >= 2, "demo path assumes n_layers >= 2"
    B, T, Cin = x.shape
    H, K, NL = hidden, kernel_size, n_layers
    Hp = _round_up(H, 128)            # lane-dense hidden width
    MELp = _round_up(mel, 128)        # lane-dense output width
    bf16, f32 = jnp.bfloat16, jnp.float32

    # --- split / fuse / pad / cast weights (once, outside the kernel) ------------
    pre_w = _pad_to(params["pre_w"], (Cin, Hp)).astype(bf16)
    pre_b = _pad_to(params["pre_b"].reshape(1, H), (1, Hp)).astype(f32)

    in_w = params["in_w"]                                   # (NL, K, H, 2H)
    wt = _pad_to(in_w[..., :H], (NL, K, Hp, Hp))            # tanh half
    ws = _pad_to(in_w[..., H:], (NL, K, Hp, Hp))            # sigmoid half
    in_w_f = jnp.concatenate([wt, ws], axis=-1) \
                .reshape(NL, K * Hp, 2 * Hp).astype(bf16)   # fused (K*Hp, 2*Hp)
    in_b = params["in_b"]                                   # (NL, 2H)
    bt = _pad_to(in_b[:, :H].reshape(NL, 1, H), (NL, 1, Hp))
    bs = _pad_to(in_b[:, H:].reshape(NL, 1, H), (NL, 1, Hp))
    in_b_f = jnp.concatenate([bt, bs], axis=-1).astype(f32)  # (NL, 1, 2*Hp)

    res_w = _pad_to(params["res_w"], (NL - 1, Hp, Hp))
    skip_w = _pad_to(params["skip_w"], (NL, Hp, Hp))
    rs_w = jnp.concatenate([res_w, skip_w[:NL - 1]], axis=-1).astype(bf16)  # (NL-1,Hp,2Hp)
    res_b = _pad_to(params["res_b"].reshape(NL - 1, 1, H), (NL - 1, 1, Hp))
    skip_b = _pad_to(params["skip_b"].reshape(NL, 1, H), (NL, 1, Hp))
    rs_b = jnp.concatenate([res_b, skip_b[:NL - 1]], axis=-1).astype(f32)   # (NL-1,1,2Hp)
    skip_last_w = skip_w[NL - 1].astype(bf16)               # (Hp, Hp)
    skip_last_b = skip_b[NL - 1].astype(f32)                # (1, Hp)

    proj_w = _pad_to(params["proj_w"], (Hp, MELp)).astype(bf16)
    proj_b = _pad_to(params["proj_b"].reshape(1, mel), (1, MELp)).astype(f32)

    # --- fold batch into M: per-batch segments with zero-halo gaps ---------------
    max_pad = (dilation_rate ** (NL - 1)) * (K - 1) // 2
    halo = max(16, _round_up(max_pad, 16))   # 16-aligned (bf16 sublane packing)
    Tp = _round_up(T, 8)
    T_ext = Tp + 2 * halo
    G = B * T_ext                            # total M rows processed in one call

    x_g = jnp.pad(x, ((0, 0), (halo, T_ext - halo - T), (0, 0))).reshape(G, Cin)
    mask_g = jnp.pad(mask, ((0, 0), (halo, T_ext - halo - T), (0, 0))) \
                .reshape(G, 1).astype(f32)

    kern = functools.partial(decoder_kernel, kernel_size=K,
                             dilation_rate=dilation_rate, n_layers=NL, halo=halo)

    args = (x_g, mask_g, pre_w, pre_b, in_w_f, in_b_f, rs_w, rs_b,
            skip_last_w, skip_last_b, proj_w, proj_b)

    # VMEM budget from actual buffer sizes (weights/activations/scratch + headroom);
    # cap at 48 MiB to stay under v7x's 64 MiB physical VMEM.
    scratch_bytes = (G + 2 * halo) * Hp * 2                  # bf16 halo scratch
    out_bytes = G * MELp * 4
    in_bytes = sum(int(a.size) * a.dtype.itemsize for a in args)
    vmem_limit = int(min(48 << 20,
                         max(32 << 20,
                             2 * (in_bytes + out_bytes + scratch_bytes) + (16 << 20))))

    vmem = pltpu.MemorySpace.VMEM
    # No grid: single invocation, whole arrays mapped once into VMEM -> constant-index
    # weights are single-buffered by construction (no pipeline double buffers).
    out = pl.pallas_call(
        kern,
        out_shape=jax.ShapeDtypeStruct((G, MELp), jnp.float32),
        in_specs=[pl.BlockSpec(memory_space=vmem) for _ in args],
        out_specs=pl.BlockSpec(memory_space=vmem),
        scratch_shapes=[pltpu.VMEM((G + 2 * halo, Hp), jnp.bfloat16)],
        compiler_params=pltpu.CompilerParams(vmem_limit_bytes=vmem_limit),
    )(*args)

    return out.reshape(B, T_ext, MELp)[:, halo:halo + T, :mel]


def ref_forward(x, mask, p, *, hidden, kernel_size, dilation_rate, n_layers):
    """Pure-JAX f32 reference mirroring the PyTorch module (uses lax conv)."""
    H = hidden
    xm = x * mask
    h = (jnp.einsum("btc,ch->bth", xm, p["pre_w"]) + p["pre_b"]) * mask
    output = jnp.zeros_like(h)
    for i in range(n_layers):
        d = dilation_rate ** i
        pad = d * (kernel_size - 1) // 2
        w_oih = jnp.transpose(p["in_w"][i], (2, 1, 0))        # (2H, H, K)
        h_nch = jnp.transpose(h, (0, 2, 1))                   # (B, H, T)
        xin = jax.lax.conv_general_dilated(
            h_nch, w_oih, window_strides=(1,), padding=[(pad, pad)],
            rhs_dilation=(d,), dimension_numbers=("NCH", "OIH", "NCH"))
        xin = jnp.transpose(xin, (0, 2, 1)) + p["in_b"][i]
        acts = jnp.tanh(xin[..., :H]) * jax.nn.sigmoid(xin[..., H:])
        output = output + jnp.einsum("bth,hk->btk", acts, p["skip_w"][i]) + p["skip_b"][i]
        if i < n_layers - 1:
            res = jnp.einsum("bth,hk->btk", acts, p["res_w"][i]) + p["res_b"][i]
            h = (h + res) * mask
    output = output * mask
    return (jnp.einsum("bth,hm->btm", output, p["proj_w"]) + p["proj_b"]) * mask


if __name__ == "__main__":
    # Decoder(in_channels=4, hidden_channels=32, kernel_size=5,
    #         dilation_rate=2, n_layers=3, mel_size=80, gin_channels=0)
    B, T = 2, 64
    CIN, H, K, DR, NL, MEL = 4, 32, 5, 2, 3, 80

    key = jax.random.PRNGKey(0)
    ks = jax.random.split(key, 12)
    s = 0.1
    params = dict(
        pre_w=s * jax.random.normal(ks[0], (CIN, H), jnp.float32),
        pre_b=s * jax.random.normal(ks[1], (H,), jnp.float32),
        in_w=s * jax.random.normal(ks[2], (NL, K, H, 2 * H), jnp.float32),
        in_b=s * jax.random.normal(ks[3], (NL, 2 * H), jnp.float32),
        # PyTorch WN: last res_skip conv has only H (skip) outputs -> separate arrays
        res_w=s * jax.random.normal(ks[4], (NL - 1, H, H), jnp.float32),
        res_b=s * jax.random.normal(ks[5], (NL - 1, H), jnp.float32),
        skip_w=s * jax.random.normal(ks[6], (NL, H, H), jnp.float32),
        skip_b=s * jax.random.normal(ks[7], (NL, H), jnp.float32),
        proj_w=s * jax.random.normal(ks[8], (H, MEL), jnp.float32),
        proj_b=s * jax.random.normal(ks[9], (MEL,), jnp.float32),
    )

    x = jax.random.normal(ks[10], (B, T, CIN), jnp.float32)      # (B, T, Cin)
    lengths = jnp.array([T, T - 13])
    mask = (jnp.arange(T)[None, :] < lengths[:, None]
            ).astype(jnp.float32)[..., None]                     # (B, T, 1)

    out = decoder_forward(x, mask, params, hidden=H, kernel_size=K,
                          dilation_rate=DR, n_layers=NL, mel=MEL)
    out = jax.block_until_ready(out)

    ref = ref_forward(x, mask, params, hidden=H, kernel_size=K,
                      dilation_rate=DR, n_layers=NL)
    err = float(jnp.max(jnp.abs(out - ref)))
    assert out.shape == (B, T, MEL), out.shape
    # bf16 MXU operands / bf16 gate transcendentals with f32 accumulation
    assert jnp.allclose(out, ref, atol=2e-2, rtol=2e-2), f"max err {err}"
    print("KERNEL_OK")
</pallas_src>

<mosaic_0001>
module attributes {stable_mosaic.version = 11 : i64} {
  func.func @decoder_kernel(%arg0: memref<192x4xf32, #tpu.memory_space<vmem>>, %arg1: memref<192x1xf32, #tpu.memory_space<vmem>>, %arg2: memref<4x128xbf16, #tpu.memory_space<vmem>>, %arg3: memref<1x128xf32, #tpu.memory_space<vmem>>, %arg4: memref<3x640x256xbf16, #tpu.memory_space<vmem>>, %arg5: memref<3x1x256xf32, #tpu.memory_space<vmem>>, %arg6: memref<2x128x256xbf16, #tpu.memory_space<vmem>>, %arg7: memref<2x1x256xf32, #tpu.memory_space<vmem>>, %arg8: memref<128x128xbf16, #tpu.memory_space<vmem>>, %arg9: memref<1x128xf32, #tpu.memory_space<vmem>>, %arg10: memref<128x128xbf16, #tpu.memory_space<vmem>>, %arg11: memref<1x128xf32, #tpu.memory_space<vmem>>, %arg12: memref<192x128xf32, #tpu.memory_space<vmem>>, %arg13: memref<224x128xbf16, #tpu.memory_space<vmem>>) attributes {dimension_semantics = [], scalar_prefetch = 0 : i64, scratch_operands = 1 : i64, tpu.core_type = #tpu.core_type<tc>} {
    %c0 = arith.constant 0 : index
    %c0_0 = arith.constant 0 : index
    %0 = vector.load %arg1[%c0, %c0_0] : memref<192x1xf32, #tpu.memory_space<vmem>>, vector<192x1xf32>
    %1 = vector.shape_cast %0 : vector<192x1xf32> to vector<192x1xf32>
    %2 = vector.broadcast %1 : vector<192x1xf32> to vector<192x128xf32>
    %c0_1 = arith.constant 0 : index
    %c0_2 = arith.constant 0 : index
    %3 = vector.load %arg0[%c0_1, %c0_2] : memref<192x4xf32, #tpu.memory_space<vmem>>, vector<192x4xf32>
    %4 = vector.broadcast %0 : vector<192x1xf32> to vector<192x4xf32>
    %5 = arith.mulf %3, %4 : vector<192x4xf32>
    %6 = arith.truncf %5 : vector<192x4xf32> to vector<192x4xbf16>
    %c0_3 = arith.constant 0 : index
    %c0_4 = arith.constant 0 : index
    %7 = vector.load %arg2[%c0_3, %c0_4] : memref<4x128xbf16, #tpu.memory_space<vmem>>, vector<4x128xbf16>
    %cst = arith.constant dense<0.000000e+00> : vector<192x128xf32>
    %8 = tpu.matmul %6, %7, %cst {dimension_numbers = #tpu.dot_dimension_numbers<[1], [0], [0], [1], [0, 0, 1, 1], [], []>} : vector<192x4xbf16>, vector<4x128xbf16>, vector<192x128xf32> -> vector<192x128xf32>
    %c0_5 = arith.constant 0 : index
    %c0_6 = arith.constant 0 : index
    %9 = vector.load %arg3[%c0_5, %c0_6] : memref<1x128xf32, #tpu.memory_space<vmem>>, vector<1x128xf32>
    %10 = vector.broadcast %9 : vector<1x128xf32> to vector<192x128xf32>
    %11 = arith.addf %8, %10 : vector<192x128xf32>
    %12 = arith.mulf %11, %2 : vector<192x128xf32>
    %cst_7 = arith.constant 0.000000e+00 : bf16
    %13 = vector.broadcast %cst_7 : bf16 to vector<16x128xbf16>
    %c0_8 = arith.constant 0 : index
    %c0_9 = arith.constant 0 : index
    %14 = vector.load %arg13[%c0_8, %c0_9] : memref<224x128xbf16, #tpu.memory_space<vmem>>, vector<16x128xbf16>
    tpu.vector_store %arg13[%c0_8, %c0_9], %13 {strides = array<i32>} : memref<224x128xbf16, #tpu.memory_space<vmem>>, vector<16x128xbf16>,
    %c208 = arith.constant 208 : index
    %c0_10 = arith.constant 0 : index
    %15 = vector.load %arg13[%c208, %c0_10] : memref<224x128xbf16, #tpu.memory_space<vmem>>, vector<16x128xbf16>
    tpu.vector_store %arg13[%c208, %c0_10], %13 {strides = array<i32>} : memref<224x128xbf16, #tpu.memory_space<vmem>>, vector<16x128xbf16>,
    %cst_11 = arith.constant 0.000000e+00 : f32
    %16 = vector.broadcast %cst_11 : f32 to vector<192x128xf32>
    %17 = arith.truncf %12 : vector<192x128xf32> to vector<192x128xbf16>
    %c16 = arith.constant 16 : index
    %c0_12 = arith.constant 0 : index
    %18 = vector.load %arg13[%c16, %c0_12] : memref<224x128xbf16, #tpu.memory_space<vmem>>, vector<192x128xbf16>
    tpu.vector_store %arg13[%c16, %c0_12], %17 {strides = array<i32>} : memref<224x128xbf16, #tpu.memory_space<vmem>>, vector<192x128xbf16>,
    %c14 = arith.constant 14 : index
    %c0_13 = arith.constant 0 : index
    %19 = vector.load %arg13[%c14, %c0_13] : memref<224x128xbf16, #tpu.memory_space<vmem>>, vector<192x128xbf16>
    %c15 = arith.constant 15 : index
    %c0_14 = arith.constant 0 : index
    %20 = vector.load %arg13[%c15, %c0_14] : memref<224x128xbf16, #tpu.memory_space<vmem>>, vector<192x128xbf16>
    %c16_15 = arith.constant 16 : index
    %c0_16 = arith.constant 0 : index
    %21 = vector.load %arg13[%c16_15, %c0_16] : memref<224x128xbf16, #tpu.memory_space<vmem>>, vector<192x128xbf16>
    %c17 = arith.constant 17 : index
    %c0_17 = arith.constant 0 : index
    %22 = vector.load %arg13[%c17, %c0_17] : memref<224x128xbf16, #tpu.memory_space<vmem>>, vector<192x128xbf16>
    %c18 = arith.constant 18 : index
    %c0_18 = arith.constant 0 : index
    %23 = vector.load %arg13[%c18, %c0_18] : memref<224x128xbf16, #tpu.memory_space<vmem>>, vector<192x128xbf16>
    %24 = tpu.concatenate %19, %20, %21, %22, %23 in 1 : vector<192x128xbf16>, vector<192x128xbf16>, vector<192x128xbf16>, vector<192x128xbf16>, vector<192x128xbf16> -> vector<192x640xbf16>
    %c0_19 = arith.constant 0 : index
    %c0_20 = arith.constant 0 : index
    %c0_21 = arith.constant 0 : index
    %25 = vector.load %arg4[%c0_19, %c0_20, %c0_21] : memref<3x640x256xbf16, #tpu.memory_space<vmem>>, vector<1x640x256xbf16>
    %26 = vector.shape_cast %25 : vector<1x640x256xbf16> to vector<640x256xbf16>
    %cst_22 = arith.constant dense<0.000000e+00> : vector<192x256xf32>
    %27 = tpu.matmul %24, %26, %cst_22 {dimension_numbers = #tpu.dot_dimension_numbers<[1], [0], [0], [1], [0, 0, 1, 1], [], []>} : vector<192x640xbf16>, vector<640x256xbf16>, vector<192x256xf32> -> vector<192x256xf32>
    %c0_23 = arith.constant 0 : index
    %c0_24 = arith.constant 0 : index
    %c0_25 = arith.constant 0 : index
    %28 = vector.load %arg5[%c0_23, %c0_24, %c0_25] : memref<3x1x256xf32, #tpu.memory_space<vmem>>, vector<1x1x256xf32>
    %29 = vector.shape_cast %28 : vector<1x1x256xf32> to vector<1x256xf32>
    %30 = vector.broadcast %29 : vector<1x256xf32> to vector<192x256xf32>
    %31 = arith.addf %27, %30 : vector<192x256xf32>
    %32 = arith.truncf %31 : vector<192x256xf32> to vector<192x256xbf16>
    %33 = vector.extract_strided_slice %32 {offsets = [0, 0], sizes = [192, 128], strides = [1, 1]} : vector<192x256xbf16> to vector<192x128xbf16>
    %34 = math.tanh %33 : vector<192x128xbf16>
    %35 = vector.extract_strided_slice %32 {offsets = [0, 128], sizes = [192, 128], strides = [1, 1]} : vector<192x256xbf16> to vector<192x128xbf16>
    %36 = arith.negf %35 : vector<192x128xbf16>
    %37 = math.exp %36 : vector<192x128xbf16>
    %cst_26 = arith.constant 1.000000e+00 : bf16
    %38 = vector.broadcast %cst_26 : bf16 to vector<192x128xbf16>
    %39 = arith.addf %38, %37 : vector<192x128xbf16>
    %40 = arith.divf %38, %39 : vector<192x128xbf16>
    %41 = arith.mulf %34, %40 : vector<192x128xbf16>
    %c0_27 = arith.constant 0 : index
    %c0_28 = arith.constant 0 : index
    %c0_29 = arith.constant 0 : index
    %42 = vector.load %arg6[%c0_27, %c0_28, %c0_29] : memref<2x128x256xbf16, #tpu.memory_space<vmem>>, vector<1x128x256xbf16>
    %43 = vector.shape_cast %42 : vector<1x128x256xbf16> to vector<128x256xbf16>
    %cst_30 = arith.constant dense<0.000000e+00> : vector<192x256xf32>
    %44 = tpu.matmul %41, %43, %cst_30 {dimension_numbers = #tpu.dot_dimension_numbers<[1], [0], [0], [1], [0, 0, 1, 1], [], []>} : vector<192x128xbf16>, vector<128x256xbf16>, vector<192x256xf32> -> vector<192x256xf32>
    %c0_31 = arith.constant 0 : index
    %c0_32 = arith.constant 0 : index
    %c0_33 = arith.constant 0 : index
    %45 = vector.load %arg7[%c0_31, %c0_32, %c0_33] : memref<2x1x256xf32, #tpu.memory_space<vmem>>, vector<1x1x256xf32>
    %46 = vector.shape_cast %45 : vector<1x1x256xf32> to vector<1x256xf32>
    %47 = vector.broadcast %46 : vector<1x256xf32> to vector<192x256xf32>
    %48 = arith.addf %44, %47 : vector<192x256xf32>
    %49 = vector.extract_strided_slice %48 {offsets = [0, 0], sizes = [192, 128], strides = [1, 1]} : vector<192x256xf32> to vector<192x128xf32>
    %50 = arith.addf %12, %49 : vector<192x128xf32>
    %51 = arith.mulf %50, %2 : vector<192x128xf32>
    %52 = vector.extract_strided_slice %48 {offsets = [0, 128], sizes = [192, 128], strides = [1, 1]} : vector<192x256xf32> to vector<192x128xf32>
    %53 = arith.addf %16, %52 : vector<192x128xf32>
    %54 = arith.truncf %51 : vector<192x128xf32> to vector<192x128xbf16>
    %c16_34 = arith.constant 16 : index
    %c0_35 = arith.constant 0 : index
    %55 = vector.load %arg13[%c16_34, %c0_35] : memref<224x128xbf16, #tpu.memory_space<vmem>>, vector<192x128xbf16>
    tpu.vector_store %arg13[%c16_34, %c0_35], %54 {strides = array<i32>} : memref<224x128xbf16, #tpu.memory_space<vmem>>, vector<192x128xbf16>,
    %c12 = arith.constant 12 : index
    %c0_36 = arith.constant 0 : index
    %56 = vector.load %arg13[%c12, %c0_36] : memref<224x128xbf16, #tpu.memory_space<vmem>>, vector<192x128xbf16>
    %c14_37 = arith.constant 14 : index
    %c0_38 = arith.constant 0 : index
    %57 = vector.load %arg13[%c14_37, %c0_38] : memref<224x128xbf16, #tpu.memory_space<vmem>>, vector<192x128xbf16>
    %c16_39 = arith.constant 16 : index
    %c0_40 = arith.constant 0 : index
    %58 = vector.load %arg13[%c16_39, %c0_40] : memref<224x128xbf16, #tpu.memory_space<vmem>>, vector<192x128xbf16>
    %c18_41 = arith.constant 18 : index
    %c0_42 = arith.constant 0 : index
    %59 = vector.load %arg13[%c18_41, %c0_42] : memref<224x128xbf16, #tpu.memory_space<vmem>>, vector<192x128xbf16>
    %c20 = arith.constant 20 : index
    %c0_43 = arith.constant 0 : index
    %60 = vector.load %arg13[%c20, %c0_43] : memref<224x128xbf16, #tpu.memory_space<vmem>>, vector<192x128xbf16>
    %61 = tpu.concatenate %56, %57, %58, %59, %60 in 1 : vector<192x128xbf16>, vector<192x128xbf16>, vector<192x128xbf16>, vector<192x128xbf16>, vector<192x128xbf16> -> vector<192x640xbf16>
    %c1 = arith.constant 1 : index
    %c0_44 = arith.constant 0 : index
    %c0_45 = arith.constant 0 : index
    %62 = vector.load %arg4[%c1, %c0_44, %c0_45] : memref<3x640x256xbf16, #tpu.memory_space<vmem>>, vector<1x640x256xbf16>
    %63 = vector.shape_cast %62 : vector<1x640x256xbf16> to vector<640x256xbf16>
    %cst_46 = arith.constant dense<0.000000e+00> : vector<192x256xf32>
    %64 = tpu.matmul %61, %63, %cst_46 {dimension_numbers = #tpu.dot_dimension_numbers<[1], [0], [0], [1], [0, 0, 1, 1], [], []>} : vector<192x640xbf16>, vector<640x256xbf16>, vector<192x256xf32> -> vector<192x256xf32>
    %c1_47 = arith.constant 1 : index
    %c0_48 = arith.constant 0 : index
    %c0_49 = arith.constant 0 : index
    %65 = vector.load %arg5[%c1_47, %c0_48, %c0_49] : memref<3x1x256xf32, #tpu.memory_space<vmem>>, vector<1x1x256xf32>
    %66 = vector.shape_cast %65 : vector<1x1x256xf32> to vector<1x256xf32>
    %67 = vector.broadcast %66 : vector<1x256xf32> to vector<192x256xf32>
    %68 = arith.addf %64, %67 : vector<192x256xf32>
    %69 = arith.truncf %68 : vector<192x256xf32> to vector<192x256xbf16>
    %70 = vector.extract_strided_slice %69 {offsets = [0, 0], sizes = [192, 128], strides = [1, 1]} : vector<192x256xbf16> to vector<192x128xbf16>
    %71 = math.tanh %70 : vector<192x128xbf16>
    %72 = vector.extract_strided_slice %69 {offsets = [0, 128], sizes = [192, 128], strides = [1, 1]} : vector<192x256xbf16> to vector<192x128xbf16>
    %73 = arith.negf %72 : vector<192x128xbf16>
    %74 = math.exp %73 : vector<192x128xbf16>
    %cst_50 = arith.constant 1.000000e+00 : bf16
    %75 = vector.broadcast %cst_50 : bf16 to vector<192x128xbf16>
    %76 = arith.addf %75, %74 : vector<192x128xbf16>
    %77 = arith.divf %75, %76 : vector<192x128xbf16>
    %78 = arith.mulf %71, %77 : vector<192x128xbf16>
    %c1_51 = arith.constant 1 : index
    %c0_52 = arith.constant 0 : index
    %c0_53 = arith.constant 0 : index
    %79 = vector.load %arg6[%c1_51, %c0_52, %c0_53] : memref<2x128x256xbf16, #tpu.memory_space<vmem>>, vector<1x128x256xbf16>
    %80 = vector.shape_cast %79 : vector<1x128x256xbf16> to vector<128x256xbf16>
    %cst_54 = arith.constant dense<0.000000e+00> : vector<192x256xf32>
    %81 = tpu.matmul %78, %80, %cst_54 {dimension_numbers = #tpu.dot_dimension_numbers<[1], [0], [0], [1], [0, 0, 1, 1], [], []>} : vector<192x128xbf16>, vector<128x256xbf16>, vector<192x256xf32> -> vector<192x256xf32>
    %c1_55 = arith.constant 1 : index
    %c0_56 = arith.constant 0 : index
    %c0_57 = arith.constant 0 : index
    %82 = vector.load %arg7[%c1_55, %c0_56, %c0_57] : memref<2x1x256xf32, #tpu.memory_space<vmem>>, vector<1x1x256xf32>
    %83 = vector.shape_cast %82 : vector<1x1x256xf32> to vector<1x256xf32>
    %84 = vector.broadcast %83 : vector<1x256xf32> to vector<192x256xf32>
    %85 = arith.addf %81, %84 : vector<192x256xf32>
    %86 = vector.extract_strided_slice %85 {offsets = [0, 0], sizes = [192, 128], strides = [1, 1]} : vector<192x256xf32> to vector<192x128xf32>
    %87 = arith.addf %51, %86 : vector<192x128xf32>
    %88 = arith.mulf %87, %2 : vector<192x128xf32>
    %89 = vector.extract_strided_slice %85 {offsets = [0, 128], sizes = [192, 128], strides = [1, 1]} : vector<192x256xf32> to vector<192x128xf32>
    %90 = arith.addf %53, %89 : vector<192x128xf32>
    %91 = arith.truncf %88 : vector<192x128xf32> to vector<192x128xbf16>
    %c16_58 = arith.constant 16 : index
    %c0_59 = arith.constant 0 : index
    %92 = vector.load %arg13[%c16_58, %c0_59] : memref<224x128xbf16, #tpu.memory_space<vmem>>, vector<192x128xbf16>
    tpu.vector_store %arg13[%c16_58, %c0_59], %91 {strides = array<i32>} : memref<224x128xbf16, #tpu.memory_space<vmem>>, vector<192x128xbf16>,
    %c8 = arith.constant 8 : index
    %c0_60 = arith.constant 0 : index
    %93 = vector.load %arg13[%c8, %c0_60] : memref<224x128xbf16, #tpu.memory_space<vmem>>, vector<192x128xbf16>
    %c12_61 = arith.constant 12 : index
    %c0_62 = arith.constant 0 : index
    %94 = vector.load %arg13[%c12_61, %c0_62] : memref<224x128xbf16, #tpu.memory_space<vmem>>, vector<192x128xbf16>
    %c16_63 = arith.constant 16 : index
    %c0_64 = arith.constant 0 : index
    %95 = vector.load %arg13[%c16_63, %c0_64] : memref<224x128xbf16, #tpu.memory_space<vmem>>, vector<192x128xbf16>
    %c20_65 = arith.constant 20 : index
    %c0_66 = arith.constant 0 : index
    %96 = vector.load %arg13[%c20_65, %c0_66] : memref<224x128xbf16, #tpu.memory_space<vmem>>, vector<192x128xbf16>
    %c24 = arith.constant 24 : index
    %c0_67 = arith.constant 0 : index
    %97 = vector.load %arg13[%c24, %c0_67] : memref<224x128xbf16, #tpu.memory_space<vmem>>, vector<192x128xbf16>
    %98 = tpu.concatenate %93, %94, %95, %96, %97 in 1 : vector<192x128xbf16>, vector<192x128xbf16>, vector<192x128xbf16>, vector<192x128xbf16>, vector<192x128xbf16> -> vector<192x640xbf16>
    %c2 = arith.constant 2 : index
    %c0_68 = arith.constant 0 : index
    %c0_69 = arith.constant 0 : index
    %99 = vector.load %arg4[%c2, %c0_68, %c0_69] : memref<3x640x256xbf16, #tpu.memory_space<vmem>>, vector<1x640x256xbf16>
    %100 = vector.shape_cast %99 : vector<1x640x256xbf16> to vector<640x256xbf16>
    %cst_70 = arith.constant dense<0.000000e+00> : vector<192x256xf32>
    %101 = tpu.matmul %98, %100, %cst_70 {dimension_numbers = #tpu.dot_dimension_numbers<[1], [0], [0], [1], [0, 0, 1, 1], [], []>} : vector<192x640xbf16>, vector<640x256xbf16>, vector<192x256xf32> -> vector<192x256xf32>
    %c2_71 = arith.constant 2 : index
    %c0_72 = arith.constant 0 : index
    %c0_73 = arith.constant 0 : index
    %102 = vector.load %arg5[%c2_71, %c0_72, %c0_73] : memref<3x1x256xf32, #tpu.memory_space<vmem>>, vector<1x1x256xf32>
    %103 = vector.shape_cast %102 : vector<1x1x256xf32> to vector<1x256xf32>
    %104 = vector.broadcast %103 : vector<1x256xf32> to vector<192x256xf32>
    %105 = arith.addf %101, %104 : vector<192x256xf32>
    %106 = arith.truncf %105 : vector<192x256xf32> to vector<192x256xbf16>
    %107 = vector.extract_strided_slice %106 {offsets = [0, 0], sizes = [192, 128], strides = [1, 1]} : vector<192x256xbf16> to vector<192x128xbf16>
    %108 = math.tanh %107 : vector<192x128xbf16>
    %109 = vector.extract_strided_slice %106 {offsets = [0, 128], sizes = [192, 128], strides = [1, 1]} : vector<192x256xbf16> to vector<192x128xbf16>
    %110 = arith.negf %109 : vector<192x128xbf16>
    %111 = math.exp %110 : vector<192x128xbf16>
    %cst_74 = arith.constant 1.000000e+00 : bf16
    %112 = vector.broadcast %cst_74 : bf16 to vector<192x128xbf16>
    %113 = arith.addf %112, %111 : vector<192x128xbf16>
    %114 = arith.divf %112, %113 : vector<192x128xbf16>
    %115 = arith.mulf %108, %114 : vector<192x128xbf16>
    %c0_75 = arith.constant 0 : index
    %c0_76 = arith.constant 0 : index
    %116 = vector.load %arg8[%c0_75, %c0_76] : memref<128x128xbf16, #tpu.memory_space<vmem>>, vector<128x128xbf16>
    %cst_77 = arith.constant dense<0.000000e+00> : vector<192x128xf32>
    %117 = tpu.matmul %115, %116, %cst_77 {dimension_numbers = #tpu.dot_dimension_numbers<[1], [0], [0], [1], [0, 0, 1, 1], [], []>} : vector<192x128xbf16>, vector<128x128xbf16>, vector<192x128xf32> -> vector<192x128xf32>
    %c0_78 = arith.constant 0 : index
    %c0_79 = arith.constant 0 : index
    %118 = vector.load %arg9[%c0_78, %c0_79] : memref<1x128xf32, #tpu.memory_space<vmem>>, vector<1x128xf32>
    %119 = vector.broadcast %118 : vector<1x128xf32> to vector<192x128xf32>
    %120 = arith.addf %117, %119 : vector<192x128xf32>
    %121 = arith.addf %90, %120 : vector<192x128xf32>
    %122 = arith.mulf %121, %2 : vector<192x128xf32>
    %123 = arith.truncf %122 : vector<192x128xf32> to vector<192x128xbf16>
    %c0_80 = arith.constant 0 : index
    %c0_81 = arith.constant 0 : index
    %124 = vector.load %arg10[%c0_80, %c0_81] : memref<128x128xbf16, #tpu.memory_space<vmem>>, vector<128x128xbf16>
    %cst_82 = arith.constant dense<0.000000e+00> : vector<192x128xf32>
    %125 = tpu.matmul %123, %124, %cst_82 {dimension_numbers = #tpu.dot_dimension_numbers<[1], [0], [0], [1], [0, 0, 1, 1], [], []>} : vector<192x128xbf16>, vector<128x128xbf16>, vector<192x128xf32> -> vector<192x128xf32>
    %c0_83 = arith.constant 0 : index
    %c0_84 = arith.constant 0 : index
    %126 = vector.load %arg11[%c0_83, %c0_84] : memref<1x128xf32, #tpu.memory_space<vmem>>, vector<1x128xf32>
    %127 = vector.broadcast %126 : vector<1x128xf32> to vector<192x128xf32>
    %128 = arith.addf %125, %127 : vector<192x128xf32>
    %129 = arith.mulf %128, %2 : vector<192x128xf32>
    %c0_85 = arith.constant 0 : index
    %c0_86 = arith.constant 0 : index
    %130 = vector.load %arg12[%c0_85, %c0_86] : memref<192x128xf32, #tpu.memory_space<vmem>>, vector<192x128xf32>
    tpu.vector_store %arg12[%c0_85, %c0_86], %129 {strides = array<i32>} : memref<192x128xf32, #tpu.memory_space<vmem>>, vector<192x128xf32>,
    return
  }
}

</mosaic_0001>

<llo_original>
// kernel: tpu_custom_call.1
$region0: #{tpu_custom_call.1}
  #allocation0 [shape = 'u32[]', space=smem, size = 0x4, offset = 0x4, fixed_abs, tag = 'smem constant byte address 0x4 - core index']
  #allocation1 [shape = 'u32[144,128]{1,0:T(1,128)}', space=vmem, size = 0x12000, scoped, tag = 'internal scratch']
  #allocation2 [shape = 'bf16[224,128]{1,0:T(16,128)(2,1)}', space=vmem, size = 0xe000, scoped, tag = 'scratch operand']
  %s0 = inlined_call_operand.vmem [shape: f32[192,4], index: 0, kind: input, shape index: {}]
  %s1 = inlined_call_operand.vmem [shape: f32[192,1], index: 1, kind: input, shape index: {}]
  %s2 = inlined_call_operand.vmem [shape: bf16[4,128], index: 2, kind: input, shape index: {}]
  %s3 = inlined_call_operand.vmem [shape: f32[1,128], index: 3, kind: input, shape index: {}]
  %s4 = inlined_call_operand.hbm [shape: bf16[3,640,256], index: 4, kind: input, shape index: {}]
  %s5 = inlined_call_operand.vmem [shape: f32[3,1,256], index: 5, kind: input, shape index: {}]
  %s6 = inlined_call_operand.vmem [shape: bf16[2,128,256], index: 6, kind: input, shape index: {}]
  %s7 = inlined_call_operand.vmem [shape: f32[2,1,256], index: 7, kind: input, shape index: {}]
  %s8 = inlined_call_operand.vmem [shape: bf16[128,128], index: 8, kind: input, shape index: {}]
  %s9 = inlined_call_operand.vmem [shape: f32[1,128], index: 9, kind: input, shape index: {}]
  %s10 = inlined_call_operand.vmem [shape: bf16[128,128], index: 10, kind: input, shape index: {}]
  %s11 = inlined_call_operand.vmem [shape: f32[1,128], index: 11, kind: input, shape index: {}]
  %s12 = inlined_call_operand.hbm [shape: f32[192,128], index: 12, kind: output, shape index: {}]
  %s13 = sld [smem:[#allocation0]]
  $region62: #{tpu_custom_call.1} parent=0
    _
  %s15 = ssub.s32 1, %s13
  %s16 = scalar_select 0, %s15, %s13
  $region1: #{tpu_custom_call.1} parent=0
    #allocation3 [shape = 'u8[983040]{0}', space=vmem, size = 0xf0000, scoped, tag = 'input window, operand 4, single buffered']
    #allocation4 [shape = 's32[1]{0}', space=sflag, size = 0x4, scoped, tag = 'scoped memory for tpu_custom_call.1']
    #allocation5 [shape = 's32[1]{0}', space=sflag, size = 0x4, scoped, tag = 'scoped memory for tpu_custom_call.1']
    #allocation6 [shape = 'u8[98304]{0}', space=vmem, size = 0x18000, scoped, tag = 'output window, operand 0, single buffered']
    %17 = vsyncpa [#allocation4], 0
    %18 = vsyncpa [#allocation5], 0
    // Predicated region
    $region2: #{tpu_custom_call.1} parent=1 // pred_check
      _
    $region3: #{tpu_custom_call.1} parent=1 // pred_check_branch
      %20 = sbr.rel (0) target = $region5
    $region4: #{tpu_custom_call.1} parent=1 // pred_region
      _
    $region5: #{tpu_custom_call.1} parent=1 // pred_fallthru
      _
    // Predicated region
    $region6: #{tpu_custom_call.1} parent=1 // pred_check
      _
    $region7: #{tpu_custom_call.1} parent=1 // pred_check_branch
      %22 = sbr.rel (0) target = $region9
    $region8: #{tpu_custom_call.1} parent=1 // pred_region
      _
    $region9: #{tpu_custom_call.1} parent=1 // pred_fallthru
      _
    // Predicated region
    $region10: #{tpu_custom_call.1} parent=1 // pred_check
      _
    $region11: #{tpu_custom_call.1} parent=1 // pred_check_branch
      %24 = sbr.rel (0) target = $region13
    $region12: #{tpu_custom_call.1} parent=1 // pred_region
      _
    $region13: #{tpu_custom_call.1} parent=1 // pred_fallthru
      _
    // Predicated region
    $region14: #{tpu_custom_call.1} parent=1 // pred_check
      _
    $region15: #{tpu_custom_call.1} parent=1 // pred_check_branch
      %26 = sbr.rel (0) target = $region17
    $region16: #{tpu_custom_call.1} parent=1 // pred_region
      _
    $region17: #{tpu_custom_call.1} parent=1 // pred_fallthru
      _
    // Predicated region
    $region18: #{tpu_custom_call.1} parent=1 // pred_check
      _
    $region19: #{tpu_custom_call.1} parent=1 // pred_check_branch
      %28 = sbr.rel (0) target = $region21
    $region20: #{tpu_custom_call.1} parent=1 // pred_region
      %s30 = ssub.s32 30720, 30720
      %31 = vsyncadd [#allocation4], %s30
      %s32 = sshll.u32 [#allocation3], 4
      %s33 = int_to_ptr.vmem [resolvable:$true] %s32
      %38 = dma.hbm_to_vmem [thread:$0]  %s4, 30720, %s33, [#allocation4], 128, 128, 8
    $region21: #{tpu_custom_call.1} parent=1 // pred_fallthru
      _
    // Predicated region
    $region22: #{tpu_custom_call.1} parent=1 // pred_check
      _
    $region23: #{tpu_custom_call.1} parent=1 // pred_check_branch
      %40 = sbr.rel (0) target = $region25
    $region24: #{tpu_custom_call.1} parent=1 // pred_region
      _
    $region25: #{tpu_custom_call.1} parent=1 // pred_fallthru
      _
    // Predicated region
    $region26: #{tpu_custom_call.1} parent=1 // pred_check
      _
    $region27: #{tpu_custom_call.1} parent=1 // pred_check_branch
      %42 = sbr.rel (0) target = $region29
    $region28: #{tpu_custom_call.1} parent=1 // pred_region
      _
    $region29: #{tpu_custom_call.1} parent=1 // pred_fallthru
      _
    // Predicated region
    $region30: #{tpu_custom_call.1} parent=1 // pred_check
      _
    $region31: #{tpu_custom_call.1} parent=1 // pred_check_branch
      %44 = sbr.rel (0) target = $region33
    $region32: #{tpu_custom_call.1} parent=1 // pred_region
      _
    $region33: #{tpu_custom_call.1} parent=1 // pred_fallthru
      _
    // Predicated region
    $region34: #{tpu_custom_call.1} parent=1 // pred_check
      _
    $region35: #{tpu_custom_call.1} parent=1 // pred_check_branch
      %46 = sbr.rel (0) target = $region37
    $region36: #{tpu_custom_call.1} parent=1 // pred_region
      _
    $region37: #{tpu_custom_call.1} parent=1 // pred_fallthru
      _
    // Predicated region
    $region38: #{tpu_custom_call.1} parent=1 // pred_check
      _
    $region39: #{tpu_custom_call.1} parent=1 // pred_check_branch
      %48 = sbr.rel (0) target = $region41
    $region40: #{tpu_custom_call.1} parent=1 // pred_region
      _
    $region41: #{tpu_custom_call.1} parent=1 // pred_fallthru
      _
    // Predicated region
    $region42: #{tpu_custom_call.1} parent=1 // pred_check
      _
    $region43: #{tpu_custom_call.1} parent=1 // pred_check_branch
      %50 = sbr.rel (0) target = $region45
    $region44: #{tpu_custom_call.1} parent=1 // pred_region
      _
    $region45: #{tpu_custom_call.1} parent=1 // pred_fallthru
      _
    // Predicated region
    $region46: #{tpu_custom_call.1} parent=1 // pred_check
      _
    $region47: #{tpu_custom_call.1} parent=1 // pred_check_branch
      %52 = sbr.rel (0) target = $region49
    $region48: #{tpu_custom_call.1} parent=1 // pred_region
      _
    $region49: #{tpu_custom_call.1} parent=1 // pred_fallthru
      _
    // Predicated region
    $region50: #{tpu_custom_call.1} parent=1 // pred_check
      _
    $region51: #{tpu_custom_call.1} parent=1 // pred_check_branch
      %54 = sbr.rel (0) target = $region53
    $region52: #{tpu_custom_call.1} parent=1 // pred_region
      %55 = dma.done [#allocation4], 30720
    $region53: #{tpu_custom_call.1} parent=1 // pred_fallthru
      _
    %v58 = vld [vmem:[%s1] sm:$0xff]
    %v59 = vld [vmem:[%s1 + $0x8] sm:$0xff]
    %v60 = vld [vmem:[%s1 + $0x10] sm:$0xff]
    %v61 = vld [vmem:[%s1 + $0x18] sm:$0xff]
    %v62 = vld [vmem:[%s1 + $0x20] sm:$0xff]
    %v63 = vld [vmem:[%s1 + $0x28] sm:$0xff]
    %v64 = vld [vmem:[%s1 + $0x30] sm:$0xff]
    %v65 = vld [vmem:[%s1 + $0x38] sm:$0xff]
    %v66 = vld [vmem:[%s1 + $0x40] sm:$0xff]
    %v67 = vld [vmem:[%s1 + $0x48] sm:$0xff]
    %v68 = vld [vmem:[%s1 + $0x50] sm:$0xff]
    %v69 = vld [vmem:[%s1 + $0x58] sm:$0xff]
    %v70 = vld [vmem:[%s1 + $0x60] sm:$0xff]
    %v71 = vld [vmem:[%s1 + $0x68] sm:$0xff]
    %v72 = vld [vmem:[%s1 + $0x70] sm:$0xff]
    %v73 = vld [vmem:[%s1 + $0x78] sm:$0xff]
    %v74 = vld [vmem:[%s1 + $0x80] sm:$0xff]
    %v75 = vld [vmem:[%s1 + $0x88] sm:$0xff]
    %v76 = vld [vmem:[%s1 + $0x90] sm:$0xff]
    %v77 = vld [vmem:[%s1 + $0x98] sm:$0xff]
    %v78 = vld [vmem:[%s1 + $0xa0] sm:$0xff]
    %v79 = vld [vmem:[%s1 + $0xa8] sm:$0xff]
    %v80 = vld [vmem:[%s1 + $0xb0] sm:$0xff]
    %v81 = vld [vmem:[%s1 + $0xb8] sm:$0xff]
    %83 = vset.pattern.permute.xlu0 0
    %84 = vperm.xlu0 %83, %v58
    %v85 = vpop.permute.xlu0 %84
    %88 = vset.pattern.permute.xlu0 0
    %89 = vperm.xlu0 %88, %v59
    %v90 = vpop.permute.xlu0 %89
    %93 = vset.pattern.permute.xlu0 0
    %94 = vperm.xlu0 %93, %v60
    %v95 = vpop.permute.xlu0 %94
    %98 = vset.pattern.permute.xlu0 0
    %99 = vperm.xlu0 %98, %v61
    %v100 = vpop.permute.xlu0 %99
    %103 = vset.pattern.permute.xlu0 0
    %104 = vperm.xlu0 %103, %v62
    %v105 = vpop.permute.xlu0 %104
    %108 = vset.pattern.permute.xlu0 0
    %109 = vperm.xlu0 %108, %v63
    %v110 = vpop.permute.xlu0 %109
    %113 = vset.pattern.permute.xlu0 0
    %114 = vperm.xlu0 %113, %v64
    %v115 = vpop.permute.xlu0 %114
    %118 = vset.pattern.permute.xlu0 0
    %119 = vperm.xlu0 %118, %v65
    %v120 = vpop.permute.xlu0 %119
    %123 = vset.pattern.permute.xlu0 0
    %124 = vperm.xlu0 %123, %v66
    %v125 = vpop.permute.xlu0 %124
    %128 = vset.pattern.permute.xlu0 0
    %129 = vperm.xlu0 %128, %v67
    %v130 = vpop.permute.xlu0 %129
    %133 = vset.pattern.permute.xlu0 0
    %134 = vperm.xlu0 %133, %v68
    %v135 = vpop.permute.xlu0 %134
    %138 = vset.pattern.permute.xlu0 0
    %139 = vperm.xlu0 %138, %v69
    %v140 = vpop.permute.xlu0 %139
    %143 = vset.pattern.permute.xlu0 0
    %144 = vperm.xlu0 %143, %v70
    %v145 = vpop.permute.xlu0 %144
    %148 = vset.pattern.permute.xlu0 0
    %149 = vperm.xlu0 %148, %v71
    %v150 = vpop.permute.xlu0 %149
    %153 = vset.pattern.permute.xlu0 0
    %154 = vperm.xlu0 %153, %v72
    %v155 = vpop.permute.xlu0 %154
    %158 = vset.pattern.permute.xlu0 0
    %159 = vperm.xlu0 %158, %v73
    %v160 = vpop.permute.xlu0 %159
    %163 = vset.pattern.permute.xlu0 0
    %164 = vperm.xlu0 %163, %v74
    %v165 = vpop.permute.xlu0 %164
    %168 = vset.pattern.permute.xlu0 0
    %169 = vperm.xlu0 %168, %v75
    %v170 = vpop.permute.xlu0 %169
    %173 = vset.pattern.permute.xlu0 0
    %174 = vperm.xlu0 %173, %v76
    %v175 = vpop.permute.xlu0 %174
    %178 = vset.pattern.permute.xlu0 0
    %179 = vperm.xlu0 %178, %v77
    %v180 = vpop.permute.xlu0 %179
    %183 = vset.pattern.permute.xlu0 0
    %184 = vperm.xlu0 %183, %v78
    %v185 = vpop.permute.xlu0 %184
    %188 = vset.pattern.permute.xlu0 0
    %189 = vperm.xlu0 %188, %v79
    %v190 = vpop.permute.xlu0 %189
    %193 = vset.pattern.permute.xlu0 0
    %194 = vperm.xlu0 %193, %v80
    %v195 = vpop.permute.xlu0 %194
    %198 = vset.pattern.permute.xlu0 0
    %199 = vperm.xlu0 %198, %v81
    %v200 = vpop.permute.xlu0 %199
    %v202 = vld [vmem:[%s0] sm:$0xff]
    %v203 = vld [vmem:[%s0 + $0x8] sm:$0xff]
    %v204 = vld [vmem:[%s0 + $0x10] sm:$0xff]
    %v205 = vld [vmem:[%s0 + $0x18] sm:$0xff]
    %v206 = vld [vmem:[%s0 + $0x20] sm:$0xff]
    %v207 = vld [vmem:[%s0 + $0x28] sm:$0xff]
    %v208 = vld [vmem:[%s0 + $0x30] sm:$0xff]
    %v209 = vld [vmem:[%s0 + $0x38] sm:$0xff]
    %v210 = vld [vmem:[%s0 + $0x40] sm:$0xff]
    %v211 = vld [vmem:[%s0 + $0x48] sm:$0xff]
    %v212 = vld [vmem:[%s0 + $0x50] sm:$0xff]
    %v213 = vld [vmem:[%s0 + $0x58] sm:$0xff]
    %v214 = vld [vmem:[%s0 + $0x60] sm:$0xff]
    %v215 = vld [vmem:[%s0 + $0x68] sm:$0xff]
    %v216 = vld [vmem:[%s0 + $0x70] sm:$0xff]
    %v217 = vld [vmem:[%s0 + $0x78] sm:$0xff]
    %v218 = vld [vmem:[%s0 + $0x80] sm:$0xff]
    %v219 = vld [vmem:[%s0 + $0x88] sm:$0xff]
    %v220 = vld [vmem:[%s0 + $0x90] sm:$0xff]
    %v221 = vld [vmem:[%s0 + $0x98] sm:$0xff]
    %v222 = vld [vmem:[%s0 + $0xa0] sm:$0xff]
    %v223 = vld [vmem:[%s0 + $0xa8] sm:$0xff]
    %v224 = vld [vmem:[%s0 + $0xb0] sm:$0xff]
    %v225 = vld [vmem:[%s0 + $0xb8] sm:$0xff]
    %v226 = vmul.f32 %v202, %v85
    %v227 = vmul.f32 %v203, %v90
    %v228 = vmul.f32 %v204, %v95
    %v229 = vmul.f32 %v205, %v100
    %v230 = vmul.f32 %v206, %v105
    %v231 = vmul.f32 %v207, %v110
    %v232 = vmul.f32 %v208, %v115
    %v233 = vmul.f32 %v209, %v120
    %v234 = vmul.f32 %v210, %v125
    %v235 = vmul.f32 %v211, %v130
    %v236 = vmul.f32 %v212, %v135
    %v237 = vmul.f32 %v213, %v140
    %v238 = vmul.f32 %v214, %v145
    %v239 = vmul.f32 %v215, %v150
    %v240 = vmul.f32 %v216, %v155
    %v241 = vmul.f32 %v217, %v160
    %v242 = vmul.f32 %v218, %v165
    %v243 = vmul.f32 %v219, %v170
    %v244 = vmul.f32 %v220, %v175
    %v245 = vmul.f32 %v221, %v180
    %v246 = vmul.f32 %v222, %v185
    %v247 = vmul.f32 %v223, %v190
    %v248 = vmul.f32 %v224, %v195
    %v249 = vmul.f32 %v225, %v200
    %v250 = vpack.c.bf16 %v227, %v226
    %v251 = vpack.c.bf16 %v229, %v228
    %v252 = vpack.c.bf16 %v231, %v230
    %v253 = vpack.c.bf16 %v233, %v232
    %v254 = vpack.c.bf16 %v235, %v234
    %v255 = vpack.c.bf16 %v237, %v236
    %v256 = vpack.c.bf16 %v239, %v238
    %v257 = vpack.c.bf16 %v241, %v240
    %v258 = vpack.c.bf16 %v243, %v242
    %v259 = vpack.c.bf16 %v245, %v244
    %v260 = vpack.c.bf16 %v247, %v246
    %v261 = vpack.c.bf16 %v249, %v248
    %v262 = vld [vmem:[%s2] sm:$0x3]
    %v263 = vld [vmem:[%s3] sm:$0x1]
    %v265 = vlaneseq
    %v266 = vshrl.u32 %v265, 7
    %v267 = vsub.s32 0, %v266
    %v268 = vrot.slane %v263, %v267
    %vm270 = vcmask 31744
    %v272 = vsel %vm270, %v250, 0
    %v275 = vsel %vm270, %v251, 0
    %v278 = vsel %vm270, %v252, 0
    %v281 = vsel %vm270, %v253, 0
    %v284 = vsel %vm270, %v254, 0
    %v287 = vsel %vm270, %v255, 0
    %v290 = vsel %vm270, %v256, 0
    %v293 = vsel %vm270, %v257, 0
    %v296 = vsel %vm270, %v258, 0
    %v299 = vsel %vm270, %v259, 0
    %v302 = vsel %vm270, %v260, 0
    %v305 = vsel %vm270, %v261, 0
    %vm307 = vcmask 1041408
    %v309 = vsel %vm307, %v262, 0
    %311 = vmatprep.subr.bf16.mxu0 0
    %312 = vmatpush1.bf16.msra.mxu0 %v309
    %313 = vmatprep.subr.bf16.mxu0 0
    %314 = vmatpush1.bf16.msra.mxu0 0
    %315 = vmatprep.subr.bf16.mxu0 0
    %316 = vmatpush1.bf16.msra.mxu0 0
    %317 = vmatprep.subr.bf16.mxu0 0
    %318 = vmatpush1.bf16.msra.mxu0 0
    %319 = vmatprep.subr.bf16.mxu0 0
    %320 = vmatpush1.bf16.msra.mxu0 0
    %321 = vmatprep.subr.bf16.mxu0 0
    %322 = vmatpush1.bf16.msra.mxu0 0
    %323 = vmatprep.subr.bf16.mxu0 0
    %324 = vmatpush1.bf16.msra.mxu0 0
    %325 = vmatprep.subr.bf16.mxu0 0
    %326 = vmatpush1.bf16.msra.mxu0 0
    %327 = vmatprep.subr.bf16.mxu0 0
    %328 = vmatpush1.bf16.msra.mxu0 0
    %329 = vmatprep.subr.bf16.mxu0 0
    %330 = vmatpush1.bf16.msra.mxu0 0
    %331 = vmatprep.subr.bf16.mxu0 0
    %332 = vmatpush1.bf16.msra.mxu0 0
    %333 = vmatprep.subr.bf16.mxu0 0
    %334 = vmatpush1.bf16.msra.mxu0 0
    %335 = vmatprep.subr.bf16.mxu0 0
    %336 = vmatpush1.bf16.msra.mxu0 0
    %337 = vmatprep.subr.bf16.mxu0 0
    %338 = vmatpush1.bf16.msra.mxu0 0
    %339 = vmatprep.subr.bf16.mxu0 0
    %340 = vmatpush1.bf16.msra.mxu0 0
    %341 = vmatprep.subr.bf16.mxu0 0
    %342 = vmatpush1.bf16.msra.mxu0 0
    %343 = vmatprep.mubr.bf16.mxu0 0
    %344 = vmatmul.mubr.bf16.gmra.mrb[0].mxu0 %v272
    %v345 = vpop.f32.mrb[0].mxu0
    %v346 = vadd.f32 %v268, %v345
    %v347 = vpop.f32.mrb[0].mxu0
    %v348 = vpop.f32.mrb[0].mxu0
    %v349 = vadd.f32 %v268, %v348
    %v350 = vpop.f32.mrb[0].mxu0
    %351 = vmatprep.mubr.bf16.mxu0 0
    %352 = vmatmul.mubr.bf16.gmra.mrb[0].mxu0 %v275
    %v353 = vpop.f32.mrb[0].mxu0
    %v354 = vadd.f32 %v268, %v353
    %v355 = vpop.f32.mrb[0].mxu0
    %v356 = vpop.f32.mrb[0].mxu0
    %v357 = vadd.f32 %v268, %v356
    %v358 = vpop.f32.mrb[0].mxu0
    %359 = vmatprep.mubr.bf16.mxu0 0
    %360 = vmatmul.mubr.bf16.gmra.mrb[0].mxu0 %v278
    %v361 = vpop.f32.mrb[0].mxu0
    %v362 = vadd.f32 %v268, %v361
    %v363 = vpop.f32.mrb[0].mxu0
    %v364 = vpop.f32.mrb[0].mxu0
    %v365 = vadd.f32 %v268, %v364
    %v366 = vpop.f32.mrb[0].mxu0
    %367 = vmatprep.mubr.bf16.mxu0 0
    %368 = vmatmul.mubr.bf16.gmra.mrb[0].mxu0 %v281
    %v369 = vpop.f32.mrb[0].mxu0
    %v370 = vadd.f32 %v268, %v369
    %v371 = vpop.f32.mrb[0].mxu0
    %v372 = vpop.f32.mrb[0].mxu0
    %v373 = vadd.f32 %v268, %v372
    %v374 = vpop.f32.mrb[0].mxu0
    %375 = vmatprep.mubr.bf16.mxu0 0
    %376 = vmatmul.mubr.bf16.gmra.mrb[0].mxu0 %v284
    %v377 = vpop.f32.mrb[0].mxu0
    %v378 = vadd.f32 %v268, %v377
    %v379 = vpop.f32.mrb[0].mxu0
    %v380 = vpop.f32.mrb[0].mxu0
    %v381 = vadd.f32 %v268, %v380
    %v382 = vpop.f32.mrb[0].mxu0
    %383 = vmatprep.mubr.bf16.mxu0 0
    %384 = vmatmul.mubr.bf16.gmra.mrb[0].mxu0 %v287
    %v385 = vpop.f32.mrb[0].mxu0
    %v386 = vadd.f32 %v268, %v385
    %v387 = vpop.f32.mrb[0].mxu0
    %v388 = vpop.f32.mrb[0].mxu0
    %v389 = vadd.f32 %v268, %v388
    %v390 = vpop.f32.mrb[0].mxu0
    %391 = vmatprep.mubr.bf16.mxu0 0
    %392 = vmatmul.mubr.bf16.gmra.mrb[0].mxu0 %v290
    %v393 = vpop.f32.mrb[0].mxu0
    %v394 = vadd.f32 %v268, %v393
    %v395 = vpop.f32.mrb[0].mxu0
    %v396 = vpop.f32.mrb[0].mxu0
    %v397 = vadd.f32 %v268, %v396
    %v398 = vpop.f32.mrb[0].mxu0
    %399 = vmatprep.mubr.bf16.mxu0 0
    %400 = vmatmul.mubr.bf16.gmra.mrb[0].mxu0 %v293
    %v401 = vpop.f32.mrb[0].mxu0
    %v402 = vadd.f32 %v268, %v401
    %v403 = vpop.f32.mrb[0].mxu0
    %v404 = vpop.f32.mrb[0].mxu0
    %v405 = vadd.f32 %v268, %v404
    %v406 = vpop.f32.mrb[0].mxu0
    %407 = vmatprep.mubr.bf16.mxu0 0
    %408 = vmatmul.mubr.bf16.gmra.mrb[0].mxu0 %v296
    %v409 = vpop.f32.mrb[0].mxu0
    %v410 = vadd.f32 %v268, %v409
    %v411 = vpop.f32.mrb[0].mxu0
    %v412 = vpop.f32.mrb[0].mxu0
    %v413 = vadd.f32 %v268, %v412
    %v414 = vpop.f32.mrb[0].mxu0
    %415 = vmatprep.mubr.bf16.mxu0 0
    %416 = vmatmul.mubr.bf16.gmra.mrb[0].mxu0 %v299
    %v417 = vpop.f32.mrb[0].mxu0
    %v418 = vadd.f32 %v268, %v417
    %v419 = vpop.f32.mrb[0].mxu0
    %v420 = vpop.f32.mrb[0].mxu0
    %v421 = vadd.f32 %v268, %v420
    %v422 = vpop.f32.mrb[0].mxu0
    %423 = vmatprep.mubr.bf16.mxu0 0
    %424 = vmatmul.mubr.bf16.gmra.mrb[0].mxu0 %v302
    %v425 = vpop.f32.mrb[0].mxu0
    %v426 = vadd.f32 %v268, %v425
    %v427 = vpop.f32.mrb[0].mxu0
    %v428 = vpop.f32.mrb[0].mxu0
    %v429 = vadd.f32 %v268, %v428
    %v430 = vpop.f32.mrb[0].mxu0
    %431 = vmatprep.mubr.bf16.mxu0 0
    %432 = vmatmul.mubr.bf16.gmra.mrb[0].mxu0 %v305
    %v433 = vpop.f32.mrb[0].mxu0
    %v434 = vadd.f32 %v268, %v433
    %v435 = vpop.f32.mrb[0].mxu0
    %v436 = vpop.f32.mrb[0].mxu0
    %v437 = vadd.f32 %v268, %v436
    %v438 = vpop.f32.mrb[0].mxu0
    %439 = vdwg.mxu0
    %v440 = vmul.f32 %v346, %v85
    %v441 = vmul.f32 %v349, %v90
    %v442 = vmul.f32 %v354, %v95
    %v443 = vmul.f32 %v357, %v100
    %v444 = vmul.f32 %v362, %v105
    %v445 = vmul.f32 %v365, %v110
    %v446 = vmul.f32 %v370, %v115
    %v447 = vmul.f32 %v373, %v120
    %v448 = vmul.f32 %v378, %v125
    %v449 = vmul.f32 %v381, %v130
    %v450 = vmul.f32 %v386, %v135
    %v451 = vmul.f32 %v389, %v140
    %v452 = vmul.f32 %v394, %v145
    %v453 = vmul.f32 %v397, %v150
    %v454 = vmul.f32 %v402, %v155
    %v455 = vmul.f32 %v405, %v160
    %v456 = vmul.f32 %v410, %v165
    %v457 = vmul.f32 %v413, %v170
    %v458 = vmul.f32 %v418, %v175
    %v459 = vmul.f32 %v421, %v180
    %v460 = vmul.f32 %v426, %v185
    %v461 = vmul.f32 %v429, %v190
    %v462 = vmul.f32 %v434, %v195
    %v463 = vmul.f32 %v437, %v200
    %464 = vst [vmem:[#allocation2] sm:$0xff] 0
    %465 = vst [vmem:[#allocation2 + $0x68] sm:$0xff] 0
    %v466 = vpack.c.bf16 %v441, %v440
    %v467 = vpack.c.bf16 %v443, %v442
    %v468 = vpack.c.bf16 %v445, %v444
    %v469 = vpack.c.bf16 %v447, %v446
    %v470 = vpack.c.bf16 %v449, %v448
    %v471 = vpack.c.bf16 %v451, %v450
    %v472 = vpack.c.bf16 %v453, %v452
    %v473 = vpack.c.bf16 %v455, %v454
    %v474 = vpack.c.bf16 %v457, %v456
    %v475 = vpack.c.bf16 %v459, %v458
    %v476 = vpack.c.bf16 %v461, %v460
    %v477 = vpack.c.bf16 %v463, %v462
    %478 = vst [vmem:[#allocation2 + $0x8] sm:$0xff] %v466
    %479 = vst [vmem:[#allocation2 + $0x10] sm:$0xff] %v467
    %480 = vst [vmem:[#allocation2 + $0x18] sm:$0xff] %v468
    %481 = vst [vmem:[#allocation2 + $0x20] sm:$0xff] %v469
    %482 = vst [vmem:[#allocation2 + $0x28] sm:$0xff] %v470
    %483 = vst [vmem:[#allocation2 + $0x30] sm:$0xff] %v471
    %484 = vst [vmem:[#allocation2 + $0x38] sm:$0xff] %v472
    %485 = vst [vmem:[#allocation2 + $0x40] sm:$0xff] %v473
    %486 = vst [vmem:[#allocation2 + $0x48] sm:$0xff] %v474
    %487 = vst [vmem:[#allocation2 + $0x50] sm:$0xff] %v475
    %488 = vst [vmem:[#allocation2 + $0x58] sm:$0xff] %v476
    %489 = vst [vmem:[#allocation2 + $0x60] sm:$0xff] %v477
    %v490 = vld [vmem:[#allocation2] sm:$0x80]
    %v491 = vld [vmem:[#allocation2 + $0x8] sm:$0xff]
    %v492 = vld [vmem:[#allocation2 + $0x10] sm:$0xff]
    %v493 = vld [vmem:[#allocation2 + $0x18] sm:$0xff]
    %v494 = vld [vmem:[#allocation2 + $0x20] sm:$0xff]
    %v495 = vld [vmem:[#allocation2 + $0x28] sm:$0xff]
    %v496 = vld [vmem:[#allocation2 + $0x30] sm:$0xff]
    %v497 = vld [vmem:[#allocation2 + $0x38] sm:$0xff]
    %v498 = vld [vmem:[#allocation2 + $0x40] sm:$0xff]
    %v499 = vld [vmem:[#allocation2 + $0x48] sm:$0xff]
    %v500 = vld [vmem:[#allocation2 + $0x50] sm:$0xff]
    %v501 = vld [vmem:[#allocation2 + $0x58] sm:$0xff]
    %v502 = vld [vmem:[#allocation2 + $0x60] sm:$0x7f]
    %v503 = vld [vmem:[#allocation2 + $0x60] sm:$0xff]
    %v504 = vld [vmem:[#allocation2 + $0x8] sm:$0xff]
    %v505 = vld [vmem:[#allocation2 + $0x10] sm:$0xff]
    %v506 = vld [vmem:[#allocation2 + $0x18] sm:$0xff]
    %v507 = vld [vmem:[#allocation2 + $0x20] sm:$0xff]
    %v508 = vld [vmem:[#allocation2 + $0x28] sm:$0xff]
    %v509 = vld [vmem:[#allocation2 + $0x30] sm:$0xff]
    %v510 = vld [vmem:[#allocation2 + $0x38] sm:$0xff]
    %v511 = vld [vmem:[#allocation2 + $0x40] sm:$0xff]
    %v512 = vld [vmem:[#allocation2 + $0x48] sm:$0xff]
    %v513 = vld [vmem:[#allocation2 + $0x50] sm:$0xff]
    %v514 = vld [vmem:[#allocation2 + $0x58] sm:$0xff]
    %v515 = vld [vmem:[#allocation2 + $0x60] sm:$0xff]
    %v516 = vld [vmem:[#allocation2 + $0x68] sm:$0x1]
    %v517 = vld [vmem:[#allocation2 + $0x8] sm:$0xfe]
    %vm518 = vsmask.f32 7424
    %v520 = vshrl.u32 %v490, 16
    %v523 = vshll.u32 %v491, 16
    %v525 = vrot.slane %v523, 1
    %v526 = vsel %vm518, %v520, %v525
    %v527 = vshrl.u32 %v491, 16
    %v529 = vor.u32 %v527, %v525
    %v531 = vshll.u32 %v492, 16
    %v533 = vrot.slane %v531, 1
    %v534 = vsel %vm518, %v529, %v533
    %v535 = vshrl.u32 %v492, 16
    %v537 = vor.u32 %v535, %v533
    %v539 = vshll.u32 %v493, 16
    %v541 = vrot.slane %v539, 1
    %v542 = vsel %vm518, %v537, %v541
    %v543 = vshrl.u32 %v493, 16
    %v545 = vor.u32 %v543, %v541
    %v547 = vshll.u32 %v494, 16
    %v549 = vrot.slane %v547, 1
    %v550 = vsel %vm518, %v545, %v549
    %v551 = vshrl.u32 %v494, 16
    %v553 = vor.u32 %v551, %v549
    %v555 = vshll.u32 %v495, 16
    %v557 = vrot.slane %v555, 1
    %v558 = vsel %vm518, %v553, %v557
    %v559 = vshrl.u32 %v495, 16
    %v561 = vor.u32 %v559, %v557
    %v563 = vshll.u32 %v496, 16
    %v565 = vrot.slane %v563, 1
    %v566 = vsel %vm518, %v561, %v565
    %v567 = vshrl.u32 %v496, 16
    %v569 = vor.u32 %v567, %v565
    %v571 = vshll.u32 %v497, 16
    %v573 = vrot.slane %v571, 1
    %v574 = vsel %vm518, %v569, %v573
    %v575 = vshrl.u32 %v497, 16
    %v577 = vor.u32 %v575, %v573
    %v579 = vshll.u32 %v498, 16
    %v581 = vrot.slane %v579, 1
    %v582 = vsel %vm518, %v577, %v581
    %v583 = vshrl.u32 %v498, 16
    %v585 = vor.u32 %v583, %v581
    %v587 = vshll.u32 %v499, 16
    %v589 = vrot.slane %v587, 1
    %v590 = vsel %vm518, %v585, %v589
    %v591 = vshrl.u32 %v499, 16
    %v593 = vor.u32 %v591, %v589
    %v595 = vshll.u32 %v500, 16
    %v597 = vrot.slane %v595, 1
    %v598 = vsel %vm518, %v593, %v597
    %v599 = vshrl.u32 %v500, 16
    %v601 = vor.u32 %v599, %v597
    %v603 = vshll.u32 %v501, 16
    %v605 = vrot.slane %v603, 1
    %v606 = vsel %vm518, %v601, %v605
    %v607 = vshrl.u32 %v501, 16
    %v609 = vor.u32 %v607, %v605
    %v611 = vshll.u32 %v503, 16
    %v613 = vrot.slane %v611, 1
    %v614 = vsel %vm518, %v609, %v613
    %v615 = vshrl.u32 %v503, 16
    %v617 = vor.u32 %v615, %v613
    %vm630 = vcmask 1046528
    %v631 = vrot.slane %v491, 1
    %v632 = vrot.slane %v492, 1
    %v633 = vsel %vm630, %v631, %v632
    %v634 = vrot.slane %v493, 1
    %v635 = vsel %vm630, %v632, %v634
    %v636 = vrot.slane %v494, 1
    %v637 = vsel %vm630, %v634, %v636
    %v638 = vrot.slane %v495, 1
    %v639 = vsel %vm630, %v636, %v638
    %v640 = vrot.slane %v496, 1
    %v641 = vsel %vm630, %v638, %v640
    %v642 = vrot.slane %v497, 1
    %v643 = vsel %vm630, %v640, %v642
    %v644 = vrot.slane %v498, 1
    %v645 = vsel %vm630, %v642, %v644
    %v646 = vrot.slane %v499, 1
    %v647 = vsel %vm630, %v644, %v646
    %v648 = vrot.slane %v500, 1
    %v649 = vsel %vm630, %v646, %v648
    %v650 = vrot.slane %v501, 1
    %v651 = vsel %vm630, %v648, %v650
    %v652 = vrot.slane %v503, 1
    %v653 = vsel %vm630, %v650, %v652
    %vm654 = vsmask.f32 6400
    %v656 = vshrl.u32 %v504, 16
    %v658 = vrot.slane %v656, 1
    %v659 = vshll.u32 %v504, 16
    %v661 = vrot.slane %v659, 2
    %v662 = vor.u32 %v658, %v661
    %v664 = vshrl.u32 %v505, 16
    %v666 = vrot.slane %v664, 1
    %v667 = vshll.u32 %v505, 16
    %v669 = vrot.slane %v667, 2
    %v670 = vor.u32 %v666, %v669
    %v671 = vsel %vm654, %v662, %v670
    %v673 = vshrl.u32 %v506, 16
    %v675 = vrot.slane %v673, 1
    %v676 = vshll.u32 %v506, 16
    %v678 = vrot.slane %v676, 2
    %v679 = vor.u32 %v675, %v678
    %v680 = vsel %vm654, %v670, %v679
    %v682 = vshrl.u32 %v507, 16
    %v684 = vrot.slane %v682, 1
    %v685 = vshll.u32 %v507, 16
    %v687 = vrot.slane %v685, 2
    %v688 = vor.u32 %v684, %v687
    %v689 = vsel %vm654, %v679, %v688
    %v691 = vshrl.u32 %v508, 16
    %v693 = vrot.slane %v691, 1
    %v694 = vshll.u32 %v508, 16
    %v696 = vrot.slane %v694, 2
    %v697 = vor.u32 %v693, %v696
    %v698 = vsel %vm654, %v688, %v697
    %v700 = vshrl.u32 %v509, 16
    %v702 = vrot.slane %v700, 1
    %v703 = vshll.u32 %v509, 16
    %v705 = vrot.slane %v703, 2
    %v706 = vor.u32 %v702, %v705
    %v707 = vsel %vm654, %v697, %v706
    %v709 = vshrl.u32 %v510, 16
    %v711 = vrot.slane %v709, 1
    %v712 = vshll.u32 %v510, 16
    %v714 = vrot.slane %v712, 2
    %v715 = vor.u32 %v711, %v714
    %v716 = vsel %vm654, %v706, %v715
    %v718 = vshrl.u32 %v511, 16
    %v720 = vrot.slane %v718, 1
    %v721 = vshll.u32 %v511, 16
    %v723 = vrot.slane %v721, 2
    %v724 = vor.u32 %v720, %v723
    %v725 = vsel %vm654, %v715, %v724
    %v727 = vshrl.u32 %v512, 16
    %v729 = vrot.slane %v727, 1
    %v730 = vshll.u32 %v512, 16
    %v732 = vrot.slane %v730, 2
    %v733 = vor.u32 %v729, %v732
    %v734 = vsel %vm654, %v724, %v733
    %v736 = vshrl.u32 %v513, 16
    %v738 = vrot.slane %v736, 1
    %v739 = vshll.u32 %v513, 16
    %v741 = vrot.slane %v739, 2
    %v742 = vor.u32 %v738, %v741
    %v743 = vsel %vm654, %v733, %v742
    %v745 = vshrl.u32 %v514, 16
    %v747 = vrot.slane %v745, 1
    %v748 = vshll.u32 %v514, 16
    %v750 = vrot.slane %v748, 2
    %v751 = vor.u32 %v747, %v750
    %v752 = vsel %vm654, %v742, %v751
    %v754 = vshrl.u32 %v515, 16
    %v756 = vrot.slane %v754, 1
    %v757 = vshll.u32 %v515, 16
    %v759 = vrot.slane %v757, 2
    %v760 = vor.u32 %v756, %v759
    %v761 = vsel %vm654, %v751, %v760
    %v763 = vshll.u32 %v516, 16
    %v765 = vrot.slane %v763, 2
    %v766 = vsel %vm654, %v760, %v765
    %vm780 = vcmask 1045504
    %v781 = vrot.slane %v517, 2
    %v782 = vrot.slane %v505, 2
    %v783 = vsel %vm780, %v781, %v782
    %v784 = vrot.slane %v506, 2
    %v785 = vsel %vm780, %v782, %v784
    %v786 = vrot.slane %v507, 2
    %v787 = vsel %vm780, %v784, %v786
    %v788 = vrot.slane %v508, 2
    %v789 = vsel %vm780, %v786, %v788
    %v790 = vrot.slane %v509, 2
    %v791 = vsel %vm780, %v788, %v790
    %v792 = vrot.slane %v510, 2
    %v793 = vsel %vm780, %v790, %v792
    %v794 = vrot.slane %v511, 2
    %v795 = vsel %vm780, %v792, %v794
    %v796 = vrot.slane %v512, 2
    %v797 = vsel %vm780, %v794, %v796
    %v798 = vrot.slane %v513, 2
    %v799 = vsel %vm780, %v796, %v798
    %v800 = vrot.slane %v514, 2
    %v801 = vsel %vm780, %v798, %v800
    %v802 = vrot.slane %v515, 2
    %v803 = vsel %vm780, %v800, %v802
    %v804 = vrot.slane %v516, 2
    %v805 = vsel %vm780, %v802, %v804
    %v806 = vld [vmem:[#allocation3] sm:$0xff]
    %v807 = vld [vmem:[#allocation3 + $0x8] sm:$0xff]
    %v808 = vld [vmem:[#allocation3 + $0x10] sm:$0xff]
    %v809 = vld [vmem:[#allocation3 + $0x18] sm:$0xff]
    %v810 = vld [vmem:[#allocation3 + $0x20] sm:$0xff]
    %v811 = vld [vmem:[#allocation3 + $0x28] sm:$0xff]
    %v812 = vld [vmem:[#allocation3 + $0x30] sm:$0xff]
    %v813 = vld [vmem:[#allocation3 + $0x38] sm:$0xff]
    %v814 = vld [vmem:[#allocation3 + $0x40] sm:$0xff]
    %v815 = vld [vmem:[#allocation3 + $0x48] sm:$0xff]
    %v816 = vld [vmem:[#allocation3 + $0x50] sm:$0xff]
    %v817 = vld [vmem:[#allocation3 + $0x58] sm:$0xff]
    %v818 = vld [vmem:[#allocation3 + $0x60] sm:$0xff]
    %v819 = vld [vmem:[#allocation3 + $0x68] sm:$0xff]
    %v820 = vld [vmem:[#allocation3 + $0x70] sm:$0xff]
    %v821 = vld [vmem:[#allocation3 + $0x78] sm:$0xff]
    %v822 = vld [vmem:[#allocation3 + $0x80] sm:$0xff]
    %v823 = vld [vmem:[#allocation3 + $0x88] sm:$0xff]
    %v824 = vld [vmem:[#allocation3 + $0x90] sm:$0xff]
    %v825 = vld [vmem:[#allocation3 + $0x98] sm:$0xff]
    %v826 = vld [vmem:[#allocation3 + $0xa0] sm:$0xff]
    %v827 = vld [vmem:[#allocation3 + $0xa8] sm:$0xff]
    %v828 = vld [vmem:[#allocation3 + $0xb0] sm:$0xff]
    %v829 = vld [vmem:[#allocation3 + $0xb8] sm:$0xff]
    %v830 = vld [vmem:[#allocation3 + $0xc0] sm:$0xff]
    %v831 = vld [vmem:[#allocation3 + $0xc8] sm:$0xff]
    %v832 = vld [vmem:[#allocation3 + $0xd0] sm:$0xff]
    %v833 = vld [vmem:[#allocation3 + $0xd8] sm:$0xff]
    %v834 = vld [vmem:[#allocation3 + $0xe0] sm:$0xff]
    %v835 = vld [vmem:[#allocation3 + $0xe8] sm:$0xff]
    %v836 = vld [vmem:[#allocation3 + $0xf0] sm:$0xff]
    %v837 = vld [vmem:[#allocation3 + $0xf8] sm:$0xff]
    %v838 = vld [vmem:[#allocation3 + $0x100] sm:$0xff]
    %v839 = vld [vmem:[#allocation3 + $0x108] sm:$0xff]
    %v840 = vld [vmem:[#allocation3 + $0x110] sm:$0xff]
    %v841 = vld [vmem:[#allocation3 + $0x118] sm:$0xff]
    %v842 = vld [vmem:[#allocation3 + $0x120] sm:$0xff]
    %v843 = vld [vmem:[#allocation3 + $0x128] sm:$0xff]
    %v844 = vld [vmem:[#allocation3 + $0x130] sm:$0xff]
    %v845 = vld [vmem:[#allocation3 + $0x138] sm:$0xff]
    %v846 = vld [vmem:[#allocation3 + $0x140] sm:$0xff]
    %v847 = vld [vmem:[#allocation3 + $0x148] sm:$0xff]
    %v848 = vld [vmem:[#allocation3 + $0x150] sm:$0xff]
    %v849 = vld [vmem:[#allocation3 + $0x158] sm:$0xff]
    %v850 = vld [vmem:[#allocation3 + $0x160] sm:$0xff]
    %v851 = vld [vmem:[#allocation3 + $0x168] sm:$0xff]
    %v852 = vld [vmem:[#allocation3 + $0x170] sm:$0xff]
    %v853 = vld [vmem:[#allocation3 + $0x178] sm:$0xff]
    %v854 = vld [vmem:[#allocation3 + $0x180] sm:$0xff]
    %v855 = vld [vmem:[#allocation3 + $0x188] sm:$0xff]
    %v856 = vld [vmem:[#allocation3 + $0x190] sm:$0xff]
    %v857 = vld [vmem:[#allocation3 + $0x198] sm:$0xff]
    %v858 = vld [vmem:[#allocation3 + $0x1a0] sm:$0xff]
    %v859 = vld [vmem:[#allocation3 + $0x1a8] sm:$0xff]
    %v860 = vld [vmem:[#allocation3 + $0x1b0] sm:$0xff]
    %v861 = vld [vmem:[#allocation3 + $0x1b8] sm:$0xff]
    %v862 = vld [vmem:[#allocation3 + $0x1c0] sm:$0xff]
    %v863 = vld [vmem:[#allocation3 + $0x1c8] sm:$0xff]
    %v864 = vld [vmem:[#allocation3 + $0x1d0] sm:$0xff]
    %v865 = vld [vmem:[#allocation3 + $0x1d8] sm:$0xff]
    %v866 = vld [vmem:[#allocation3 + $0x1e0] sm:$0xff]
    %v867 = vld [vmem:[#allocation3 + $0x1e8] sm:$0xff]
    %v868 = vld [vmem:[#allocation3 + $0x1f0] sm:$0xff]
    %v869 = vld [vmem:[#allocation3 + $0x1f8] sm:$0xff]
    %v870 = vld [vmem:[#allocation3 + $0x200] sm:$0xff]
    %v871 = vld [vmem:[#allocation3 + $0x208] sm:$0xff]
    %v872 = vld [vmem:[#allocation3 + $0x210] sm:$0xff]
    %v873 = vld [vmem:[#allocation3 + $0x218] sm:$0xff]
    %v874 = vld [vmem:[#allocation3 + $0x220] sm:$0xff]
    %v875 = vld [vmem:[#allocation3 + $0x228] sm:$0xff]
    %v876 = vld [vmem:[#allocation3 + $0x230] sm:$0xff]
    %v877 = vld [vmem:[#allocation3 + $0x238] sm:$0xff]
    %v878 = vld [vmem:[#allocation3 + $0x240] sm:$0xff]
    %v879 = vld [vmem:[#allocation3 + $0x248] sm:$0xff]
    %v880 = vld [vmem:[#allocation3 + $0x250] sm:$0xff]
    %v881 = vld [vmem:[#allocation3 + $0x258] sm:$0xff]
    %v882 = vld [vmem:[#allocation3 + $0x260] sm:$0xff]
    %v883 = vld [vmem:[#allocation3 + $0x268] sm:$0xff]
    %v884 = vld [vmem:[#allocation3 + $0x270] sm:$0xff]
    %v885 = vld [vmem:[#allocation3 + $0x278] sm:$0xff]
    %v886 = vld [vmem:[%s5] sm:$0x3]
    %v888 = vlaneseq
    %v889 = vshrl.u32 %v888, 7
    %v890 = vsub.s32 0, %v889
    %v891 = vrot.slane %v886, %v890
    %v892 = vlaneseq
    %v893 = vshrl.u32 %v892, 7
    %v894 = vsub.s32 1, %v893
    %v895 = vrot.slane %v886, %v894
    %vm900 = vcmask 1040384
    %v901 = vrot.slane %v490, 7
    %v902 = vrot.slane %v491, 7
    %v903 = vsel %vm900, %v901, %v902
    %v904 = vrot.slane %v526, 7
    %v905 = vrot.slane %v534, 7
    %v906 = vsel %vm900, %v904, %v905
    %v907 = vrot.slane %v631, 7
    %v908 = vrot.slane %v633, 7
    %v909 = vsel %vm900, %v907, %v908
    %v910 = vrot.slane %v662, 7
    %v911 = vrot.slane %v671, 7
    %v912 = vsel %vm900, %v910, %v911
    %v913 = vrot.slane %v781, 7
    %v914 = vrot.slane %v783, 7
    %v915 = vsel %vm900, %v913, %v914
    %v916 = vrot.slane %v492, 7
    %v917 = vsel %vm900, %v902, %v916
    %v918 = vrot.slane %v542, 7
    %v919 = vsel %vm900, %v905, %v918
    %v920 = vrot.slane %v635, 7
    %v921 = vsel %vm900, %v908, %v920
    %v922 = vrot.slane %v680, 7
    %v923 = vsel %vm900, %v911, %v922
    %v924 = vrot.slane %v785, 7
    %v925 = vsel %vm900, %v914, %v924
    %v926 = vrot.slane %v493, 7
    %v927 = vsel %vm900, %v916, %v926
    %v928 = vrot.slane %v550, 7
    %v929 = vsel %vm900, %v918, %v928
    %v930 = vrot.slane %v637, 7
    %v931 = vsel %vm900, %v920, %v930
    %v932 = vrot.slane %v689, 7
    %v933 = vsel %vm900, %v922, %v932
    %v934 = vrot.slane %v787, 7
    %v935 = vsel %vm900, %v924, %v934
    %v936 = vrot.slane %v494, 7
    %v937 = vsel %vm900, %v926, %v936
    %v938 = vrot.slane %v558, 7
    %v939 = vsel %vm900, %v928, %v938
    %v940 = vrot.slane %v639, 7
    %v941 = vsel %vm900, %v930, %v940
    %v942 = vrot.slane %v698, 7
    %v943 = vsel %vm900, %v932, %v942
    %v944 = vrot.slane %v789, 7
    %v945 = vsel %vm900, %v934, %v944
    %v946 = vrot.slane %v495, 7
    %v947 = vsel %vm900, %v936, %v946
    %v948 = vrot.slane %v566, 7
    %v949 = vsel %vm900, %v938, %v948
    %v950 = vrot.slane %v641, 7
    %v951 = vsel %vm900, %v940, %v950
    %v952 = vrot.slane %v707, 7
    %v953 = vsel %vm900, %v942, %v952
    %v954 = vrot.slane %v791, 7
    %v955 = vsel %vm900, %v944, %v954
    %v956 = vrot.slane %v496, 7
    %v957 = vsel %vm900, %v946, %v956
    %v958 = vrot.slane %v574, 7
    %v959 = vsel %vm900, %v948, %v958
    %v960 = vrot.slane %v643, 7
    %v961 = vsel %vm900, %v950, %v960
    %v962 = vrot.slane %v716, 7
    %v963 = vsel %vm900, %v952, %v962
    %v964 = vrot.slane %v793, 7
    %v965 = vsel %vm900, %v954, %v964
    %v966 = vrot.slane %v497, 7
    %v967 = vsel %vm900, %v956, %v966
    %v968 = vrot.slane %v582, 7
    %v969 = vsel %vm900, %v958, %v968
    %v970 = vrot.slane %v645, 7
    %v971 = vsel %vm900, %v960, %v970
    %v972 = vrot.slane %v725, 7
    %v973 = vsel %vm900, %v962, %v972
    %v974 = vrot.slane %v795, 7
    %v975 = vsel %vm900, %v964, %v974
    %v976 = vrot.slane %v498, 7
    %v977 = vsel %vm900, %v966, %v976
    %v978 = vrot.slane %v590, 7
    %v979 = vsel %vm900, %v968, %v978
    %v980 = vrot.slane %v647, 7
    %v981 = vsel %vm900, %v970, %v980
    %v982 = vrot.slane %v734, 7
    %v983 = vsel %vm900, %v972, %v982
    %v984 = vrot.slane %v797, 7
    %v985 = vsel %vm900, %v974, %v984
    %v986 = vrot.slane %v499, 7
    %v987 = vsel %vm900, %v976, %v986
    %v988 = vrot.slane %v598, 7
    %v989 = vsel %vm900, %v978, %v988
    %v990 = vrot.slane %v649, 7
    %v991 = vsel %vm900, %v980, %v990
    %v992 = vrot.slane %v743, 7
    %v993 = vsel %vm900, %v982, %v992
    %v994 = vrot.slane %v799, 7
    %v995 = vsel %vm900, %v984, %v994
    %v996 = vrot.slane %v500, 7
    %v997 = vsel %vm900, %v986, %v996
    %v998 = vrot.slane %v606, 7
    %v999 = vsel %vm900, %v988, %v998
    %v1000 = vrot.slane %v651, 7
    %v1001 = vsel %vm900, %v990, %v1000
    %v1002 = vrot.slane %v752, 7
    %v1003 = vsel %vm900, %v992, %v1002
    %v1004 = vrot.slane %v801, 7
    %v1005 = vsel %vm900, %v994, %v1004
    %v1006 = vrot.slane %v501, 7
    %v1007 = vsel %vm900, %v996, %v1006
    %v1008 = vrot.slane %v614, 7
    %v1009 = vsel %vm900, %v998, %v1008
    %v1010 = vrot.slane %v653, 7
    %v1011 = vsel %vm900, %v1000, %v1010
    %v1012 = vrot.slane %v761, 7
    %v1013 = vsel %vm900, %v1002, %v1012
    %v1014 = vrot.slane %v803, 7
    %v1015 = vsel %vm900, %v1004, %v1014
    %v1016 = vrot.slane %v502, 7
    %v1017 = vsel %vm900, %v1006, %v1016
    %v1018 = vrot.slane %v617, 7
    %v1019 = vsel %vm900, %v1008, %v1018
    %v1020 = vrot.slane %v652, 7
    %v1021 = vsel %vm900, %v1010, %v1020
    %v1022 = vrot.slane %v766, 7
    %v1023 = vsel %vm900, %v1012, %v1022
    %v1024 = vrot.slane %v805, 7
    %v1025 = vsel %vm900, %v1014, %v1024
    %v1166 = vunpack.c.l.b16 %v806
    %v1167 = vunpack.c.h.b16 %v806
    %v1168 = vunpack.c.l.b16 %v807
    %v1169 = vunpack.c.h.b16 %v807
    %v1170 = vunpack.c.l.b16 %v808
    %v1171 = vunpack.c.h.b16 %v808
    %v1172 = vunpack.c.l.b16 %v809
    %v1173 = vunpack.c.h.b16 %v809
    %v1174 = vunpack.c.l.b16 %v810
    %v1175 = vunpack.c.h.b16 %v810
    %v1176 = vunpack.c.l.b16 %v811
    %v1177 = vunpack.c.h.b16 %v811
    %v1178 = vunpack.c.l.b16 %v812
    %v1179 = vunpack.c.h.b16 %v812
    %v1180 = vunpack.c.l.b16 %v813
    %v1181 = vunpack.c.h.b16 %v813
    %v1182 = vunpack.c.l.b16 %v814
    %v1183 = vunpack.c.h.b16 %v814
    %v1184 = vunpack.c.l.b16 %v815
    %v1185 = vunpack.c.h.b16 %v815
    %v1186 = vunpack.c.l.b16 %v816
    %v1187 = vunpack.c.h.b16 %v816
    %v1188 = vunpack.c.l.b16 %v817
    %v1189 = vunpack.c.h.b16 %v817
    %v1190 = vunpack.c.l.b16 %v818
    %v1191 = vunpack.c.h.b16 %v818
    %v1192 = vunpack.c.l.b16 %v819
    %v1193 = vunpack.c.h.b16 %v819
    %v1194 = vunpack.c.l.b16 %v820
    %v1195 = vunpack.c.h.b16 %v820
    %v1196 = vunpack.c.l.b16 %v821
    %v1197 = vunpack.c.h.b16 %v821
    %v1198 = vunpack.c.l.b16 %v822
    %v1199 = vunpack.c.h.b16 %v822
    %v1200 = vunpack.c.l.b16 %v823
    %v1201 = vunpack.c.h.b16 %v823
    %v1202 = vunpack.c.l.b16 %v824
    %v1203 = vunpack.c.h.b16 %v824
    %v1204 = vunpack.c.l.b16 %v825
    %v1205 = vunpack.c.h.b16 %v825
    %v1206 = vunpack.c.l.b16 %v826
    %v1207 = vunpack.c.h.b16 %v826
    %v1208 = vunpack.c.l.b16 %v827
    %v1209 = vunpack.c.h.b16 %v827
    %v1210 = vunpack.c.l.b16 %v828
    %v1211 = vunpack.c.h.b16 %v828
    %v1212 = vunpack.c.l.b16 %v829
    %v1213 = vunpack.c.h.b16 %v829
    %v1214 = vunpack.c.l.b16 %v830
    %v1215 = vunpack.c.h.b16 %v830
    %v1216 = vunpack.c.l.b16 %v831
    %v1217 = vunpack.c.h.b16 %v831
    %v1218 = vunpack.c.l.b16 %v832
    %v1219 = vunpack.c.h.b16 %v832
    %v1220 = vunpack.c.l.b16 %v833
    %v1221 = vunpack.c.h.b16 %v833
    %v1222 = vunpack.c.l.b16 %v834
    %v1223 = vunpack.c.h.b16 %v834
    %v1224 = vunpack.c.l.b16 %v835
    %v1225 = vunpack.c.h.b16 %v835
    %v1226 = vunpack.c.l.b16 %v836
    %v1227 = vunpack.c.h.b16 %v836
    %v1228 = vunpack.c.l.b16 %v837
    %v1229 = vunpack.c.h.b16 %v837
    %v1230 = vunpack.c.l.b16 %v838
    %v1231 = vunpack.c.h.b16 %v838
    %v1232 = vunpack.c.l.b16 %v839
    %v1233 = vunpack.c.h.b16 %v839
    %v1234 = vunpack.c.l.b16 %v840
    %v1235 = vunpack.c.h.b16 %v840
    %v1236 = vunpack.c.l.b16 %v841
    %v1237 = vunpack.c.h.b16 %v841
    %v1238 = vunpack.c.l.b16 %v842
    %v1239 = vunpack.c.h.b16 %v842
    %v1240 = vunpack.c.l.b16 %v843
    %v1241 = vunpack.c.h.b16 %v843
    %v1242 = vunpack.c.l.b16 %v844
    %v1243 = vunpack.c.h.b16 %v844
    %v1244 = vunpack.c.l.b16 %v845
    %v1245 = vunpack.c.h.b16 %v845
    %v1246 = vunpack.c.l.b16 %v846
    %v1247 = vunpack.c.h.b16 %v846
    %v1248 = vunpack.c.l.b16 %v847
    %v1249 = vunpack.c.h.b16 %v847
    %v1250 = vunpack.c.l.b16 %v848
    %v1251 = vunpack.c.h.b16 %v848
    %v1252 = vunpack.c.l.b16 %v849
    %v1253 = vunpack.c.h.b16 %v849
    %v1254 = vunpack.c.l.b16 %v850
    %v1255 = vunpack.c.h.b16 %v850
    %v1256 = vunpack.c.l.b16 %v851
    %v1257 = vunpack.c.h.b16 %v851
    %v1258 = vunpack.c.l.b16 %v852
    %v1259 = vunpack.c.h.b16 %v852
    %v1260 = vunpack.c.l.b16 %v853
    %v1261 = vunpack.c.h.b16 %v853
    %v1262 = vunpack.c.l.b16 %v854
    %v1263 = vunpack.c.h.b16 %v854
    %v1264 = vunpack.c.l.b16 %v855
    %v1265 = vunpack.c.h.b16 %v855
    %v1266 = vunpack.c.l.b16 %v856
    %v1267 = vunpack.c.h.b16 %v856
    %v1268 = vunpack.c.l.b16 %v857
    %v1269 = vunpack.c.h.b16 %v857
    %v1270 = vunpack.c.l.b16 %v858
    %v1271 = vunpack.c.h.b16 %v858
    %v1272 = vunpack.c.l.b16 %v859
    %v1273 = vunpack.c.h.b16 %v859
    %v1274 = vunpack.c.l.b16 %v860
    %v1275 = vunpack.c.h.b16 %v860
    %v1276 = vunpack.c.l.b16 %v861
    %v1277 = vunpack.c.h.b16 %v861
    %v1278 = vunpack.c.l.b16 %v862
    %v1279 = vunpack.c.h.b16 %v862
    %v1280 = vunpack.c.l.b16 %v863
    %v1281 = vunpack.c.h.b16 %v863
    %v1282 = vunpack.c.l.b16 %v864
    %v1283 = vunpack.c.h.b16 %v864
    %v1284 = vunpack.c.l.b16 %v865
    %v1285 = vunpack.c.h.b16 %v865
    %v1286 = vunpack.c.l.b16 %v866
    %v1287 = vunpack.c.h.b16 %v866
    %v1288 = vunpack.c.l.b16 %v867
    %v1289 = vunpack.c.h.b16 %v867
    %v1290 = vunpack.c.l.b16 %v868
    %v1291 = vunpack.c.h.b16 %v868
    %v1292 = vunpack.c.l.b16 %v869
    %v1293 = vunpack.c.h.b16 %v869
    %v1294 = vunpack.c.l.b16 %v870
    %v1295 = vunpack.c.h.b16 %v870
    %v1296 = vunpack.c.l.b16 %v871
    %v1297 = vunpack.c.h.b16 %v871
    %v1298 = vunpack.c.l.b16 %v872
    %v1299 = vunpack.c.h.b16 %v872
    %v1300 = vunpack.c.l.b16 %v873
    %v1301 = vunpack.c.h.b16 %v873
    %v1302 = vunpack.c.l.b16 %v874
    %v1303 = vunpack.c.h.b16 %v874
    %v1304 = vunpack.c.l.b16 %v875
    %v1305 = vunpack.c.h.b16 %v875
    %v1306 = vunpack.c.l.b16 %v876
    %v1307 = vunpack.c.h.b16 %v876
    %v1308 = vunpack.c.l.b16 %v877
    %v1309 = vunpack.c.h.b16 %v877
    %v1310 = vunpack.c.l.b16 %v878
    %v1311 = vunpack.c.h.b16 %v878
    %v1312 = vunpack.c.l.b16 %v879
    %v1313 = vunpack.c.h.b16 %v879
    %v1314 = vunpack.c.l.b16 %v880
    %v1315 = vunpack.c.h.b16 %v880
    %v1316 = vunpack.c.l.b16 %v881
    %v1317 = vunpack.c.h.b16 %v881
    %v1318 = vunpack.c.l.b16 %v882
    %v1319 = vunpack.c.h.b16 %v882
    %v1320 = vunpack.c.l.b16 %v883
    %v1321 = vunpack.c.h.b16 %v883
    %v1322 = vunpack.c.l.b16 %v884
    %v1323 = vunpack.c.h.b16 %v884
    %v1324 = vunpack.c.l.b16 %v885
    %v1325 = vunpack.c.h.b16 %v885
    %v1326 = vpack.c.b16 %v1168, %v1166
    %v1327 = vpack.c.b16 %v1169, %v1167
    %v1328 = vpack.c.b16 %v1172, %v1170
    %v1329 = vpack.c.b16 %v1173, %v1171
    %v1330 = vpack.c.b16 %v1176, %v1174
    %v1331 = vpack.c.b16 %v1177, %v1175
    %v1332 = vpack.c.b16 %v1180, %v1178
    %v1333 = vpack.c.b16 %v1181, %v1179
    %v1334 = vpack.c.b16 %v1184, %v1182
    %v1335 = vpack.c.b16 %v1185, %v1183
    %v1336 = vpack.c.b16 %v1188, %v1186
    %v1337 = vpack.c.b16 %v1189, %v1187
    %v1338 = vpack.c.b16 %v1192, %v1190
    %v1339 = vpack.c.b16 %v1193, %v1191
    %v1340 = vpack.c.b16 %v1196, %v1194
    %v1341 = vpack.c.b16 %v1197, %v1195
    %v1342 = vpack.c.b16 %v1200, %v1198
    %v1343 = vpack.c.b16 %v1201, %v1199
    %v1344 = vpack.c.b16 %v1204, %v1202
    %v1345 = vpack.c.b16 %v1205, %v1203
    %v1346 = vpack.c.b16 %v1208, %v1206
    %v1347 = vpack.c.b16 %v1209, %v1207
    %v1348 = vpack.c.b16 %v1212, %v1210
    %v1349 = vpack.c.b16 %v1213, %v1211
    %v1350 = vpack.c.b16 %v1216, %v1214
    %v1351 = vpack.c.b16 %v1217, %v1215
    %v1352 = vpack.c.b16 %v1220, %v1218
    %v1353 = vpack.c.b16 %v1221, %v1219
    %v1354 = vpack.c.b16 %v1224, %v1222
    %v1355 = vpack.c.b16 %v1225, %v1223
    %v1356 = vpack.c.b16 %v1228, %v1226
    %v1357 = vpack.c.b16 %v1229, %v1227
    %v1358 = vpack.c.b16 %v1232, %v1230
    %v1359 = vpack.c.b16 %v1233, %v1231
    %v1360 = vpack.c.b16 %v1236, %v1234
    %v1361 = vpack.c.b16 %v1237, %v1235
    %v1362 = vpack.c.b16 %v1240, %v1238
    %v1363 = vpack.c.b16 %v1241, %v1239
    %v1364 = vpack.c.b16 %v1244, %v1242
    %v1365 = vpack.c.b16 %v1245, %v1243
    %v1366 = vpack.c.b16 %v1248, %v1246
    %v1367 = vpack.c.b16 %v1249, %v1247
    %v1368 = vpack.c.b16 %v1252, %v1250
    %v1369 = vpack.c.b16 %v1253, %v1251
    %v1370 = vpack.c.b16 %v1256, %v1254
    %v1371 = vpack.c.b16 %v1257, %v1255
    %v1372 = vpack.c.b16 %v1260, %v1258
    %v1373 = vpack.c.b16 %v1261, %v1259
    %v1374 = vpack.c.b16 %v1264, %v1262
    %v1375 = vpack.c.b16 %v1265, %v1263
    %v1376 = vpack.c.b16 %v1268, %v1266
    %v1377 = vpack.c.b16 %v1269, %v1267
    %v1378 = vpack.c.b16 %v1272, %v1270
    %v1379 = vpack.c.b16 %v1273, %v1271
    %v1380 = vpack.c.b16 %v1276, %v1274
    %v1381 = vpack.c.b16 %v1277, %v1275
    %v1382 = vpack.c.b16 %v1280, %v1278
    %v1383 = vpack.c.b16 %v1281, %v1279
    %v1384 = vpack.c.b16 %v1284, %v1282
    %v1385 = vpack.c.b16 %v1285, %v1283
    %v1386 = vpack.c.b16 %v1288, %v1286
    %v1387 = vpack.c.b16 %v1289, %v1287
    %v1388 = vpack.c.b16 %v1292, %v1290
    %v1389 = vpack.c.b16 %v1293, %v1291
    %v1390 = vpack.c.b16 %v1296, %v1294
    %v1391 = vpack.c.b16 %v1297, %v1295
    %v1392 = vpack.c.b16 %v1300, %v1298
    %v1393 = vpack.c.b16 %v1301, %v1299
    %v1394 = vpack.c.b16 %v1304, %v1302
    %v1395 = vpack.c.b16 %v1305, %v1303
    %v1396 = vpack.c.b16 %v1308, %v1306
    %v1397 = vpack.c.b16 %v1309, %v1307
    %v1398 = vpack.c.b16 %v1312, %v1310
    %v1399 = vpack.c.b16 %v1313, %v1311
    %v1400 = vpack.c.b16 %v1316, %v1314
    %v1401 = vpack.c.b16 %v1317, %v1315
    %v1402 = vpack.c.b16 %v1320, %v1318
    %v1403 = vpack.c.b16 %v1321, %v1319
    %v1404 = vpack.c.b16 %v1324, %v1322
    %v1405 = vpack.c.b16 %v1325, %v1323
    %1486 = vmatprep.subr.bf16.mxu0 %v1327
    %1487 = vmatpush1.bf16.msra.mxu0 %v1326
    %1488 = vmatprep.subr.bf16.mxu0 %v1329
    %1489 = vmatpush1.bf16.msra.mxu0 %v1328
    %1490 = vmatprep.subr.bf16.mxu0 %v1331
    %1491 = vmatpush1.bf16.msra.mxu0 %v1330
    %1492 = vmatprep.subr.bf16.mxu0 %v1333
    %1493 = vmatpush1.bf16.msra.mxu0 %v1332
    %1494 = vmatprep.subr.bf16.mxu0 %v1335
    %1495 = vmatpush1.bf16.msra.mxu0 %v1334
    %1496 = vmatprep.subr.bf16.mxu0 %v1337
    %1497 = vmatpush1.bf16.msra.mxu0 %v1336
    %1498 = vmatprep.subr.bf16.mxu0 %v1339
    %1499 = vmatpush1.bf16.msra.mxu0 %v1338
    %1500 = vmatprep.subr.bf16.mxu0 %v1341
    %1501 = vmatpush1.bf16.msra.mxu0 %v1340
    %1502 = vmatprep.subr.bf16.mxu0 %v1343
    %1503 = vmatpush1.bf16.msra.mxu0 %v1342
    %1504 = vmatprep.subr.bf16.mxu0 %v1345
    %1505 = vmatpush1.bf16.msra.mxu0 %v1344
    %1506 = vmatprep.subr.bf16.mxu0 %v1347
    %1507 = vmatpush1.bf16.msra.mxu0 %v1346
    %1508 = vmatprep.subr.bf16.mxu0 %v1349
    %1509 = vmatpush1.bf16.msra.mxu0 %v1348
    %1510 = vmatprep.subr.bf16.mxu0 %v1351
    %1511 = vmatpush1.bf16.msra.mxu0 %v1350
    %1512 = vmatprep.subr.bf16.mxu0 %v1353
    %1513 = vmatpush1.bf16.msra.mxu0 %v1352
    %1514 = vmatprep.subr.bf16.mxu0 %v1355
    %1515 = vmatpush1.bf16.msra.mxu0 %v1354
    %1516 = vmatprep.subr.bf16.mxu0 %v1357
    %1517 = vmatpush1.bf16.msra.mxu0 %v1356
    %1518 = vmatprep.mubr.bf16.mxu0 %v906
    %1519 = vmatmul.mubr.bf16.gmra.mrb[0].mxu0 %v903
    %v1520 = vpop.f32.mrb[0].mxu0
    %v1521 = vadd.f32 %v891, %v1520
    %v1522 = vpop.f32.mrb[0].mxu0
    %v1523 = vadd.f32 %v895, %v1522
    %v1524 = vpop.f32.mrb[0].mxu0
    %v1525 = vadd.f32 %v891, %v1524
    %v1526 = vpop.f32.mrb[0].mxu0
    %v1527 = vadd.f32 %v895, %v1526
    %1528 = vmatprep.mubr.bf16.mxu0 %v919
    %1529 = vmatmul.mubr.bf16.gmra.mrb[0].mxu0 %v917
    %v1530 = vpop.f32.mrb[0].mxu0
    %v1531 = vadd.f32 %v891, %v1530
    %v1532 = vpop.f32.mrb[0].mxu0
    %v1533 = vadd.f32 %v895, %v1532
    %v1534 = vpop.f32.mrb[0].mxu0
    %v1535 = vadd.f32 %v891, %v1534
    %v1536 = vpop.f32.mrb[0].mxu0
    %v1537 = vadd.f32 %v895, %v1536
    %1538 = vmatprep.mubr.bf16.mxu0 %v929
    %1539 = vmatmul.mubr.bf16.gmra.mrb[0].mxu0 %v927
    %v1540 = vpop.f32.mrb[0].mxu0
    %v1541 = vadd.f32 %v891, %v1540
    %v1542 = vpop.f32.mrb[0].mxu0
    %v1543 = vadd.f32 %v895, %v1542
    %v1544 = vpop.f32.mrb[0].mxu0
    %v1545 = vadd.f32 %v891, %v1544
    %v1546 = vpop.f32.mrb[0].mxu0
    %v1547 = vadd.f32 %v895, %v1546
    %1548 = vmatprep.mubr.bf16.mxu0 %v939
    %1549 = vmatmul.mubr.bf16.gmra.mrb[0].mxu0 %v937
    %v1550 = vpop.f32.mrb[0].mxu0
    %v1551 = vadd.f32 %v891, %v1550
    %v1552 = vpop.f32.mrb[0].mxu0
    %v1553 = vadd.f32 %v895, %v1552
    %v1554 = vpop.f32.mrb[0].mxu0
    %v1555 = vadd.f32 %v891, %v1554
    %v1556 = vpop.f32.mrb[0].mxu0
    %v1557 = vadd.f32 %v895, %v1556
    %1558 = vmatprep.mubr.bf16.mxu0 %v949
    %1559 = vmatmul.mubr.bf16.gmra.mrb[0].mxu0 %v947
    %v1560 = vpop.f32.mrb[0].mxu0
    %v1561 = vadd.f32 %v891, %v1560
    %v1562 = vpop.f32.mrb[0].mxu0
    %v1563 = vadd.f32 %v895, %v1562
    %v1564 = vpop.f32.mrb[0].mxu0
    %v1565 = vadd.f32 %v891, %v1564
    %v1566 = vpop.f32.mrb[0].mxu0
    %v1567 = vadd.f32 %v895, %v1566
    %1568 = vmatprep.mubr.bf16.mxu0 %v959
    %1569 = vmatmul.mubr.bf16.gmra.mrb[0].mxu0 %v957
    %v1570 = vpop.f32.mrb[0].mxu0
    %v1571 = vadd.f32 %v891, %v1570
    %v1572 = vpop.f32.mrb[0].mxu0
    %v1573 = vadd.f32 %v895, %v1572
    %v1574 = vpop.f32.mrb[0].mxu0
    %v1575 = vadd.f32 %v891, %v1574
    %v1576 = vpop.f32.mrb[0].mxu0
    %v1577 = vadd.f32 %v895, %v1576
    %1578 = vmatprep.mubr.bf16.mxu0 %v969
    %1579 = vmatmul.mubr.bf16.gmra.mrb[0].mxu0 %v967
    %v1580 = vpop.f32.mrb[0].mxu0
    %v1581 = vadd.f32 %v891, %v1580
    %v1582 = vpop.f32.mrb[0].mxu0
    %v1583 = vadd.f32 %v895, %v1582
    %v1584 = vpop.f32.mrb[0].mxu0
    %v1585 = vadd.f32 %v891, %v1584
    %v1586 = vpop.f32.mrb[0].mxu0
    %v1587 = vadd.f32 %v895, %v1586
    %1588 = vmatprep.mubr.bf16.mxu0 %v979
    %1589 = vmatmul.mubr.bf16.gmra.mrb[0].mxu0 %v977
    %v1590 = vpop.f32.mrb[0].mxu0
    %v1591 = vadd.f32 %v891, %v1590
    %v1592 = vpop.f32.mrb[0].mxu0
    %v1593 = vadd.f32 %v895, %v1592
    %v1594 = vpop.f32.mrb[0].mxu0
    %v1595 = vadd.f32 %v891, %v1594
    %v1596 = vpop.f32.mrb[0].mxu0
    %v1597 = vadd.f32 %v895, %v1596
    %1598 = vmatprep.mubr.bf16.mxu0 %v989
    %1599 = vmatmul.mubr.bf16.gmra.mrb[0].mxu0 %v987
    %v1600 = vpop.f32.mrb[0].mxu0
    %v1601 = vadd.f32 %v891, %v1600
    %v1602 = vpop.f32.mrb[0].mxu0
    %v1603 = vadd.f32 %v895, %v1602
    %v1604 = vpop.f32.mrb[0].mxu0
    %v1605 = vadd.f32 %v891, %v1604
    %v1606 = vpop.f32.mrb[0].mxu0
    %v1607 = vadd.f32 %v895, %v1606
    %1608 = vmatprep.mubr.bf16.mxu0 %v999
    %1609 = vmatmul.mubr.bf16.gmra.mrb[0].mxu0 %v997
    %v1610 = vpop.f32.mrb[0].mxu0
    %v1611 = vadd.f32 %v891, %v1610
    %v1612 = vpop.f32.mrb[0].mxu0
    %v1613 = vadd.f32 %v895, %v1612
    %v1614 = vpop.f32.mrb[0].mxu0
    %v1615 = vadd.f32 %v891, %v1614
    %v1616 = vpop.f32.mrb[0].mxu0
    %v1617 = vadd.f32 %v895, %v1616
    %1618 = vmatprep.mubr.bf16.mxu0 %v1009
    %1619 = vmatmul.mubr.bf16.gmra.mrb[0].mxu0 %v1007
    %v1620 = vpop.f32.mrb[0].mxu0
    %v1621 = vadd.f32 %v891, %v1620
    %v1622 = vpop.f32.mrb[0].mxu0
    %v1623 = vadd.f32 %v895, %v1622
    %v1624 = vpop.f32.mrb[0].mxu0
    %v1625 = vadd.f32 %v891, %v1624
    %v1626 = vpop.f32.mrb[0].mxu0
    %v1627 = vadd.f32 %v895, %v1626
    %1628 = vmatprep.mubr.bf16.mxu0 %v1019
    %1629 = vmatmul.mubr.bf16.gmra.mrb[0].mxu0 %v1017
    %v1630 = vpop.f32.mrb[0].mxu0
    %v1631 = vadd.f32 %v891, %v1630
    %v1632 = vpop.f32.mrb[0].mxu0
    %v1633 = vadd.f32 %v895, %v1632
    %v1634 = vpop.f32.mrb[0].mxu0
    %v1635 = vadd.f32 %v891, %v1634
    %v1636 = vpop.f32.mrb[0].mxu0
    %v1637 = vadd.f32 %v895, %v1636
    %1638 = vdwg.mxu0
    %1639 = vmatprep.subr.bf16.mxu0 %v1359
    %1640 = vmatpush1.bf16.msra.mxu0 %v1358
    %1641 = vmatprep.subr.bf16.mxu0 %v1361
    %1642 = vmatpush1.bf16.msra.mxu0 %v1360
    %1643 = vmatprep.subr.bf16.mxu0 %v1363
    %1644 = vmatpush1.bf16.msra.mxu0 %v1362
    %1645 = vmatprep.subr.bf16.mxu0 %v1365
    %1646 = vmatpush1.bf16.msra.mxu0 %v1364
    %1647 = vmatprep.subr.bf16.mxu0 %v1367
    %1648 = vmatpush1.bf16.msra.mxu0 %v1366
    %1649 = vmatprep.subr.bf16.mxu0 %v1369
    %1650 = vmatpush1.bf16.msra.mxu0 %v1368
    %1651 = vmatprep.subr.bf16.mxu0 %v1371
    %1652 = vmatpush1.bf16.msra.mxu0 %v1370
    %1653 = vmatprep.subr.bf16.mxu0 %v1373
    %1654 = vmatpush1.bf16.msra.mxu0 %v1372
    %1655 = vmatprep.subr.bf16.mxu0 %v1375
    %1656 = vmatpush1.bf16.msra.mxu0 %v1374
    %1657 = vmatprep.subr.bf16.mxu0 %v1377
    %1658 = vmatpush1.bf16.msra.mxu0 %v1376
    %1659 = vmatprep.subr.bf16.mxu0 %v1379
    %1660 = vmatpush1.bf16.msra.mxu0 %v1378
    %1661 = vmatprep.subr.bf16.mxu0 %v1381
    %1662 = vmatpush1.bf16.msra.mxu0 %v1380
    %1663 = vmatprep.subr.bf16.mxu0 %v1383
    %1664 = vmatpush1.bf16.msra.mxu0 %v1382
    %1665 = vmatprep.subr.bf16.mxu0 %v1385
    %1666 = vmatpush1.bf16.msra.mxu0 %v1384
    %1667 = vmatprep.subr.bf16.mxu0 %v1387
    %1668 = vmatpush1.bf16.msra.mxu0 %v1386
    %1669 = vmatprep.subr.bf16.mxu0 %v1389
    %1670 = vmatpush1.bf16.msra.mxu0 %v1388
    %1671 = vmatprep.mubr.bf16.mxu0 %v912
    %1672 = vmatmul.mubr.bf16.gmra.mrb[0].mxu0 %v909
    %v1673 = vpop.f32.mrb[0].mxu0
    %v1674 = vadd.f32 %v1521, %v1673
    %v1675 = vpop.f32.mrb[0].mxu0
    %v1676 = vadd.f32 %v1523, %v1675
    %v1677 = vpop.f32.mrb[0].mxu0
    %v1678 = vadd.f32 %v1525, %v1677
    %v1679 = vpop.f32.mrb[0].mxu0
    %v1680 = vadd.f32 %v1527, %v1679
    %1681 = vmatprep.mubr.bf16.mxu0 %v923
    %1682 = vmatmul.mubr.bf16.gmra.mrb[0].mxu0 %v921
    %v1683 = vpop.f32.mrb[0].mxu0
    %v1684 = vadd.f32 %v1531, %v1683
    %v1685 = vpop.f32.mrb[0].mxu0
    %v1686 = vadd.f32 %v1533, %v1685
    %v1687 = vpop.f32.mrb[0].mxu0
    %v1688 = vadd.f32 %v1535, %v1687
    %v1689 = vpop.f32.mrb[0].mxu0
    %v1690 = vadd.f32 %v1537, %v1689
    %1691 = vmatprep.mubr.bf16.mxu0 %v933
    %1692 = vmatmul.mubr.bf16.gmra.mrb[0].mxu0 %v931
    %v1693 = vpop.f32.mrb[0].mxu0
    %v1694 = vadd.f32 %v1541, %v1693
    %v1695 = vpop.f32.mrb[0].mxu0
    %v1696 = vadd.f32 %v1543, %v1695
    %v1697 = vpop.f32.mrb[0].mxu0
    %v1698 = vadd.f32 %v1545, %v1697
    %v1699 = vpop.f32.mrb[0].mxu0
    %v1700 = vadd.f32 %v1547, %v1699
    %1701 = vmatprep.mubr.bf16.mxu0 %v943
    %1702 = vmatmul.mubr.bf16.gmra.mrb[0].mxu0 %v941
    %v1703 = vpop.f32.mrb[0].mxu0
    %v1704 = vadd.f32 %v1551, %v1703
    %v1705 = vpop.f32.mrb[0].mxu0
    %v1706 = vadd.f32 %v1553, %v1705
    %v1707 = vpop.f32.mrb[0].mxu0
    %v1708 = vadd.f32 %v1555, %v1707
    %v1709 = vpop.f32.mrb[0].mxu0
    %v1710 = vadd.f32 %v1557, %v1709
    %1711 = vmatprep.mubr.bf16.mxu0 %v953
    %1712 = vmatmul.mubr.bf16.gmra.mrb[0].mxu0 %v951
    %v1713 = vpop.f32.mrb[0].mxu0
    %v1714 = vadd.f32 %v1561, %v1713
    %v1715 = vpop.f32.mrb[0].mxu0
    %v1716 = vadd.f32 %v1563, %v1715
    %v1717 = vpop.f32.mrb[0].mxu0
    %v1718 = vadd.f32 %v1565, %v1717
    %v1719 = vpop.f32.mrb[0].mxu0
    %v1720 = vadd.f32 %v1567, %v1719
    %1721 = vmatprep.mubr.bf16.mxu0 %v963
    %1722 = vmatmul.mubr.bf16.gmra.mrb[0].mxu0 %v961
    %v1723 = vpop.f32.mrb[0].mxu0
    %v1724 = vadd.f32 %v1571, %v1723
    %v1725 = vpop.f32.mrb[0].mxu0
    %v1726 = vadd.f32 %v1573, %v1725
    %v1727 = vpop.f32.mrb[0].mxu0
    %v1728 = vadd.f32 %v1575, %v1727
    %v1729 = vpop.f32.mrb[0].mxu0
    %v1730 = vadd.f32 %v1577, %v1729
    %1731 = vmatprep.mubr.bf16.mxu0 %v973
    %1732 = vmatmul.mubr.bf16.gmra.mrb[0].mxu0 %v971
    %v1733 = vpop.f32.mrb[0].mxu0
    %v1734 = vadd.f32 %v1581, %v1733
    %v1735 = vpop.f32.mrb[0].mxu0
    %v1736 = vadd.f32 %v1583, %v1735
    %v1737 = vpop.f32.mrb[0].mxu0
    %v1738 = vadd.f32 %v1585, %v1737
    %v1739 = vpop.f32.mrb[0].mxu0
    %v1740 = vadd.f32 %v1587, %v1739
    %1741 = vmatprep.mubr.bf16.mxu0 %v983
    %1742 = vmatmul.mubr.bf16.gmra.mrb[0].mxu0 %v981
    %v1743 = vpop.f32.mrb[0].mxu0
    %v1744 = vadd.f32 %v1591, %v1743
    %v1745 = vpop.f32.mrb[0].mxu0
    %v1746 = vadd.f32 %v1593, %v1745
    %v1747 = vpop.f32.mrb[0].mxu0
    %v1748 = vadd.f32 %v1595, %v1747
    %v1749 = vpop.f32.mrb[0].mxu0
    %v1750 = vadd.f32 %v1597, %v1749
    %1751 = vmatprep.mubr.bf16.mxu0 %v993
    %1752 = vmatmul.mubr.bf16.gmra.mrb[0].mxu0 %v991
    %v1753 = vpop.f32.mrb[0].mxu0
    %v1754 = vadd.f32 %v1601, %v1753
    %v1755 = vpop.f32.mrb[0].mxu0
    %v1756 = vadd.f32 %v1603, %v1755
    %v1757 = vpop.f32.mrb[0].mxu0
    %v1758 = vadd.f32 %v1605, %v1757
    %v1759 = vpop.f32.mrb[0].mxu0
    %v1760 = vadd.f32 %v1607, %v1759
    %1761 = vmatprep.mubr.bf16.mxu0 %v1003
    %1762 = vmatmul.mubr.bf16.gmra.mrb[0].mxu0 %v1001
    %v1763 = vpop.f32.mrb[0].mxu0
    %v1764 = vadd.f32 %v1611, %v1763
    %v1765 = vpop.f32.mrb[0].mxu0
    %v1766 = vadd.f32 %v1613, %v1765
    %v1767 = vpop.f32.mrb[0].mxu0
    %v1768 = vadd.f32 %v1615, %v1767
    %v1769 = vpop.f32.mrb[0].mxu0
    %v1770 = vadd.f32 %v1617, %v1769
    %1771 = vmatprep.mubr.bf16.mxu0 %v1013
    %1772 = vmatmul.mubr.bf16.gmra.mrb[0].mxu0 %v1011
    %v1773 = vpop.f32.mrb[0].mxu0
    %v1774 = vadd.f32 %v1621, %v1773
    %v1775 = vpop.f32.mrb[0].mxu0
    %v1776 = vadd.f32 %v1623, %v1775
    %v1777 = vpop.f32.mrb[0].mxu0
    %v1778 = vadd.f32 %v1625, %v1777
    %v1779 = vpop.f32.mrb[0].mxu0
    %v1780 = vadd.f32 %v1627, %v1779
    %1781 = vmatprep.mubr.bf16.mxu0 %v1023
    %1782 = vmatmul.mubr.bf16.gmra.mrb[0].mxu0 %v1021
    %v1783 = vpop.f32.mrb[0].mxu0
    %v1784 = vadd.f32 %v1631, %v1783
    %v1785 = vpop.f32.mrb[0].mxu0
    %v1786 = vadd.f32 %v1633, %v1785
    %v1787 = vpop.f32.mrb[0].mxu0
    %v1788 = vadd.f32 %v1635, %v1787
    %v1789 = vpop.f32.mrb[0].mxu0
    %v1790 = vadd.f32 %v1637, %v1789
    %1791 = vdwg.mxu0
    %1792 = vmatprep.subr.bf16.mxu0 %v1391
    %1793 = vmatpush1.bf16.msra.mxu0 %v1390
    %1794 = vmatprep.subr.bf16.mxu0 %v1393
    %1795 = vmatpush1.bf16.msra.mxu0 %v1392
    %1796 = vmatprep.subr.bf16.mxu0 %v1395
    %1797 = vmatpush1.bf16.msra.mxu0 %v1394
    %1798 = vmatprep.subr.bf16.mxu0 %v1397
    %1799 = vmatpush1.bf16.msra.mxu0 %v1396
    %1800 = vmatprep.subr.bf16.mxu0 %v1399
    %1801 = vmatpush1.bf16.msra.mxu0 %v1398
    %1802 = vmatprep.subr.bf16.mxu0 %v1401
    %1803 = vmatpush1.bf16.msra.mxu0 %v1400
    %1804 = vmatprep.subr.bf16.mxu0 %v1403
    %1805 = vmatpush1.bf16.msra.mxu0 %v1402
    %1806 = vmatprep.subr.bf16.mxu0 %v1405
    %1807 = vmatpush1.bf16.msra.mxu0 %v1404
    %1808 = vmatprep.subr.bf16.mxu0 0
    %1809 = vmatpush1.bf16.msra.mxu0 0
    %1810 = vmatprep.subr.bf16.mxu0 0
    %1811 = vmatpush1.bf16.msra.mxu0 0
    %1812 = vmatprep.subr.bf16.mxu0 0
    %1813 = vmatpush1.bf16.msra.mxu0 0
    %1814 = vmatprep.subr.bf16.mxu0 0
    %1815 = vmatpush1.bf16.msra.mxu0 0
    %1816 = vmatprep.subr.bf16.mxu0 0
    %1817 = vmatpush1.bf16.msra.mxu0 0
    %1818 = vmatprep.subr.bf16.mxu0 0
    %1819 = vmatpush1.bf16.msra.mxu0 0
    %1820 = vmatprep.subr.bf16.mxu0 0
    %1821 = vmatpush1.bf16.msra.mxu0 0
    %1822 = vmatprep.subr.bf16.mxu0 0
    %1823 = vmatpush1.bf16.msra.mxu0 0
    %1824 = vmatprep.mubr.bf16.mxu0 0
    %1825 = vmatmul.mubr.bf16.gmra.mrb[0].mxu0 %v915
    %v1826 = vpop.f32.mrb[0].mxu0
    %v1827 = vadd.f32 %v1674, %v1826
    %v1828 = vpop.f32.mrb[0].mxu0
    %v1829 = vadd.f32 %v1676, %v1828
    %v1830 = vpop.f32.mrb[0].mxu0
    %v1831 = vadd.f32 %v1678, %v1830
    %v1832 = vpop.f32.mrb[0].mxu0
    %v1833 = vadd.f32 %v1680, %v1832
    %1834 = vmatprep.mubr.bf16.mxu0 0
    %1835 = vmatmul.mubr.bf16.gmra.mrb[0].mxu0 %v925
    %v1836 = vpop.f32.mrb[0].mxu0
    %v1837 = vadd.f32 %v1684, %v1836
    %v1838 = vpop.f32.mrb[0].mxu0
    %v1839 = vadd.f32 %v1686, %v1838
    %v1840 = vpop.f32.mrb[0].mxu0
    %v1841 = vadd.f32 %v1688, %v1840
    %v1842 = vpop.f32.mrb[0].mxu0
    %v1843 = vadd.f32 %v1690, %v1842
    %1844 = vmatprep.mubr.bf16.mxu0 0
    %1845 = vmatmul.mubr.bf16.gmra.mrb[0].mxu0 %v935
    %v1846 = vpop.f32.mrb[0].mxu0
    %v1847 = vadd.f32 %v1694, %v1846
    %v1848 = vpop.f32.mrb[0].mxu0
    %v1849 = vadd.f32 %v1696, %v1848
    %v1850 = vpop.f32.mrb[0].mxu0
    %v1851 = vadd.f32 %v1698, %v1850
    %v1852 = vpop.f32.mrb[0].mxu0
    %v1853 = vadd.f32 %v1700, %v1852
    %1854 = vmatprep.mubr.bf16.mxu0 0
    %1855 = vmatmul.mubr.bf16.gmra.mrb[0].mxu0 %v945
    %v1856 = vpop.f32.mrb[0].mxu0
    %v1857 = vadd.f32 %v1704, %v1856
    %v1858 = vpop.f32.mrb[0].mxu0
    %v1859 = vadd.f32 %v1706, %v1858
    %v1860 = vpop.f32.mrb[0].mxu0
    %v1861 = vadd.f32 %v1708, %v1860
    %v1862 = vpop.f32.mrb[0].mxu0
    %v1863 = vadd.f32 %v1710, %v1862
    %1864 = vmatprep.mubr.bf16.mxu0 0
    %1865 = vmatmul.mubr.bf16.gmra.mrb[0].mxu0 %v955
    %v1866 = vpop.f32.mrb[0].mxu0
    %v1867 = vadd.f32 %v1714, %v1866
    %v1868 = vpop.f32.mrb[0].mxu0
    %v1869 = vadd.f32 %v1716, %v1868
    %v1870 = vpop.f32.mrb[0].mxu0
    %v1871 = vadd.f32 %v1718, %v1870
    %v1872 = vpop.f32.mrb[0].mxu0
    %v1873 = vadd.f32 %v1720, %v1872
    %1874 = vmatprep.mubr.bf16.mxu0 0
    %1875 = vmatmul.mubr.bf16.gmra.mrb[0].mxu0 %v965
    %v1876 = vpop.f32.mrb[0].mxu0
    %v1877 = vadd.f32 %v1724, %v1876
    %v1878 = vpop.f32.mrb[0].mxu0
    %v1879 = vadd.f32 %v1726, %v1878
    %v1880 = vpop.f32.mrb[0].mxu0
    %v1881 = vadd.f32 %v1728, %v1880
    %v1882 = vpop.f32.mrb[0].mxu0
    %v1883 = vadd.f32 %v1730, %v1882
    %1884 = vmatprep.mubr.bf16.mxu0 0
    %1885 = vmatmul.mubr.bf16.gmra.mrb[0].mxu0 %v975
    %v1886 = vpop.f32.mrb[0].mxu0
    %v1887 = vadd.f32 %v1734, %v1886
    %v1888 = vpop.f32.mrb[0].mxu0
    %v1889 = vadd.f32 %v1736, %v1888
    %v1890 = vpop.f32.mrb[0].mxu0
    %v1891 = vadd.f32 %v1738, %v1890
    %v1892 = vpop.f32.mrb[0].mxu0
    %v1893 = vadd.f32 %v1740, %v1892
    %1894 = vmatprep.mubr.bf16.mxu0 0
    %1895 = vmatmul.mubr.bf16.gmra.mrb[0].mxu0 %v985
    %v1896 = vpop.f32.mrb[0].mxu0
    %v1897 = vadd.f32 %v1744, %v1896
    %v1898 = vpop.f32.mrb[0].mxu0
    %v1899 = vadd.f32 %v1746, %v1898
    %v1900 = vpop.f32.mrb[0].mxu0
    %v1901 = vadd.f32 %v1748, %v1900
    %v1902 = vpop.f32.mrb[0].mxu0
    %v1903 = vadd.f32 %v1750, %v1902
    %1904 = vmatprep.mubr.bf16.mxu0 0
    %1905 = vmatmul.mubr.bf16.gmra.mrb[0].mxu0 %v995
    %v1906 = vpop.f32.mrb[0].mxu0
    %v1907 = vadd.f32 %v1754, %v1906
    %v1908 = vpop.f32.mrb[0].mxu0
    %v1909 = vadd.f32 %v1756, %v1908
    %v1910 = vpop.f32.mrb[0].mxu0
    %v1911 = vadd.f32 %v1758, %v1910
    %v1912 = vpop.f32.mrb[0].mxu0
    %v1913 = vadd.f32 %v1760, %v1912
    %1914 = vmatprep.mubr.bf16.mxu0 0
    %1915 = vmatmul.mubr.bf16.gmra.mrb[0].mxu0 %v1005
    %v1916 = vpop.f32.mrb[0].mxu0
    %v1917 = vadd.f32 %v1764, %v1916
    %v1918 = vpop.f32.mrb[0].mxu0
    %v1919 = vadd.f32 %v1766, %v1918
    %v1920 = vpop.f32.mrb[0].mxu0
    %v1921 = vadd.f32 %v1768, %v1920
    %v1922 = vpop.f32.mrb[0].mxu0
    %v1923 = vadd.f32 %v1770, %v1922
    %1924 = vmatprep.mubr.bf16.mxu0 0
    %1925 = vmatmul.mubr.bf16.gmra.mrb[0].mxu0 %v1015
    %v1926 = vpop.f32.mrb[0].mxu0
    %v1927 = vadd.f32 %v1774, %v1926
    %v1928 = vpop.f32.mrb[0].mxu0
    %v1929 = vadd.f32 %v1776, %v1928
    %v1930 = vpop.f32.mrb[0].mxu0
    %v1931 = vadd.f32 %v1778, %v1930
    %v1932 = vpop.f32.mrb[0].mxu0
    %v1933 = vadd.f32 %v1780, %v1932
    %1934 = vmatprep.mubr.bf16.mxu0 0
    %1935 = vmatmul.mubr.bf16.gmra.mrb[0].mxu0 %v1025
    %v1936 = vpop.f32.mrb[0].mxu0
    %v1937 = vadd.f32 %v1784, %v1936
    %v1938 = vpop.f32.mrb[0].mxu0
    %v1939 = vadd.f32 %v1786, %v1938
    %v1940 = vpop.f32.mrb[0].mxu0
    %v1941 = vadd.f32 %v1788, %v1940
    %v1942 = vpop.f32.mrb[0].mxu0
    %v1943 = vadd.f32 %v1790, %v1942
    %1944 = vdwg.mxu0
    %v1945 = vpack.c.bf16 %v1831, %v1827
    %v1946 = vpack.c.bf16 %v1833, %v1829
    %v1947 = vpack.c.bf16 %v1841, %v1837
    %v1948 = vpack.c.bf16 %v1843, %v1839
    %v1949 = vpack.c.bf16 %v1851, %v1847
    %v1950 = vpack.c.bf16 %v1853, %v1849
    %v1951 = vpack.c.bf16 %v1861, %v1857
    %v1952 = vpack.c.bf16 %v1863, %v1859
    %v1953 = vpack.c.bf16 %v1871, %v1867
    %v1954 = vpack.c.bf16 %v1873, %v1869
    %v1955 = vpack.c.bf16 %v1881, %v1877
    %v1956 = vpack.c.bf16 %v1883, %v1879
    %v1957 = vpack.c.bf16 %v1891, %v1887
    %v1958 = vpack.c.bf16 %v1893, %v1889
    %v1959 = vpack.c.bf16 %v1901, %v1897
    %v1960 = vpack.c.bf16 %v1903, %v1899
    %v1961 = vpack.c.bf16 %v1911, %v1907
    %v1962 = vpack.c.bf16 %v1913, %v1909
    %v1963 = vpack.c.bf16 %v1921, %v1917
    %v1964 = vpack.c.bf16 %v1923, %v1919
    %v1965 = vpack.c.bf16 %v1931, %v1927
    %v1966 = vpack.c.bf16 %v1933, %v1929
    %v1967 = vpack.c.bf16 %v1941, %v1937
    %v1968 = vpack.c.bf16 %v1943, %v1939
    %v1969 = vtanh.bf16.pop %v1945
    %v1970 = vtanh.bf16.pop %v1947
    %v1971 = vtanh.bf16.pop %v1949
    %v1972 = vtanh.bf16.pop %v1951
    %v1973 = vtanh.bf16.pop %v1953
    %v1974 = vtanh.bf16.pop %v1955
    %v1975 = vtanh.bf16.pop %v1957
    %v1976 = vtanh.bf16.pop %v1959
    %v1977 = vtanh.bf16.pop %v1961
    %v1978 = vtanh.bf16.pop %v1963
    %v1979 = vtanh.bf16.pop %v1965
    %v1980 = vtanh.bf16.pop %v1967
    %v1981 = vxor.u32 %v1946, 2147516416
    %v1982 = vxor.u32 %v1948, 2147516416
    %v1983 = vxor.u32 %v1950, 2147516416
    %v1984 = vxor.u32 %v1952, 2147516416
    %v1985 = vxor.u32 %v1954, 2147516416
    %v1986 = vxor.u32 %v1956, 2147516416
    %v1987 = vxor.u32 %v1958, 2147516416
    %v1988 = vxor.u32 %v1960, 2147516416
    %v1989 = vxor.u32 %v1962, 2147516416
    %v1990 = vxor.u32 %v1964, 2147516416
    %v1991 = vxor.u32 %v1966, 2147516416
    %v1992 = vxor.u32 %v1968, 2147516416
    %v1994 = vmul.bf16 %v1981, 1069105081
    %v1995 = vpow.bf16.pop %v1994
    %v1997 = vmul.bf16 %v1982, 1069105081
    %v1998 = vpow.bf16.pop %v1997
    %v2000 = vmul.bf16 %v1983, 1069105081
    %v2001 = vpow.bf16.pop %v2000
    %v2003 = vmul.bf16 %v1984, 1069105081
    %v2004 = vpow.bf16.pop %v2003
    %v2006 = vmul.bf16 %v1985, 1069105081
    %v2007 = vpow.bf16.pop %v2006
    %v2009 = vmul.bf16 %v1986, 1069105081
    %v2010 = vpow.bf16.pop %v2009
    %v2012 = vmul.bf16 %v1987, 1069105081
    %v2013 = vpow.bf16.pop %v2012
    %v2015 = vmul.bf16 %v1988, 1069105081
    %v2016 = vpow.bf16.pop %v2015
    %v2018 = vmul.bf16 %v1989, 1069105081
    %v2019 = vpow.bf16.pop %v2018
    %v2021 = vmul.bf16 %v1990, 1069105081
    %v2022 = vpow.bf16.pop %v2021
    %v2024 = vmul.bf16 %v1991, 1069105081
    %v2025 = vpow.bf16.pop %v2024
    %v2027 = vmul.bf16 %v1992, 1069105081
    %v2028 = vpow.bf16.pop %v2027
    %v2029 = vadd.bf16 %v1995, 1065369472
    %v2030 = vadd.bf16 %v1998, 1065369472
    %v2031 = vadd.bf16 %v2001, 1065369472
    %v2032 = vadd.bf16 %v2004, 1065369472
    %v2033 = vadd.bf16 %v2007, 1065369472
    %v2034 = vadd.bf16 %v2010, 1065369472
    %v2035 = vadd.bf16 %v2013, 1065369472
    %v2036 = vadd.bf16 %v2016, 1065369472
    %v2037 = vadd.bf16 %v2019, 1065369472
    %v2038 = vadd.bf16 %v2022, 1065369472
    %v2039 = vadd.bf16 %v2025, 1065369472
    %v2040 = vadd.bf16 %v2028, 1065369472
    %v2041 = vrcp.bf16.pop %v2029
    %v2042 = vmul.bf16 1065369472, %v2041
    %v2043 = vrcp.bf16.pop %v2030
    %v2044 = vmul.bf16 1065369472, %v2043
    %v2045 = vrcp.bf16.pop %v2031
    %v2046 = vmul.bf16 1065369472, %v2045
    %v2047 = vrcp.bf16.pop %v2032
    %v2048 = vmul.bf16 1065369472, %v2047
    %v2049 = vrcp.bf16.pop %v2033
    %v2050 = vmul.bf16 1065369472, %v2049
    %v2051 = vrcp.bf16.pop %v2034
    %v2052 = vmul.bf16 1065369472, %v2051
    %v2053 = vrcp.bf16.pop %v2035
    %v2054 = vmul.bf16 1065369472, %v2053
    %v2055 = vrcp.bf16.pop %v2036
    %v2056 = vmul.bf16 1065369472, %v2055
    %v2057 = vrcp.bf16.pop %v2037
    %v2058 = vmul.bf16 1065369472, %v2057
    %v2059 = vrcp.bf16.pop %v2038
    %v2060 = vmul.bf16 1065369472, %v2059
    %v2061 = vrcp.bf16.pop %v2039
    %v2062 = vmul.bf16 1065369472, %v2061
    %v2063 = vrcp.bf16.pop %v2040
    %v2064 = vmul.bf16 1065369472, %v2063
    %v2065 = vmul.bf16 %v1969, %v2042
    %v2066 = vmul.bf16 %v1970, %v2044
    %v2067 = vmul.bf16 %v1971, %v2046
    %v2068 = vmul.bf16 %v1972, %v2048
    %v2069 = vmul.bf16 %v1973, %v2050
    %v2070 = vmul.bf16 %v1974, %v2052
    %v2071 = vmul.bf16 %v1975, %v2054
    %v2072 = vmul.bf16 %v1976, %v2056
    %v2073 = vmul.bf16 %v1977, %v2058
    %v2074 = vmul.bf16 %v1978, %v2060
    %v2075 = vmul.bf16 %v1979, %v2062
    %v2076 = vmul.bf16 %v1980, %v2064
    %v2077 = vld [vmem:[%s6] sm:$0xff]
    %v2078 = vld [vmem:[%s6 + $0x8] sm:$0xff]
    %v2079 = vld [vmem:[%s6 + $0x10] sm:$0xff]
    %v2080 = vld [vmem:[%s6 + $0x18] sm:$0xff]
    %v2081 = vld [vmem:[%s6 + $0x20] sm:$0xff]
    %v2082 = vld [vmem:[%s6 + $0x28] sm:$0xff]
    %v2083 = vld [vmem:[%s6 + $0x30] sm:$0xff]
    %v2084 = vld [vmem:[%s6 + $0x38] sm:$0xff]
    %v2085 = vld [vmem:[%s6 + $0x40] sm:$0xff]
    %v2086 = vld [vmem:[%s6 + $0x48] sm:$0xff]
    %v2087 = vld [vmem:[%s6 + $0x50] sm:$0xff]
    %v2088 = vld [vmem:[%s6 + $0x58] sm:$0xff]
    %v2089 = vld [vmem:[%s6 + $0x60] sm:$0xff]
    %v2090 = vld [vmem:[%s6 + $0x68] sm:$0xff]
    %v2091 = vld [vmem:[%s6 + $0x70] sm:$0xff]
    %v2092 = vld [vmem:[%s6 + $0x78] sm:$0xff]
    %v2093 = vld [vmem:[%s7] sm:$0x3]
    %v2095 = vlaneseq
    %v2096 = vshrl.u32 %v2095, 7
    %v2097 = vsub.s32 0, %v2096
    %v2098 = vrot.slane %v2093, %v2097
    %v2099 = vlaneseq
    %v2100 = vshrl.u32 %v2099, 7
    %v2101 = vsub.s32 1, %v2100
    %v2102 = vrot.slane %v2093, %v2101
    %v2121 = vunpack.c.l.b16 %v2077
    %v2122 = vunpack.c.h.b16 %v2077
    %v2123 = vunpack.c.l.b16 %v2078
    %v2124 = vunpack.c.h.b16 %v2078
    %v2125 = vunpack.c.l.b16 %v2079
    %v2126 = vunpack.c.h.b16 %v2079
    %v2127 = vunpack.c.l.b16 %v2080
    %v2128 = vunpack.c.h.b16 %v2080
    %v2129 = vunpack.c.l.b16 %v2081
    %v2130 = vunpack.c.h.b16 %v2081
    %v2131 = vunpack.c.l.b16 %v2082
    %v2132 = vunpack.c.h.b16 %v2082
    %v2133 = vunpack.c.l.b16 %v2083
    %v2134 = vunpack.c.h.b16 %v2083
    %v2135 = vunpack.c.l.b16 %v2084
    %v2136 = vunpack.c.h.b16 %v2084
    %v2137 = vunpack.c.l.b16 %v2085
    %v2138 = vunpack.c.h.b16 %v2085
    %v2139 = vunpack.c.l.b16 %v2086
    %v2140 = vunpack.c.h.b16 %v2086
    %v2141 = vunpack.c.l.b16 %v2087
    %v2142 = vunpack.c.h.b16 %v2087
    %v2143 = vunpack.c.l.b16 %v2088
    %v2144 = vunpack.c.h.b16 %v2088
    %v2145 = vunpack.c.l.b16 %v2089
    %v2146 = vunpack.c.h.b16 %v2089
    %v2147 = vunpack.c.l.b16 %v2090
    %v2148 = vunpack.c.h.b16 %v2090
    %v2149 = vunpack.c.l.b16 %v2091
    %v2150 = vunpack.c.h.b16 %v2091
    %v2151 = vunpack.c.l.b16 %v2092
    %v2152 = vunpack.c.h.b16 %v2092
    %v2153 = vpack.c.b16 %v2123, %v2121
    %v2154 = vpack.c.b16 %v2124, %v2122
    %v2155 = vpack.c.b16 %v2127, %v2125
    %v2156 = vpack.c.b16 %v2128, %v2126
    %v2157 = vpack.c.b16 %v2131, %v2129
    %v2158 = vpack.c.b16 %v2132, %v2130
    %v2159 = vpack.c.b16 %v2135, %v2133
    %v2160 = vpack.c.b16 %v2136, %v2134
    %v2161 = vpack.c.b16 %v2139, %v2137
    %v2162 = vpack.c.b16 %v2140, %v2138
    %v2163 = vpack.c.b16 %v2143, %v2141
    %v2164 = vpack.c.b16 %v2144, %v2142
    %v2165 = vpack.c.b16 %v2147, %v2145
    %v2166 = vpack.c.b16 %v2148, %v2146
    %v2167 = vpack.c.b16 %v2151, %v2149
    %v2168 = vpack.c.b16 %v2152, %v2150
    %2185 = vmatprep.subr.bf16.mxu0 %v2154
    %2186 = vmatpush1.bf16.msra.mxu0 %v2153
    %2187 = vmatprep.subr.bf16.mxu0 %v2156
    %2188 = vmatpush1.bf16.msra.mxu0 %v2155
    %2189 = vmatprep.subr.bf16.mxu0 %v2158
    %2190 = vmatpush1.bf16.msra.mxu0 %v2157
    %2191 = vmatprep.subr.bf16.mxu0 %v2160
    %2192 = vmatpush1.bf16.msra.mxu0 %v2159
    %2193 = vmatprep.subr.bf16.mxu0 %v2162
    %2194 = vmatpush1.bf16.msra.mxu0 %v2161
    %2195 = vmatprep.subr.bf16.mxu0 %v2164
    %2196 = vmatpush1.bf16.msra.mxu0 %v2163
    %2197 = vmatprep.subr.bf16.mxu0 %v2166
    %2198 = vmatpush1.bf16.msra.mxu0 %v2165
    %2199 = vmatprep.subr.bf16.mxu0 %v2168
    %2200 = vmatpush1.bf16.msra.mxu0 %v2167
    %2201 = vmatprep.subr.bf16.mxu0 0
    %2202 = vmatpush1.bf16.msra.mxu0 0
    %2203 = vmatprep.subr.bf16.mxu0 0
    %2204 = vmatpush1.bf16.msra.mxu0 0
    %2205 = vmatprep.subr.bf16.mxu0 0
    %2206 = vmatpush1.bf16.msra.mxu0 0
    %2207 = vmatprep.subr.bf16.mxu0 0
    %2208 = vmatpush1.bf16.msra.mxu0 0
    %2209 = vmatprep.subr.bf16.mxu0 0
    %2210 = vmatpush1.bf16.msra.mxu0 0
    %2211 = vmatprep.subr.bf16.mxu0 0
    %2212 = vmatpush1.bf16.msra.mxu0 0
    %2213 = vmatprep.subr.bf16.mxu0 0
    %2214 = vmatpush1.bf16.msra.mxu0 0
    %2215 = vmatprep.subr.bf16.mxu0 0
    %2216 = vmatpush1.bf16.msra.mxu0 0
    %2217 = vmatprep.mubr.bf16.mxu0 0
    %2218 = vmatmul.mubr.bf16.gmra.mrb[0].mxu0 %v2065
    %v2219 = vpop.f32.mrb[0].mxu0
    %v2220 = vadd.f32 %v2098, %v2219
    %v2221 = vpop.f32.mrb[0].mxu0
    %v2222 = vadd.f32 %v2102, %v2221
    %v2223 = vpop.f32.mrb[0].mxu0
    %v2224 = vadd.f32 %v2098, %v2223
    %v2225 = vpop.f32.mrb[0].mxu0
    %v2226 = vadd.f32 %v2102, %v2225
    %2227 = vmatprep.mubr.bf16.mxu0 0
    %2228 = vmatmul.mubr.bf16.gmra.mrb[0].mxu0 %v2066
    %v2229 = vpop.f32.mrb[0].mxu0
    %v2230 = vadd.f32 %v2098, %v2229
    %v2231 = vpop.f32.mrb[0].mxu0
    %v2232 = vadd.f32 %v2102, %v2231
    %v2233 = vpop.f32.mrb[0].mxu0
    %v2234 = vadd.f32 %v2098, %v2233
    %v2235 = vpop.f32.mrb[0].mxu0
    %v2236 = vadd.f32 %v2102, %v2235
    %2237 = vmatprep.mubr.bf16.mxu0 0
    %2238 = vmatmul.mubr.bf16.gmra.mrb[0].mxu0 %v2067
    %v2239 = vpop.f32.mrb[0].mxu0
    %v2240 = vadd.f32 %v2098, %v2239
    %v2241 = vpop.f32.mrb[0].mxu0
    %v2242 = vadd.f32 %v2102, %v2241
    %v2243 = vpop.f32.mrb[0].mxu0
    %v2244 = vadd.f32 %v2098, %v2243
    %v2245 = vpop.f32.mrb[0].mxu0
    %v2246 = vadd.f32 %v2102, %v2245
    %2247 = vmatprep.mubr.bf16.mxu0 0
    %2248 = vmatmul.mubr.bf16.gmra.mrb[0].mxu0 %v2068
    %v2249 = vpop.f32.mrb[0].mxu0
    %v2250 = vadd.f32 %v2098, %v2249
    %v2251 = vpop.f32.mrb[0].mxu0
    %v2252 = vadd.f32 %v2102, %v2251
    %v2253 = vpop.f32.mrb[0].mxu0
    %v2254 = vadd.f32 %v2098, %v2253
    %v2255 = vpop.f32.mrb[0].mxu0
    %v2256 = vadd.f32 %v2102, %v2255
    %2257 = vmatprep.mubr.bf16.mxu0 0
    %2258 = vmatmul.mubr.bf16.gmra.mrb[0].mxu0 %v2069
    %v2259 = vpop.f32.mrb[0].mxu0
    %v2260 = vadd.f32 %v2098, %v2259
    %v2261 = vpop.f32.mrb[0].mxu0
    %v2262 = vadd.f32 %v2102, %v2261
    %v2263 = vpop.f32.mrb[0].mxu0
    %v2264 = vadd.f32 %v2098, %v2263
    %v2265 = vpop.f32.mrb[0].mxu0
    %v2266 = vadd.f32 %v2102, %v2265
    %2267 = vmatprep.mubr.bf16.mxu0 0
    %2268 = vmatmul.mubr.bf16.gmra.mrb[0].mxu0 %v2070
    %v2269 = vpop.f32.mrb[0].mxu0
    %v2270 = vadd.f32 %v2098, %v2269
    %v2271 = vpop.f32.mrb[0].mxu0
    %v2272 = vadd.f32 %v2102, %v2271
    %v2273 = vpop.f32.mrb[0].mxu0
    %v2274 = vadd.f32 %v2098, %v2273
    %v2275 = vpop.f32.mrb[0].mxu0
    %v2276 = vadd.f32 %v2102, %v2275
    %2277 = vmatprep.mubr.bf16.mxu0 0
    %2278 = vmatmul.mubr.bf16.gmra.mrb[0].mxu0 %v2071
    %v2279 = vpop.f32.mrb[0].mxu0
    %v2280 = vadd.f32 %v2098, %v2279
    %v2281 = vpop.f32.mrb[0].mxu0
    %v2282 = vadd.f32 %v2102, %v2281
    %v2283 = vpop.f32.mrb[0].mxu0
    %v2284 = vadd.f32 %v2098, %v2283
    %v2285 = vpop.f32.mrb[0].mxu0
    %v2286 = vadd.f32 %v2102, %v2285
    %2287 = vmatprep.mubr.bf16.mxu0 0
    %2288 = vmatmul.mubr.bf16.gmra.mrb[0].mxu0 %v2072
    %v2289 = vpop.f32.mrb[0].mxu0
    %v2290 = vadd.f32 %v2098, %v2289
    %v2291 = vpop.f32.mrb[0].mxu0
    %v2292 = vadd.f32 %v2102, %v2291
    %v2293 = vpop.f32.mrb[0].mxu0
    %v2294 = vadd.f32 %v2098, %v2293
    %v2295 = vpop.f32.mrb[0].mxu0
    %v2296 = vadd.f32 %v2102, %v2295
    %2297 = vmatprep.mubr.bf16.mxu0 0
    %2298 = vmatmul.mubr.bf16.gmra.mrb[0].mxu0 %v2073
    %v2299 = vpop.f32.mrb[0].mxu0
    %v2300 = vadd.f32 %v2098, %v2299
    %v2301 = vpop.f32.mrb[0].mxu0
    %v2302 = vadd.f32 %v2102, %v2301
    %v2303 = vpop.f32.mrb[0].mxu0
    %v2304 = vadd.f32 %v2098, %v2303
    %v2305 = vpop.f32.mrb[0].mxu0
    %v2306 = vadd.f32 %v2102, %v2305
    %2307 = vmatprep.mubr.bf16.mxu0 0
    %2308 = vmatmul.mubr.bf16.gmra.mrb[0].mxu0 %v2074
    %v2309 = vpop.f32.mrb[0].mxu0
    %v2310 = vadd.f32 %v2098, %v2309
    %v2311 = vpop.f32.mrb[0].mxu0
    %v2312 = vadd.f32 %v2102, %v2311
    %v2313 = vpop.f32.mrb[0].mxu0
    %v2314 = vadd.f32 %v2098, %v2313
    %v2315 = vpop.f32.mrb[0].mxu0
    %v2316 = vadd.f32 %v2102, %v2315
    %2317 = vmatprep.mubr.bf16.mxu0 0
    %2318 = vmatmul.mubr.bf16.gmra.mrb[0].mxu0 %v2075
    %v2319 = vpop.f32.mrb[0].mxu0
    %v2320 = vadd.f32 %v2098, %v2319
    %v2321 = vpop.f32.mrb[0].mxu0
    %v2322 = vadd.f32 %v2102, %v2321
    %v2323 = vpop.f32.mrb[0].mxu0
    %v2324 = vadd.f32 %v2098, %v2323
    %v2325 = vpop.f32.mrb[0].mxu0
    %v2326 = vadd.f32 %v2102, %v2325
    %2327 = vmatprep.mubr.bf16.mxu0 0
    %2328 = vmatmul.mubr.bf16.gmra.mrb[0].mxu0 %v2076
    %v2329 = vpop.f32.mrb[0].mxu0
    %v2330 = vadd.f32 %v2098, %v2329
    %v2331 = vpop.f32.mrb[0].mxu0
    %v2332 = vadd.f32 %v2102, %v2331
    %v2333 = vpop.f32.mrb[0].mxu0
    %v2334 = vadd.f32 %v2098, %v2333
    %v2335 = vpop.f32.mrb[0].mxu0
    %v2336 = vadd.f32 %v2102, %v2335
    %2337 = vdwg.mxu0
    %v2338 = vadd.f32 %v440, %v2220
    %v2339 = vadd.f32 %v441, %v2224
    %v2340 = vadd.f32 %v442, %v2230
    %v2341 = vadd.f32 %v443, %v2234
    %v2342 = vadd.f32 %v444, %v2240
    %v2343 = vadd.f32 %v445, %v2244
    %v2344 = vadd.f32 %v446, %v2250
    %v2345 = vadd.f32 %v447, %v2254
    %v2346 = vadd.f32 %v448, %v2260
    %v2347 = vadd.f32 %v449, %v2264
    %v2348 = vadd.f32 %v450, %v2270
    %v2349 = vadd.f32 %v451, %v2274
    %v2350 = vadd.f32 %v452, %v2280
    %v2351 = vadd.f32 %v453, %v2284
    %v2352 = vadd.f32 %v454, %v2290
    %v2353 = vadd.f32 %v455, %v2294
    %v2354 = vadd.f32 %v456, %v2300
    %v2355 = vadd.f32 %v457, %v2304
    %v2356 = vadd.f32 %v458, %v2310
    %v2357 = vadd.f32 %v459, %v2314
    %v2358 = vadd.f32 %v460, %v2320
    %v2359 = vadd.f32 %v461, %v2324
    %v2360 = vadd.f32 %v462, %v2330
    %v2361 = vadd.f32 %v463, %v2334
    %v2362 = vmul.f32 %v2338, %v85
    %v2363 = vmul.f32 %v2339, %v90
    %v2364 = vmul.f32 %v2340, %v95
    %v2365 = vmul.f32 %v2341, %v100
    %v2366 = vmul.f32 %v2342, %v105
    %v2367 = vmul.f32 %v2343, %v110
    %v2368 = vmul.f32 %v2344, %v115
    %v2369 = vmul.f32 %v2345, %v120
    %v2370 = vmul.f32 %v2346, %v125
    %v2371 = vmul.f32 %v2347, %v130
    %v2372 = vmul.f32 %v2348, %v135
    %v2373 = vmul.f32 %v2349, %v140
    %v2374 = vmul.f32 %v2350, %v145
    %v2375 = vmul.f32 %v2351, %v150
    %v2376 = vmul.f32 %v2352, %v155
    %v2377 = vmul.f32 %v2353, %v160
    %v2378 = vmul.f32 %v2354, %v165
    %v2379 = vmul.f32 %v2355, %v170
    %v2380 = vmul.f32 %v2356, %v175
    %v2381 = vmul.f32 %v2357, %v180
    %v2382 = vmul.f32 %v2358, %v185
    %v2383 = vmul.f32 %v2359, %v190
    %v2384 = vmul.f32 %v2360, %v195
    %v2385 = vmul.f32 %v2361, %v200
    %v2386 = vadd.f32 %v2222, 0.0
    %v2387 = vadd.f32 %v2226, 0.0
    %v2388 = vadd.f32 %v2232, 0.0
    %v2389 = vadd.f32 %v2236, 0.0
    %v2390 = vadd.f32 %v2242, 0.0
    %v2391 = vadd.f32 %v2246, 0.0
    %v2392 = vadd.f32 %v2252, 0.0
    %v2393 = vadd.f32 %v2256, 0.0
    %v2394 = vadd.f32 %v2262, 0.0
    %v2395 = vadd.f32 %v2266, 0.0
    %v2396 = vadd.f32 %v2272, 0.0
    %v2397 = vadd.f32 %v2276, 0.0
    %v2398 = vadd.f32 %v2282, 0.0
    %v2399 = vadd.f32 %v2286, 0.0
    %v2400 = vadd.f32 %v2292, 0.0
    %v2401 = vadd.f32 %v2296, 0.0
    %v2402 = vadd.f32 %v2302, 0.0
    %v2403 = vadd.f32 %v2306, 0.0
    %v2404 = vadd.f32 %v2312, 0.0
    %v2405 = vadd.f32 %v2316, 0.0
    %v2406 = vadd.f32 %v2322, 0.0
    %v2407 = vadd.f32 %v2326, 0.0
    %v2408 = vadd.f32 %v2332, 0.0
    %v2409 = vadd.f32 %v2336, 0.0
    %v2410 = vpack.c.bf16 %v2363, %v2362
    %v2411 = vpack.c.bf16 %v2365, %v2364
    %v2412 = vpack.c.bf16 %v2367, %v2366
    %v2413 = vpack.c.bf16 %v2369, %v2368
    %v2414 = vpack.c.bf16 %v2371, %v2370
    %v2415 = vpack.c.bf16 %v2373, %v2372
    %v2416 = vpack.c.bf16 %v2375, %v2374
    %v2417 = vpack.c.bf16 %v2377, %v2376
    %v2418 = vpack.c.bf16 %v2379, %v2378
    %v2419 = vpack.c.bf16 %v2381, %v2380
    %v2420 = vpack.c.bf16 %v2383, %v2382
    %v2421 = vpack.c.bf16 %v2385, %v2384
    %2422 = vst [vmem:[#allocation2 + $0x8] sm:$0xff] %v2410
    %2423 = vst [vmem:[#allocation2 + $0x10] sm:$0xff] %v2411
    %2424 = vst [vmem:[#allocation2 + $0x18] sm:$0xff] %v2412
    %2425 = vst [vmem:[#allocation2 + $0x20] sm:$0xff] %v2413
    %2426 = vst [vmem:[#allocation2 + $0x28] sm:$0xff] %v2414
    %2427 = vst [vmem:[#allocation2 + $0x30] sm:$0xff] %v2415
    %2428 = vst [vmem:[#allocation2 + $0x38] sm:$0xff] %v2416
    %2429 = vst [vmem:[#allocation2 + $0x40] sm:$0xff] %v2417
    %2430 = vst [vmem:[#allocation2 + $0x48] sm:$0xff] %v2418
    %2431 = vst [vmem:[#allocation2 + $0x50] sm:$0xff] %v2419
    %2432 = vst [vmem:[#allocation2 + $0x58] sm:$0xff] %v2420
    %2433 = vst [vmem:[#allocation2 + $0x60] sm:$0xff] %v2421
    %v2434 = vld [vmem:[#allocation2] sm:$0xc0]
    %v2435 = vld [vmem:[#allocation2 + $0x8] sm:$0xff]
    %v2436 = vld [vmem:[#allocation2 + $0x10] sm:$0xff]
    %v2437 = vld [vmem:[#allocation2 + $0x18] sm:$0xff]
    %v2438 = vld [vmem:[#allocation2 + $0x20] sm:$0xff]
    %v2439 = vld [vmem:[#allocation2 + $0x28] sm:$0xff]
    %v2440 = vld [vmem:[#allocation2 + $0x30] sm:$0xff]
    %v2441 = vld [vmem:[#allocation2 + $0x38] sm:$0xff]
    %v2442 = vld [vmem:[#allocation2 + $0x40] sm:$0xff]
    %v2443 = vld [vmem:[#allocation2 + $0x48] sm:$0xff]
    %v2444 = vld [vmem:[#allocation2 + $0x50] sm:$0xff]
    %v2445 = vld [vmem:[#allocation2 + $0x58] sm:$0xff]
    %v2446 = vld [vmem:[#allocation2 + $0x60] sm:$0x3f]
    %v2447 = vld [vmem:[#allocation2] sm:$0x80]
    %v2448 = vld [vmem:[#allocation2 + $0x60] sm:$0x7f]
    %v2449 = vld [vmem:[#allocation2 + $0x60] sm:$0xff]
    %v2450 = vld [vmem:[#allocation2 + $0x8] sm:$0xfe]
    %v2451 = vld [vmem:[#allocation2 + $0x10] sm:$0xff]
    %v2452 = vld [vmem:[#allocation2 + $0x18] sm:$0xff]
    %v2453 = vld [vmem:[#allocation2 + $0x20] sm:$0xff]
    %v2454 = vld [vmem:[#allocation2 + $0x28] sm:$0xff]
    %v2455 = vld [vmem:[#allocation2 + $0x30] sm:$0xff]
    %v2456 = vld [vmem:[#allocation2 + $0x38] sm:$0xff]
    %v2457 = vld [vmem:[#allocation2 + $0x40] sm:$0xff]
    %v2458 = vld [vmem:[#allocation2 + $0x48] sm:$0xff]
    %v2459 = vld [vmem:[#allocation2 + $0x50] sm:$0xff]
    %v2460 = vld [vmem:[#allocation2 + $0x58] sm:$0xff]
    %v2461 = vld [vmem:[#allocation2 + $0x60] sm:$0xff]
    %v2462 = vld [vmem:[#allocation2 + $0x68] sm:$0x1]
    %v2463 = vld [vmem:[#allocation2 + $0x8] sm:$0xfc]
    %v2464 = vld [vmem:[#allocation2 + $0x68] sm:$0x3]
    %v2478 = vrot.slane %v2447, 1
    %v2479 = vrot.slane %v2435, 1
    %v2480 = vsel %vm630, %v2478, %v2479
    %v2481 = vrot.slane %v2436, 1
    %v2482 = vsel %vm630, %v2479, %v2481
    %v2483 = vrot.slane %v2437, 1
    %v2484 = vsel %vm630, %v2481, %v2483
    %v2485 = vrot.slane %v2438, 1
    %v2486 = vsel %vm630, %v2483, %v2485
    %v2487 = vrot.slane %v2439, 1
    %v2488 = vsel %vm630, %v2485, %v2487
    %v2489 = vrot.slane %v2440, 1
    %v2490 = vsel %vm630, %v2487, %v2489
    %v2491 = vrot.slane %v2441, 1
    %v2492 = vsel %vm630, %v2489, %v2491
    %v2493 = vrot.slane %v2442, 1
    %v2494 = vsel %vm630, %v2491, %v2493
    %v2495 = vrot.slane %v2443, 1
    %v2496 = vsel %vm630, %v2493, %v2495
    %v2497 = vrot.slane %v2444, 1
    %v2498 = vsel %vm630, %v2495, %v2497
    %v2499 = vrot.slane %v2445, 1
    %v2500 = vsel %vm630, %v2497, %v2499
    %v2501 = vrot.slane %v2448, 1
    %v2502 = vsel %vm630, %v2499, %v2501
    %v2504 = vrot.slane %v2435, 2
    %v2505 = vrot.slane %v2436, 2
    %v2506 = vsel %vm780, %v2504, %v2505
    %v2507 = vrot.slane %v2437, 2
    %v2508 = vsel %vm780, %v2505, %v2507
    %v2509 = vrot.slane %v2438, 2
    %v2510 = vsel %vm780, %v2507, %v2509
    %v2511 = vrot.slane %v2439, 2
    %v2512 = vsel %vm780, %v2509, %v2511
    %v2513 = vrot.slane %v2440, 2
    %v2514 = vsel %vm780, %v2511, %v2513
    %v2515 = vrot.slane %v2441, 2
    %v2516 = vsel %vm780, %v2513, %v2515
    %v2517 = vrot.slane %v2442, 2
    %v2518 = vsel %vm780, %v2515, %v2517
    %v2519 = vrot.slane %v2443, 2
    %v2520 = vsel %vm780, %v2517, %v2519
    %v2521 = vrot.slane %v2444, 2
    %v2522 = vsel %vm780, %v2519, %v2521
    %v2523 = vrot.slane %v2445, 2
    %v2524 = vsel %vm780, %v2521, %v2523
    %v2525 = vrot.slane %v2449, 2
    %v2526 = vsel %vm780, %v2523, %v2525
    %vm2540 = vcmask 1044480
    %v2541 = vrot.slane %v2450, 3
    %v2542 = vrot.slane %v2451, 3
    %v2543 = vsel %vm2540, %v2541, %v2542
    %v2544 = vrot.slane %v2452, 3
    %v2545 = vsel %vm2540, %v2542, %v2544
    %v2546 = vrot.slane %v2453, 3
    %v2547 = vsel %vm2540, %v2544, %v2546
    %v2548 = vrot.slane %v2454, 3
    %v2549 = vsel %vm2540, %v2546, %v2548
    %v2550 = vrot.slane %v2455, 3
    %v2551 = vsel %vm2540, %v2548, %v2550
    %v2552 = vrot.slane %v2456, 3
    %v2553 = vsel %vm2540, %v2550, %v2552
    %v2554 = vrot.slane %v2457, 3
    %v2555 = vsel %vm2540, %v2552, %v2554
    %v2556 = vrot.slane %v2458, 3
    %v2557 = vsel %vm2540, %v2554, %v2556
    %v2558 = vrot.slane %v2459, 3
    %v2559 = vsel %vm2540, %v2556, %v2558
    %v2560 = vrot.slane %v2460, 3
    %v2561 = vsel %vm2540, %v2558, %v2560
    %v2562 = vrot.slane %v2461, 3
    %v2563 = vsel %vm2540, %v2560, %v2562
    %v2564 = vrot.slane %v2462, 3
    %v2565 = vsel %vm2540, %v2562, %v2564
    %vm2568 = vcmask 1043456
    %v2569 = vrot.slane %v2463, 4
    %v2570 = vrot.slane %v2451, 4
    %v2571 = vsel %vm2568, %v2569, %v2570
    %v2572 = vrot.slane %v2452, 4
    %v2573 = vsel %vm2568, %v2570, %v2572
    %v2574 = vrot.slane %v2453, 4
    %v2575 = vsel %vm2568, %v2572, %v2574
    %v2576 = vrot.slane %v2454, 4
    %v2577 = vsel %vm2568, %v2574, %v2576
    %v2578 = vrot.slane %v2455, 4
    %v2579 = vsel %vm2568, %v2576, %v2578
    %v2580 = vrot.slane %v2456, 4
    %v2581 = vsel %vm2568, %v2578, %v2580
    %v2582 = vrot.slane %v2457, 4
    %v2583 = vsel %vm2568, %v2580, %v2582
    %v2584 = vrot.slane %v2458, 4
    %v2585 = vsel %vm2568, %v2582, %v2584
    %v2586 = vrot.slane %v2459, 4
    %v2587 = vsel %vm2568, %v2584, %v2586
    %v2588 = vrot.slane %v2460, 4
    %v2589 = vsel %vm2568, %v2586, %v2588
    %v2590 = vrot.slane %v2461, 4
    %v2591 = vsel %vm2568, %v2588, %v2590
    %v2592 = vrot.slane %v2464, 4
    %v2593 = vsel %vm2568, %v2590, %v2592
    %s2594 = scalar_lea.vmem [#allocation3], 640
    %v2595 = vld [vmem:[%s2594] sm:$0xff]
    %v2596 = vld [vmem:[%s2594 + $0x8] sm:$0xff]
    %v2597 = vld [vmem:[%s2594 + $0x10] sm:$0xff]
    %v2598 = vld [vmem:[%s2594 + $0x18] sm:$0xff]
    %v2599 = vld [vmem:[%s2594 + $0x20] sm:$0xff]
    %v2600 = vld [vmem:[%s2594 + $0x28] sm:$0xff]
    %v2601 = vld [vmem:[%s2594 + $0x30] sm:$0xff]
    %v2602 = vld [vmem:[%s2594 + $0x38] sm:$0xff]
    %v2603 = vld [vmem:[%s2594 + $0x40] sm:$0xff]
    %v2604 = vld [vmem:[%s2594 + $0x48] sm:$0xff]
    %v2605 = vld [vmem:[%s2594 + $0x50] sm:$0xff]
    %v2606 = vld [vmem:[%s2594 + $0x58] sm:$0xff]
    %v2607 = vld [vmem:[%s2594 + $0x60] sm:$0xff]
    %v2608 = vld [vmem:[%s2594 + $0x68] sm:$0xff]
    %v2609 = vld [vmem:[%s2594 + $0x70] sm:$0xff]
    %v2610 = vld [vmem:[%s2594 + $0x78] sm:$0xff]
    %v2611 = vld [vmem:[%s2594 + $0x80] sm:$0xff]
    %v2612 = vld [vmem:[%s2594 + $0x88] sm:$0xff]
    %v2613 = vld [vmem:[%s2594 + $0x90] sm:$0xff]
    %v2614 = vld [vmem:[%s2594 + $0x98] sm:$0xff]
    %v2615 = vld [vmem:[%s2594 + $0xa0] sm:$0xff]
    %v2616 = vld [vmem:[%s2594 + $0xa8] sm:$0xff]
    %v2617 = vld [vmem:[%s2594 + $0xb0] sm:$0xff]
    %v2618 = vld [vmem:[%s2594 + $0xb8] sm:$0xff]
    %v2619 = vld [vmem:[%s2594 + $0xc0] sm:$0xff]
    %v2620 = vld [vmem:[%s2594 + $0xc8] sm:$0xff]
    %v2621 = vld [vmem:[%s2594 + $0xd0] sm:$0xff]
    %v2622 = vld [vmem:[%s2594 + $0xd8] sm:$0xff]
    %v2623 = vld [vmem:[%s2594 + $0xe0] sm:$0xff]
    %v2624 = vld [vmem:[%s2594 + $0xe8] sm:$0xff]
    %v2625 = vld [vmem:[%s2594 + $0xf0] sm:$0xff]
    %v2626 = vld [vmem:[%s2594 + $0xf8] sm:$0xff]
    %v2627 = vld [vmem:[%s2594 + $0x100] sm:$0xff]
    %v2628 = vld [vmem:[%s2594 + $0x108] sm:$0xff]
    %v2629 = vld [vmem:[%s2594 + $0x110] sm:$0xff]
    %v2630 = vld [vmem:[%s2594 + $0x118] sm:$0xff]
    %v2631 = vld [vmem:[%s2594 + $0x120] sm:$0xff]
    %v2632 = vld [vmem:[%s2594 + $0x128] sm:$0xff]
    %v2633 = vld [vmem:[%s2594 + $0x130] sm:$0xff]
    %v2634 = vld [vmem:[%s2594 + $0x138] sm:$0xff]
    %v2635 = vld [vmem:[%s2594 + $0x140] sm:$0xff]
    %v2636 = vld [vmem:[%s2594 + $0x148] sm:$0xff]
    %v2637 = vld [vmem:[%s2594 + $0x150] sm:$0xff]
    %v2638 = vld [vmem:[%s2594 + $0x158] sm:$0xff]
    %v2639 = vld [vmem:[%s2594 + $0x160] sm:$0xff]
    %v2640 = vld [vmem:[%s2594 + $0x168] sm:$0xff]
    %v2641 = vld [vmem:[%s2594 + $0x170] sm:$0xff]
    %v2642 = vld [vmem:[%s2594 + $0x178] sm:$0xff]
    %v2643 = vld [vmem:[%s2594 + $0x180] sm:$0xff]
    %v2644 = vld [vmem:[%s2594 + $0x188] sm:$0xff]
    %v2645 = vld [vmem:[%s2594 + $0x190] sm:$0xff]
    %v2646 = vld [vmem:[%s2594 + $0x198] sm:$0xff]
    %v2647 = vld [vmem:[%s2594 + $0x1a0] sm:$0xff]
    %v2648 = vld [vmem:[%s2594 + $0x1a8] sm:$0xff]
    %v2649 = vld [vmem:[%s2594 + $0x1b0] sm:$0xff]
    %v2650 = vld [vmem:[%s2594 + $0x1b8] sm:$0xff]
    %v2651 = vld [vmem:[%s2594 + $0x1c0] sm:$0xff]
    %v2652 = vld [vmem:[%s2594 + $0x1c8] sm:$0xff]
    %v2653 = vld [vmem:[%s2594 + $0x1d0] sm:$0xff]
    %v2654 = vld [vmem:[%s2594 + $0x1d8] sm:$0xff]
    %v2655 = vld [vmem:[%s2594 + $0x1e0] sm:$0xff]
    %v2656 = vld [vmem:[%s2594 + $0x1e8] sm:$0xff]
    %v2657 = vld [vmem:[%s2594 + $0x1f0] sm:$0xff]
    %v2658 = vld [vmem:[%s2594 + $0x1f8] sm:$0xff]
    %v2659 = vld [vmem:[%s2594 + $0x200] sm:$0xff]
    %v2660 = vld [vmem:[%s2594 + $0x208] sm:$0xff]
    %v2661 = vld [vmem:[%s2594 + $0x210] sm:$0xff]
    %v2662 = vld [vmem:[%s2594 + $0x218] sm:$0xff]
    %v2663 = vld [vmem:[%s2594 + $0x220] sm:$0xff]
    %v2664 = vld [vmem:[%s2594 + $0x228] sm:$0xff]
    %v2665 = vld [vmem:[%s2594 + $0x230] sm:$0xff]
    %v2666 = vld [vmem:[%s2594 + $0x238] sm:$0xff]
    %v2667 = vld [vmem:[%s2594 + $0x240] sm:$0xff]
    %v2668 = vld [vmem:[%s2594 + $0x248] sm:$0xff]
    %v2669 = vld [vmem:[%s2594 + $0x250] sm:$0xff]
    %v2670 = vld [vmem:[%s2594 + $0x258] sm:$0xff]
    %v2671 = vld [vmem:[%s2594 + $0x260] sm:$0xff]
    %v2672 = vld [vmem:[%s2594 + $0x268] sm:$0xff]
    %v2673 = vld [vmem:[%s2594 + $0x270] sm:$0xff]
    %v2674 = vld [vmem:[%s2594 + $0x278] sm:$0xff]
    %s2675 = scalar_lea.vmem %s5, 2
    %v2676 = vld [vmem:[%s2675] sm:$0x3]
    %v2678 = vlaneseq
    %v2679 = vshrl.u32 %v2678, 7
    %v2680 = vsub.s32 0, %v2679
    %v2681 = vrot.slane %v2676, %v2680
    %v2682 = vlaneseq
    %v2683 = vshrl.u32 %v2682, 7
    %v2684 = vsub.s32 1, %v2683
    %v2685 = vrot.slane %v2676, %v2684
    %vm2690 = vcmask 1041408
    %v2691 = vrot.slane %v2434, 6
    %v2692 = vrot.slane %v2435, 6
    %v2693 = vsel %vm2690, %v2691, %v2692
    %v2694 = vrot.slane %v2480, 6
    %v2695 = vrot.slane %v2482, 6
    %v2696 = vsel %vm2690, %v2694, %v2695
    %v2697 = vrot.slane %v2504, 6
    %v2698 = vrot.slane %v2506, 6
    %v2699 = vsel %vm2690, %v2697, %v2698
    %v2700 = vrot.slane %v2541, 6
    %v2701 = vrot.slane %v2543, 6
    %v2702 = vsel %vm2690, %v2700, %v2701
    %v2703 = vrot.slane %v2569, 6
    %v2704 = vrot.slane %v2571, 6
    %v2705 = vsel %vm2690, %v2703, %v2704
    %v2706 = vrot.slane %v2436, 6
    %v2707 = vsel %vm2690, %v2692, %v2706
    %v2708 = vrot.slane %v2484, 6
    %v2709 = vsel %vm2690, %v2695, %v2708
    %v2710 = vrot.slane %v2508, 6
    %v2711 = vsel %vm2690, %v2698, %v2710
    %v2712 = vrot.slane %v2545, 6
    %v2713 = vsel %vm2690, %v2701, %v2712
    %v2714 = vrot.slane %v2573, 6
    %v2715 = vsel %vm2690, %v2704, %v2714
    %v2716 = vrot.slane %v2437, 6
    %v2717 = vsel %vm2690, %v2706, %v2716
    %v2718 = vrot.slane %v2486, 6
    %v2719 = vsel %vm2690, %v2708, %v2718
    %v2720 = vrot.slane %v2510, 6
    %v2721 = vsel %vm2690, %v2710, %v2720
    %v2722 = vrot.slane %v2547, 6
    %v2723 = vsel %vm2690, %v2712, %v2722
    %v2724 = vrot.slane %v2575, 6
    %v2725 = vsel %vm2690, %v2714, %v2724
    %v2726 = vrot.slane %v2438, 6
    %v2727 = vsel %vm2690, %v2716, %v2726
    %v2728 = vrot.slane %v2488, 6
    %v2729 = vsel %vm2690, %v2718, %v2728
    %v2730 = vrot.slane %v2512, 6
    %v2731 = vsel %vm2690, %v2720, %v2730
    %v2732 = vrot.slane %v2549, 6
    %v2733 = vsel %vm2690, %v2722, %v2732
    %v2734 = vrot.slane %v2577, 6
    %v2735 = vsel %vm2690, %v2724, %v2734
    %v2736 = vrot.slane %v2439, 6
    %v2737 = vsel %vm2690, %v2726, %v2736
    %v2738 = vrot.slane %v2490, 6
    %v2739 = vsel %vm2690, %v2728, %v2738
    %v2740 = vrot.slane %v2514, 6
    %v2741 = vsel %vm2690, %v2730, %v2740
    %v2742 = vrot.slane %v2551, 6
    %v2743 = vsel %vm2690, %v2732, %v2742
    %v2744 = vrot.slane %v2579, 6
    %v2745 = vsel %vm2690, %v2734, %v2744
    %v2746 = vrot.slane %v2440, 6
    %v2747 = vsel %vm2690, %v2736, %v2746
    %v2748 = vrot.slane %v2492, 6
    %v2749 = vsel %vm2690, %v2738, %v2748
    %v2750 = vrot.slane %v2516, 6
    %v2751 = vsel %vm2690, %v2740, %v2750
    %v2752 = vrot.slane %v2553, 6
    %v2753 = vsel %vm2690, %v2742, %v2752
    %v2754 = vrot.slane %v2581, 6
    %v2755 = vsel %vm2690, %v2744, %v2754
    %v2756 = vrot.slane %v2441, 6
    %v2757 = vsel %vm2690, %v2746, %v2756
    %v2758 = vrot.slane %v2494, 6
    %v2759 = vsel %vm2690, %v2748, %v2758
    %v2760 = vrot.slane %v2518, 6
    %v2761 = vsel %vm2690, %v2750, %v2760
    %v2762 = vrot.slane %v2555, 6
    %v2763 = vsel %vm2690, %v2752, %v2762
    %v2764 = vrot.slane %v2583, 6
    %v2765 = vsel %vm2690, %v2754, %v2764
    %v2766 = vrot.slane %v2442, 6
    %v2767 = vsel %vm2690, %v2756, %v2766
    %v2768 = vrot.slane %v2496, 6
    %v2769 = vsel %vm2690, %v2758, %v2768
    %v2770 = vrot.slane %v2520, 6
    %v2771 = vsel %vm2690, %v2760, %v2770
    %v2772 = vrot.slane %v2557, 6
    %v2773 = vsel %vm2690, %v2762, %v2772
    %v2774 = vrot.slane %v2585, 6
    %v2775 = vsel %vm2690, %v2764, %v2774
    %v2776 = vrot.slane %v2443, 6
    %v2777 = vsel %vm2690, %v2766, %v2776
    %v2778 = vrot.slane %v2498, 6
    %v2779 = vsel %vm2690, %v2768, %v2778
    %v2780 = vrot.slane %v2522, 6
    %v2781 = vsel %vm2690, %v2770, %v2780
    %v2782 = vrot.slane %v2559, 6
    %v2783 = vsel %vm2690, %v2772, %v2782
    %v2784 = vrot.slane %v2587, 6
    %v2785 = vsel %vm2690, %v2774, %v2784
    %v2786 = vrot.slane %v2444, 6
    %v2787 = vsel %vm2690, %v2776, %v2786
    %v2788 = vrot.slane %v2500, 6
    %v2789 = vsel %vm2690, %v2778, %v2788
    %v2790 = vrot.slane %v2524, 6
    %v2791 = vsel %vm2690, %v2780, %v2790
    %v2792 = vrot.slane %v2561, 6
    %v2793 = vsel %vm2690, %v2782, %v2792
    %v2794 = vrot.slane %v2589, 6
    %v2795 = vsel %vm2690, %v2784, %v2794
    %v2796 = vrot.slane %v2445, 6
    %v2797 = vsel %vm2690, %v2786, %v2796
    %v2798 = vrot.slane %v2502, 6
    %v2799 = vsel %vm2690, %v2788, %v2798
    %v2800 = vrot.slane %v2526, 6
    %v2801 = vsel %vm2690, %v2790, %v2800
    %v2802 = vrot.slane %v2563, 6
    %v2803 = vsel %vm2690, %v2792, %v2802
    %v2804 = vrot.slane %v2591, 6
    %v2805 = vsel %vm2690, %v2794, %v2804
    %v2806 = vrot.slane %v2446, 6
    %v2807 = vsel %vm2690, %v2796, %v2806
    %v2808 = vrot.slane %v2501, 6
    %v2809 = vsel %vm2690, %v2798, %v2808
    %v2810 = vrot.slane %v2525, 6
    %v2811 = vsel %vm2690, %v2800, %v2810
    %v2812 = vrot.slane %v2565, 6
    %v2813 = vsel %vm2690, %v2802, %v2812
    %v2814 = vrot.slane %v2593, 6
    %v2815 = vsel %vm2690, %v2804, %v2814
    %v2956 = vunpack.c.l.b16 %v2595
    %v2957 = vunpack.c.h.b16 %v2595
    %v2958 = vunpack.c.l.b16 %v2596
    %v2959 = vunpack.c.h.b16 %v2596
    %v2960 = vunpack.c.l.b16 %v2597
    %v2961 = vunpack.c.h.b16 %v2597
    %v2962 = vunpack.c.l.b16 %v2598
    %v2963 = vunpack.c.h.b16 %v2598
    %v2964 = vunpack.c.l.b16 %v2599
    %v2965 = vunpack.c.h.b16 %v2599
    %v2966 = vunpack.c.l.b16 %v2600
    %v2967 = vunpack.c.h.b16 %v2600
    %v2968 = vunpack.c.l.b16 %v2601
    %v2969 = vunpack.c.h.b16 %v2601
    %v2970 = vunpack.c.l.b16 %v2602
    %v2971 = vunpack.c.h.b16 %v2602
    %v2972 = vunpack.c.l.b16 %v2603
    %v2973 = vunpack.c.h.b16 %v2603
    %v2974 = vunpack.c.l.b16 %v2604
    %v2975 = vunpack.c.h.b16 %v2604
    %v2976 = vunpack.c.l.b16 %v2605
    %v2977 = vunpack.c.h.b16 %v2605
    %v2978 = vunpack.c.l.b16 %v2606
    %v2979 = vunpack.c.h.b16 %v2606
    %v2980 = vunpack.c.l.b16 %v2607
    %v2981 = vunpack.c.h.b16 %v2607
    %v2982 = vunpack.c.l.b16 %v2608
    %v2983 = vunpack.c.h.b16 %v2608
    %v2984 = vunpack.c.l.b16 %v2609
    %v2985 = vunpack.c.h.b16 %v2609
    %v2986 = vunpack.c.l.b16 %v2610
    %v2987 = vunpack.c.h.b16 %v2610
    %v2988 = vunpack.c.l.b16 %v2611
    %v2989 = vunpack.c.h.b16 %v2611
    %v2990 = vunpack.c.l.b16 %v2612
    %v2991 = vunpack.c.h.b16 %v2612
    %v2992 = vunpack.c.l.b16 %v2613
    %v2993 = vunpack.c.h.b16 %v2613
    %v2994 = vunpack.c.l.b16 %v2614
    %v2995 = vunpack.c.h.b16 %v2614
    %v2996 = vunpack.c.l.b16 %v2615
    %v2997 = vunpack.c.h.b16 %v2615
    %v2998 = vunpack.c.l.b16 %v2616
    %v2999 = vunpack.c.h.b16 %v2616
    %v3000 = vunpack.c.l.b16 %v2617
    %v3001 = vunpack.c.h.b16 %v2617
    %v3002 = vunpack.c.l.b16 %v2618
    %v3003 = vunpack.c.h.b16 %v2618
    %v3004 = vunpack.c.l.b16 %v2619
    %v3005 = vunpack.c.h.b16 %v2619
    %v3006 = vunpack.c.l.b16 %v2620
    %v3007 = vunpack.c.h.b16 %v2620
    %v3008 = vunpack.c.l.b16 %v2621
    %v3009 = vunpack.c.h.b16 %v2621
    %v3010 = vunpack.c.l.b16 %v2622
    %v3011 = vunpack.c.h.b16 %v2622
    %v3012 = vunpack.c.l.b16 %v2623
    %v3013 = vunpack.c.h.b16 %v2623
    %v3014 = vunpack.c.l.b16 %v2624
    %v3015 = vunpack.c.h.b16 %v2624
    %v3016 = vunpack.c.l.b16 %v2625
    %v3017 = vunpack.c.h.b16 %v2625
    %v3018 = vunpack.c.l.b16 %v2626
    %v3019 = vunpack.c.h.b16 %v2626
    %v3020 = vunpack.c.l.b16 %v2627
    %v3021 = vunpack.c.h.b16 %v2627
    %v3022 = vunpack.c.l.b16 %v2628
    %v3023 = vunpack.c.h.b16 %v2628
    %v3024 = vunpack.c.l.b16 %v2629
    %v3025 = vunpack.c.h.b16 %v2629
    %v3026 = vunpack.c.l.b16 %v2630
    %v3027 = vunpack.c.h.b16 %v2630
    %v3028 = vunpack.c.l.b16 %v2631
    %v3029 = vunpack.c.h.b16 %v2631
    %v3030 = vunpack.c.l.b16 %v2632
    %v3031 = vunpack.c.h.b16 %v2632
    %v3032 = vunpack.c.l.b16 %v2633
    %v3033 = vunpack.c.h.b16 %v2633
    %v3034 = vunpack.c.l.b16 %v2634
    %v3035 = vunpack.c.h.b16 %v2634
    %v3036 = vunpack.c.l.b16 %v2635
    %v3037 = vunpack.c.h.b16 %v2635
    %v3038 = vunpack.c.l.b16 %v2636
    %v3039 = vunpack.c.h.b16 %v2636
    %v3040 = vunpack.c.l.b16 %v2637
    %v3041 = vunpack.c.h.b16 %v2637
    %v3042 = vunpack.c.l.b16 %v2638
    %v3043 = vunpack.c.h.b16 %v2638
    %v3044 = vunpack.c.l.b16 %v2639
    %v3045 = vunpack.c.h.b16 %v2639
    %v3046 = vunpack.c.l.b16 %v2640
    %v3047 = vunpack.c.h.b16 %v2640
    %v3048 = vunpack.c.l.b16 %v2641
    %v3049 = vunpack.c.h.b16 %v2641
    %v3050 = vunpack.c.l.b16 %v2642
    %v3051 = vunpack.c.h.b16 %v2642
    %v3052 = vunpack.c.l.b16 %v2643
    %v3053 = vunpack.c.h.b16 %v2643
    %v3054 = vunpack.c.l.b16 %v2644
    %v3055 = vunpack.c.h.b16 %v2644
    %v3056 = vunpack.c.l.b16 %v2645
    %v3057 = vunpack.c.h.b16 %v2645
    %v3058 = vunpack.c.l.b16 %v2646
    %v3059 = vunpack.c.h.b16 %v2646
    %v3060 = vunpack.c.l.b16 %v2647
    %v3061 = vunpack.c.h.b16 %v2647
    %v3062 = vunpack.c.l.b16 %v2648
    %v3063 = vunpack.c.h.b16 %v2648
    %v3064 = vunpack.c.l.b16 %v2649
    %v3065 = vunpack.c.h.b16 %v2649
    %v3066 = vunpack.c.l.b16 %v2650
    %v3067 = vunpack.c.h.b16 %v2650
    %v3068 = vunpack.c.l.b16 %v2651
    %v3069 = vunpack.c.h.b16 %v2651
    %v3070 = vunpack.c.l.b16 %v2652
    %v3071 = vunpack.c.h.b16 %v2652
    %v3072 = vunpack.c.l.b16 %v2653
    %v3073 = vunpack.c.h.b16 %v2653
    %v3074 = vunpack.c.l.b16 %v2654
    %v3075 = vunpack.c.h.b16 %v2654
    %v3076 = vunpack.c.l.b16 %v2655
    %v3077 = vunpack.c.h.b16 %v2655
    %v3078 = vunpack.c.l.b16 %v2656
    %v3079 = vunpack.c.h.b16 %v2656
    %v3080 = vunpack.c.l.b16 %v2657
    %v3081 = vunpack.c.h.b16 %v2657
    %v3082 = vunpack.c.l.b16 %v2658
    %v3083 = vunpack.c.h.b16 %v2658
    %v3084 = vunpack.c.l.b16 %v2659
    %v3085 = vunpack.c.h.b16 %v2659
    %v3086 = vunpack.c.l.b16 %v2660
    %v3087 = vunpack.c.h.b16 %v2660
    %v3088 = vunpack.c.l.b16 %v2661
    %v3089 = vunpack.c.h.b16 %v2661
    %v3090 = vunpack.c.l.b16 %v2662
    %v3091 = vunpack.c.h.b16 %v2662
    %v3092 = vunpack.c.l.b16 %v2663
    %v3093 = vunpack.c.h.b16 %v2663
    %v3094 = vunpack.c.l.b16 %v2664
    %v3095 = vunpack.c.h.b16 %v2664
    %v3096 = vunpack.c.l.b16 %v2665
    %v3097 = vunpack.c.h.b16 %v2665
    %v3098 = vunpack.c.l.b16 %v2666
    %v3099 = vunpack.c.h.b16 %v2666
    %v3100 = vunpack.c.l.b16 %v2667
    %v3101 = vunpack.c.h.b16 %v2667
    %v3102 = vunpack.c.l.b16 %v2668
    %v3103 = vunpack.c.h.b16 %v2668
    %v3104 = vunpack.c.l.b16 %v2669
    %v3105 = vunpack.c.h.b16 %v2669
    %v3106 = vunpack.c.l.b16 %v2670
    %v3107 = vunpack.c.h.b16 %v2670
    %v3108 = vunpack.c.l.b16 %v2671
    %v3109 = vunpack.c.h.b16 %v2671
    %v3110 = vunpack.c.l.b16 %v2672
    %v3111 = vunpack.c.h.b16 %v2672
    %v3112 = vunpack.c.l.b16 %v2673
    %v3113 = vunpack.c.h.b16 %v2673
    %v3114 = vunpack.c.l.b16 %v2674
    %v3115 = vunpack.c.h.b16 %v2674
    %v3116 = vpack.c.b16 %v2958, %v2956
    %v3117 = vpack.c.b16 %v2959, %v2957
    %v3118 = vpack.c.b16 %v2962, %v2960
    %v3119 = vpack.c.b16 %v2963, %v2961
    %v3120 = vpack.c.b16 %v2966, %v2964
    %v3121 = vpack.c.b16 %v2967, %v2965
    %v3122 = vpack.c.b16 %v2970, %v2968
    %v3123 = vpack.c.b16 %v2971, %v2969
    %v3124 = vpack.c.b16 %v2974, %v2972
    %v3125 = vpack.c.b16 %v2975, %v2973
    %v3126 = vpack.c.b16 %v2978, %v2976
    %v3127 = vpack.c.b16 %v2979, %v2977
    %v3128 = vpack.c.b16 %v2982, %v2980
    %v3129 = vpack.c.b16 %v2983, %v2981
    %v3130 = vpack.c.b16 %v2986, %v2984
    %v3131 = vpack.c.b16 %v2987, %v2985
    %v3132 = vpack.c.b16 %v2990, %v2988
    %v3133 = vpack.c.b16 %v2991, %v2989
    %v3134 = vpack.c.b16 %v2994, %v2992
    %v3135 = vpack.c.b16 %v2995, %v2993
    %v3136 = vpack.c.b16 %v2998, %v2996
    %v3137 = vpack.c.b16 %v2999, %v2997
    %v3138 = vpack.c.b16 %v3002, %v3000
    %v3139 = vpack.c.b16 %v3003, %v3001
    %v3140 = vpack.c.b16 %v3006, %v3004
    %v3141 = vpack.c.b16 %v3007, %v3005
    %v3142 = vpack.c.b16 %v3010, %v3008
    %v3143 = vpack.c.b16 %v3011, %v3009
    %v3144 = vpack.c.b16 %v3014, %v3012
    %v3145 = vpack.c.b16 %v3015, %v3013
    %v3146 = vpack.c.b16 %v3018, %v3016
    %v3147 = vpack.c.b16 %v3019, %v3017
    %v3148 = vpack.c.b16 %v3022, %v3020
    %v3149 = vpack.c.b16 %v3023, %v3021
    %v3150 = vpack.c.b16 %v3026, %v3024
    %v3151 = vpack.c.b16 %v3027, %v3025
    %v3152 = vpack.c.b16 %v3030, %v3028
    %v3153 = vpack.c.b16 %v3031, %v3029
    %v3154 = vpack.c.b16 %v3034, %v3032
    %v3155 = vpack.c.b16 %v3035, %v3033
    %v3156 = vpack.c.b16 %v3038, %v3036
    %v3157 = vpack.c.b16 %v3039, %v3037
    %v3158 = vpack.c.b16 %v3042, %v3040
    %v3159 = vpack.c.b16 %v3043, %v3041
    %v3160 = vpack.c.b16 %v3046, %v3044
    %v3161 = vpack.c.b16 %v3047, %v3045
    %v3162 = vpack.c.b16 %v3050, %v3048
    %v3163 = vpack.c.b16 %v3051, %v3049
    %v3164 = vpack.c.b16 %v3054, %v3052
    %v3165 = vpack.c.b16 %v3055, %v3053
    %v3166 = vpack.c.b16 %v3058, %v3056
    %v3167 = vpack.c.b16 %v3059, %v3057
    %v3168 = vpack.c.b16 %v3062, %v3060
    %v3169 = vpack.c.b16 %v3063, %v3061
    %v3170 = vpack.c.b16 %v3066, %v3064
    %v3171 = vpack.c.b16 %v3067, %v3065
    %v3172 = vpack.c.b16 %v3070, %v3068
    %v3173 = vpack.c.b16 %v3071, %v3069
    %v3174 = vpack.c.b16 %v3074, %v3072
    %v3175 = vpack.c.b16 %v3075, %v3073
    %v3176 = vpack.c.b16 %v3078, %v3076
    %v3177 = vpack.c.b16 %v3079, %v3077
    %v3178 = vpack.c.b16 %v3082, %v3080
    %v3179 = vpack.c.b16 %v3083, %v3081
    %v3180 = vpack.c.b16 %v3086, %v3084
    %v3181 = vpack.c.b16 %v3087, %v3085
    %v3182 = vpack.c.b16 %v3090, %v3088
    %v3183 = vpack.c.b16 %v3091, %v3089
    %v3184 = vpack.c.b16 %v3094, %v3092
    %v3185 = vpack.c.b16 %v3095, %v3093
    %v3186 = vpack.c.b16 %v3098, %v3096
    %v3187 = vpack.c.b16 %v3099, %v3097
    %v3188 = vpack.c.b16 %v3102, %v3100
    %v3189 = vpack.c.b16 %v3103, %v3101
    %v3190 = vpack.c.b16 %v3106, %v3104
    %v3191 = vpack.c.b16 %v3107, %v3105
    %v3192 = vpack.c.b16 %v3110, %v3108
    %v3193 = vpack.c.b16 %v3111, %v3109
    %v3194 = vpack.c.b16 %v3114, %v3112
    %v3195 = vpack.c.b16 %v3115, %v3113
    %3276 = vmatprep.subr.bf16.mxu0 %v3117
    %3277 = vmatpush1.bf16.msra.mxu0 %v3116
    %3278 = vmatprep.subr.bf16.mxu0 %v3119
    %3279 = vmatpush1.bf16.msra.mxu0 %v3118
    %3280 = vmatprep.subr.bf16.mxu0 %v3121
    %3281 = vmatpush1.bf16.msra.mxu0 %v3120
    %3282 = vmatprep.subr.bf16.mxu0 %v3123
    %3283 = vmatpush1.bf16.msra.mxu0 %v3122
    %3284 = vmatprep.subr.bf16.mxu0 %v3125
    %3285 = vmatpush1.bf16.msra.mxu0 %v3124
    %3286 = vmatprep.subr.bf16.mxu0 %v3127
    %3287 = vmatpush1.bf16.msra.mxu0 %v3126
    %3288 = vmatprep.subr.bf16.mxu0 %v3129
    %3289 = vmatpush1.bf16.msra.mxu0 %v3128
    %3290 = vmatprep.subr.bf16.mxu0 %v3131
    %3291 = vmatpush1.bf16.msra.mxu0 %v3130
    %3292 = vmatprep.subr.bf16.mxu0 %v3133
    %3293 = vmatpush1.bf16.msra.mxu0 %v3132
    %3294 = vmatprep.subr.bf16.mxu0 %v3135
    %3295 = vmatpush1.bf16.msra.mxu0 %v3134
    %3296 = vmatprep.subr.bf16.mxu0 %v3137
    %3297 = vmatpush1.bf16.msra.mxu0 %v3136
    %3298 = vmatprep.subr.bf16.mxu0 %v3139
    %3299 = vmatpush1.bf16.msra.mxu0 %v3138
    %3300 = vmatprep.subr.bf16.mxu0 %v3141
    %3301 = vmatpush1.bf16.msra.mxu0 %v3140
    %3302 = vmatprep.subr.bf16.mxu0 %v3143
    %3303 = vmatpush1.bf16.msra.mxu0 %v3142
    %3304 = vmatprep.subr.bf16.mxu0 %v3145
    %3305 = vmatpush1.bf16.msra.mxu0 %v3144
    %3306 = vmatprep.subr.bf16.mxu0 %v3147
    %3307 = vmatpush1.bf16.msra.mxu0 %v3146
    %3308 = vmatprep.mubr.bf16.mxu0 %v2696
    %3309 = vmatmul.mubr.bf16.gmra.mrb[0].mxu0 %v2693
    %v3310 = vpop.f32.mrb[0].mxu0
    %v3311 = vadd.f32 %v2681, %v3310
    %v3312 = vpop.f32.mrb[0].mxu0
    %v3313 = vadd.f32 %v2685, %v3312
    %v3314 = vpop.f32.mrb[0].mxu0
    %v3315 = vadd.f32 %v2681, %v3314
    %v3316 = vpop.f32.mrb[0].mxu0
    %v3317 = vadd.f32 %v2685, %v3316
    %3318 = vmatprep.mubr.bf16.mxu0 %v2709
    %3319 = vmatmul.mubr.bf16.gmra.mrb[0].mxu0 %v2707
    %v3320 = vpop.f32.mrb[0].mxu0
    %v3321 = vadd.f32 %v2681, %v3320
    %v3322 = vpop.f32.mrb[0].mxu0
    %v3323 = vadd.f32 %v2685, %v3322
    %v3324 = vpop.f32.mrb[0].mxu0
    %v3325 = vadd.f32 %v2681, %v3324
    %v3326 = vpop.f32.mrb[0].mxu0
    %v3327 = vadd.f32 %v2685, %v3326
    %3328 = vmatprep.mubr.bf16.mxu0 %v2719
    %3329 = vmatmul.mubr.bf16.gmra.mrb[0].mxu0 %v2717
    %v3330 = vpop.f32.mrb[0].mxu0
    %v3331 = vadd.f32 %v2681, %v3330
    %v3332 = vpop.f32.mrb[0].mxu0
    %v3333 = vadd.f32 %v2685, %v3332
    %v3334 = vpop.f32.mrb[0].mxu0
    %v3335 = vadd.f32 %v2681, %v3334
    %v3336 = vpop.f32.mrb[0].mxu0
    %v3337 = vadd.f32 %v2685, %v3336
    %3338 = vmatprep.mubr.bf16.mxu0 %v2729
    %3339 = vmatmul.mubr.bf16.gmra.mrb[0].mxu0 %v2727
    %v3340 = vpop.f32.mrb[0].mxu0
    %v3341 = vadd.f32 %v2681, %v3340
    %v3342 = vpop.f32.mrb[0].mxu0
    %v3343 = vadd.f32 %v2685, %v3342
    %v3344 = vpop.f32.mrb[0].mxu0
    %v3345 = vadd.f32 %v2681, %v3344
    %v3346 = vpop.f32.mrb[0].mxu0
    %v3347 = vadd.f32 %v2685, %v3346
    %3348 = vmatprep.mubr.bf16.mxu0 %v2739
    %3349 = vmatmul.mubr.bf16.gmra.mrb[0].mxu0 %v2737
    %v3350 = vpop.f32.mrb[0].mxu0
    %v3351 = vadd.f32 %v2681, %v3350
    %v3352 = vpop.f32.mrb[0].mxu0
    %v3353 = vadd.f32 %v2685, %v3352
    %v3354 = vpop.f32.mrb[0].mxu0
    %v3355 = vadd.f32 %v2681, %v3354
    %v3356 = vpop.f32.mrb[0].mxu0
    %v3357 = vadd.f32 %v2685, %v3356
    %3358 = vmatprep.mubr.bf16.mxu0 %v2749
    %3359 = vmatmul.mubr.bf16.gmra.mrb[0].mxu0 %v2747
    %v3360 = vpop.f32.mrb[0].mxu0
    %v3361 = vadd.f32 %v2681, %v3360
    %v3362 = vpop.f32.mrb[0].mxu0
    %v3363 = vadd.f32 %v2685, %v3362
    %v3364 = vpop.f32.mrb[0].mxu0
    %v3365 = vadd.f32 %v2681, %v3364
    %v3366 = vpop.f32.mrb[0].mxu0
    %v3367 = vadd.f32 %v2685, %v3366
    %3368 = vmatprep.mubr.bf16.mxu0 %v2759
    %3369 = vmatmul.mubr.bf16.gmra.mrb[0].mxu0 %v2757
    %v3370 = vpop.f32.mrb[0].mxu0
    %v3371 = vadd.f32 %v2681, %v3370
    %v3372 = vpop.f32.mrb[0].mxu0
    %v3373 = vadd.f32 %v2685, %v3372
    %v3374 = vpop.f32.mrb[0].mxu0
    %v3375 = vadd.f32 %v2681, %v3374
    %v3376 = vpop.f32.mrb[0].mxu0
    %v3377 = vadd.f32 %v2685, %v3376
    %3378 = vmatprep.mubr.bf16.mxu0 %v2769
    %3379 = vmatmul.mubr.bf16.gmra.mrb[0].mxu0 %v2767
    %v3380 = vpop.f32.mrb[0].mxu0
    %v3381 = vadd.f32 %v2681, %v3380
    %v3382 = vpop.f32.mrb[0].mxu0
    %v3383 = vadd.f32 %v2685, %v3382
    %v3384 = vpop.f32.mrb[0].mxu0
    %v3385 = vadd.f32 %v2681, %v3384
    %v3386 = vpop.f32.mrb[0].mxu0
    %v3387 = vadd.f32 %v2685, %v3386
    %3388 = vmatprep.mubr.bf16.mxu0 %v2779
    %3389 = vmatmul.mubr.bf16.gmra.mrb[0].mxu0 %v2777
    %v3390 = vpop.f32.mrb[0].mxu0
    %v3391 = vadd.f32 %v2681, %v3390
    %v3392 = vpop.f32.mrb[0].mxu0
    %v3393 = vadd.f32 %v2685, %v3392
    %v3394 = vpop.f32.mrb[0].mxu0
    %v3395 = vadd.f32 %v2681, %v3394
    %v3396 = vpop.f32.mrb[0].mxu0
    %v3397 = vadd.f32 %v2685, %v3396
    %3398 = vmatprep.mubr.bf16.mxu0 %v2789
    %3399 = vmatmul.mubr.bf16.gmra.mrb[0].mxu0 %v2787
    %v3400 = vpop.f32.mrb[0].mxu0
    %v3401 = vadd.f32 %v2681, %v3400
    %v3402 = vpop.f32.mrb[0].mxu0
    %v3403 = vadd.f32 %v2685, %v3402
    %v3404 = vpop.f32.mrb[0].mxu0
    %v3405 = vadd.f32 %v2681, %v3404
    %v3406 = vpop.f32.mrb[0].mxu0
    %v3407 = vadd.f32 %v2685, %v3406
    %3408 = vmatprep.mubr.bf16.mxu0 %v2799
    %3409 = vmatmul.mubr.bf16.gmra.mrb[0].mxu0 %v2797
    %v3410 = vpop.f32.mrb[0].mxu0
    %v3411 = vadd.f32 %v2681, %v3410
    %v3412 = vpop.f32.mrb[0].mxu0
    %v3413 = vadd.f32 %v2685, %v3412
    %v3414 = vpop.f32.mrb[0].mxu0
    %v3415 = vadd.f32 %v2681, %v3414
    %v3416 = vpop.f32.mrb[0].mxu0
    %v3417 = vadd.f32 %v2685, %v3416
    %3418 = vmatprep.mubr.bf16.mxu0 %v2809
    %3419 = vmatmul.mubr.bf16.gmra.mrb[0].mxu0 %v2807
    %v3420 = vpop.f32.mrb[0].mxu0
    %v3421 = vadd.f32 %v2681, %v3420
    %v3422 = vpop.f32.mrb[0].mxu0
    %v3423 = vadd.f32 %v2685, %v3422
    %v3424 = vpop.f32.mrb[0].mxu0
    %v3425 = vadd.f32 %v2681, %v3424
    %v3426 = vpop.f32.mrb[0].mxu0
    %v3427 = vadd.f32 %v2685, %v3426
    %3428 = vdwg.mxu0
    %3429 = vmatprep.subr.bf16.mxu0 %v3149
    %3430 = vmatpush1.bf16.msra.mxu0 %v3148
    %3431 = vmatprep.subr.bf16.mxu0 %v3151
    %3432 = vmatpush1.bf16.msra.mxu0 %v3150
    %3433 = vmatprep.subr.bf16.mxu0 %v3153
    %3434 = vmatpush1.bf16.msra.mxu0 %v3152
    %3435 = vmatprep.subr.bf16.mxu0 %v3155
    %3436 = vmatpush1.bf16.msra.mxu0 %v3154
    %3437 = vmatprep.subr.bf16.mxu0 %v3157
    %3438 = vmatpush1.bf16.msra.mxu0 %v3156
    %3439 = vmatprep.subr.bf16.mxu0 %v3159
    %3440 = vmatpush1.bf16.msra.mxu0 %v3158
    %3441 = vmatprep.subr.bf16.mxu0 %v3161
    %3442 = vmatpush1.bf16.msra.mxu0 %v3160
    %3443 = vmatprep.subr.bf16.mxu0 %v3163
    %3444 = vmatpush1.bf16.msra.mxu0 %v3162
    %3445 = vmatprep.subr.bf16.mxu0 %v3165
    %3446 = vmatpush1.bf16.msra.mxu0 %v3164
    %3447 = vmatprep.subr.bf16.mxu0 %v3167
    %3448 = vmatpush1.bf16.msra.mxu0 %v3166
    %3449 = vmatprep.subr.bf16.mxu0 %v3169
    %3450 = vmatpush1.bf16.msra.mxu0 %v3168
    %3451 = vmatprep.subr.bf16.mxu0 %v3171
    %3452 = vmatpush1.bf16.msra.mxu0 %v3170
    %3453 = vmatprep.subr.bf16.mxu0 %v3173
    %3454 = vmatpush1.bf16.msra.mxu0 %v3172
    %3455 = vmatprep.subr.bf16.mxu0 %v3175
    %3456 = vmatpush1.bf16.msra.mxu0 %v3174
    %3457 = vmatprep.subr.bf16.mxu0 %v3177
    %3458 = vmatpush1.bf16.msra.mxu0 %v3176
    %3459 = vmatprep.subr.bf16.mxu0 %v3179
    %3460 = vmatpush1.bf16.msra.mxu0 %v3178
    %3461 = vmatprep.mubr.bf16.mxu0 %v2702
    %3462 = vmatmul.mubr.bf16.gmra.mrb[0].mxu0 %v2699
    %v3463 = vpop.f32.mrb[0].mxu0
    %v3464 = vadd.f32 %v3311, %v3463
    %v3465 = vpop.f32.mrb[0].mxu0
    %v3466 = vadd.f32 %v3313, %v3465
    %v3467 = vpop.f32.mrb[0].mxu0
    %v3468 = vadd.f32 %v3315, %v3467
    %v3469 = vpop.f32.mrb[0].mxu0
    %v3470 = vadd.f32 %v3317, %v3469
    %3471 = vmatprep.mubr.bf16.mxu0 %v2713
    %3472 = vmatmul.mubr.bf16.gmra.mrb[0].mxu0 %v2711
    %v3473 = vpop.f32.mrb[0].mxu0
    %v3474 = vadd.f32 %v3321, %v3473
    %v3475 = vpop.f32.mrb[0].mxu0
    %v3476 = vadd.f32 %v3323, %v3475
    %v3477 = vpop.f32.mrb[0].mxu0
    %v3478 = vadd.f32 %v3325, %v3477
    %v3479 = vpop.f32.mrb[0].mxu0
    %v3480 = vadd.f32 %v3327, %v3479
    %3481 = vmatprep.mubr.bf16.mxu0 %v2723
    %3482 = vmatmul.mubr.bf16.gmra.mrb[0].mxu0 %v2721
    %v3483 = vpop.f32.mrb[0].mxu0
    %v3484 = vadd.f32 %v3331, %v3483
    %v3485 = vpop.f32.mrb[0].mxu0
    %v3486 = vadd.f32 %v3333, %v3485
    %v3487 = vpop.f32.mrb[0].mxu0
    %v3488 = vadd.f32 %v3335, %v3487
    %v3489 = vpop.f32.mrb[0].mxu0
    %v3490 = vadd.f32 %v3337, %v3489
    %3491 = vmatprep.mubr.bf16.mxu0 %v2733
    %3492 = vmatmul.mubr.bf16.gmra.mrb[0].mxu0 %v2731
    %v3493 = vpop.f32.mrb[0].mxu0
    %v3494 = vadd.f32 %v3341, %v3493
    %v3495 = vpop.f32.mrb[0].mxu0
    %v3496 = vadd.f32 %v3343, %v3495
    %v3497 = vpop.f32.mrb[0].mxu0
    %v3498 = vadd.f32 %v3345, %v3497
    %v3499 = vpop.f32.mrb[0].mxu0
    %v3500 = vadd.f32 %v3347, %v3499
    %3501 = vmatprep.mubr.bf16.mxu0 %v2743
    %3502 = vmatmul.mubr.bf16.gmra.mrb[0].mxu0 %v2741
    %v3503 = vpop.f32.mrb[0].mxu0
    %v3504 = vadd.f32 %v3351, %v3503
    %v3505 = vpop.f32.mrb[0].mxu0
    %v3506 = vadd.f32 %v3353, %v3505
    %v3507 = vpop.f32.mrb[0].mxu0
    %v3508 = vadd.f32 %v3355, %v3507
    %v3509 = vpop.f32.mrb[0].mxu0
    %v3510 = vadd.f32 %v3357, %v3509
    %3511 = vmatprep.mubr.bf16.mxu0 %v2753
    %3512 = vmatmul.mubr.bf16.gmra.mrb[0].mxu0 %v2751
    %v3513 = vpop.f32.mrb[0].mxu0
    %v3514 = vadd.f32 %v3361, %v3513
    %v3515 = vpop.f32.mrb[0].mxu0
    %v3516 = vadd.f32 %v3363, %v3515
    %v3517 = vpop.f32.mrb[0].mxu0
    %v3518 = vadd.f32 %v3365, %v3517
    %v3519 = vpop.f32.mrb[0].mxu0
    %v3520 = vadd.f32 %v3367, %v3519
    %3521 = vmatprep.mubr.bf16.mxu0 %v2763
    %3522 = vmatmul.mubr.bf16.gmra.mrb[0].mxu0 %v2761
    %v3523 = vpop.f32.mrb[0].mxu0
    %v3524 = vadd.f32 %v3371, %v3523
    %v3525 = vpop.f32.mrb[0].mxu0
    %v3526 = vadd.f32 %v3373, %v3525
    %v3527 = vpop.f32.mrb[0].mxu0
    %v3528 = vadd.f32 %v3375, %v3527
    %v3529 = vpop.f32.mrb[0].mxu0
    %v3530 = vadd.f32 %v3377, %v3529
    %3531 = vmatprep.mubr.bf16.mxu0 %v2773
    %3532 = vmatmul.mubr.bf16.gmra.mrb[0].mxu0 %v2771
    %v3533 = vpop.f32.mrb[0].mxu0
    %v3534 = vadd.f32 %v3381, %v3533
    %v3535 = vpop.f32.mrb[0].mxu0
    %v3536 = vadd.f32 %v3383, %v3535
    %v3537 = vpop.f32.mrb[0].mxu0
    %v3538 = vadd.f32 %v3385, %v3537
    %v3539 = vpop.f32.mrb[0].mxu0
    %v3540 = vadd.f32 %v3387, %v3539
    %3541 = vmatprep.mubr.bf16.mxu0 %v2783
    %3542 = vmatmul.mubr.bf16.gmra.mrb[0].mxu0 %v2781
    %v3543 = vpop.f32.mrb[0].mxu0
    %v3544 = vadd.f32 %v3391, %v3543
    %v3545 = vpop.f32.mrb[0].mxu0
    %v3546 = vadd.f32 %v3393, %v3545
    %v3547 = vpop.f32.mrb[0].mxu0
    %v3548 = vadd.f32 %v3395, %v3547
    %v3549 = vpop.f32.mrb[0].mxu0
    %v3550 = vadd.f32 %v3397, %v3549
    %3551 = vmatprep.mubr.bf16.mxu0 %v2793
    %3552 = vmatmul.mubr.bf16.gmra.mrb[0].mxu0 %v2791
    %v3553 = vpop.f32.mrb[0].mxu0
    %v3554 = vadd.f32 %v3401, %v3553
    %v3555 = vpop.f32.mrb[0].mxu0
    %v3556 = vadd.f32 %v3403, %v3555
    %v3557 = vpop.f32.mrb[0].mxu0
    %v3558 = vadd.f32 %v3405, %v3557
    %v3559 = vpop.f32.mrb[0].mxu0
    %v3560 = vadd.f32 %v3407, %v3559
    %3561 = vmatprep.mubr.bf16.mxu0 %v2803
    %3562 = vmatmul.mubr.bf16.gmra.mrb[0].mxu0 %v2801
    %v3563 = vpop.f32.mrb[0].mxu0
    %v3564 = vadd.f32 %v3411, %v3563
    %v3565 = vpop.f32.mrb[0].mxu0
    %v3566 = vadd.f32 %v3413, %v3565
    %v3567 = vpop.f32.mrb[0].mxu0
    %v3568 = vadd.f32 %v3415, %v3567
    %v3569 = vpop.f32.mrb[0].mxu0
    %v3570 = vadd.f32 %v3417, %v3569
    %3571 = vmatprep.mubr.bf16.mxu0 %v2813
    %3572 = vmatmul.mubr.bf16.gmra.mrb[0].mxu0 %v2811
    %v3573 = vpop.f32.mrb[0].mxu0
    %v3574 = vadd.f32 %v3421, %v3573
    %v3575 = vpop.f32.mrb[0].mxu0
    %v3576 = vadd.f32 %v3423, %v3575
    %v3577 = vpop.f32.mrb[0].mxu0
    %v3578 = vadd.f32 %v3425, %v3577
    %v3579 = vpop.f32.mrb[0].mxu0
    %v3580 = vadd.f32 %v3427, %v3579
    %3581 = vdwg.mxu0
    %3582 = vmatprep.subr.bf16.mxu0 %v3181
    %3583 = vmatpush1.bf16.msra.mxu0 %v3180
    %3584 = vmatprep.subr.bf16.mxu0 %v3183
    %3585 = vmatpush1.bf16.msra.mxu0 %v3182
    %3586 = vmatprep.subr.bf16.mxu0 %v3185
    %3587 = vmatpush1.bf16.msra.mxu0 %v3184
    %3588 = vmatprep.subr.bf16.mxu0 %v3187
    %3589 = vmatpush1.bf16.msra.mxu0 %v3186
    %3590 = vmatprep.subr.bf16.mxu0 %v3189
    %3591 = vmatpush1.bf16.msra.mxu0 %v3188
    %3592 = vmatprep.subr.bf16.mxu0 %v3191
    %3593 = vmatpush1.bf16.msra.mxu0 %v3190
    %3594 = vmatprep.subr.bf16.mxu0 %v3193
    %3595 = vmatpush1.bf16.msra.mxu0 %v3192
    %3596 = vmatprep.subr.bf16.mxu0 %v3195
    %3597 = vmatpush1.bf16.msra.mxu0 %v3194
    %3598 = vmatprep.subr.bf16.mxu0 0
    %3599 = vmatpush1.bf16.msra.mxu0 0
    %3600 = vmatprep.subr.bf16.mxu0 0
    %3601 = vmatpush1.bf16.msra.mxu0 0
    %3602 = vmatprep.subr.bf16.mxu0 0
    %3603 = vmatpush1.bf16.msra.mxu0 0
    %3604 = vmatprep.subr.bf16.mxu0 0
    %3605 = vmatpush1.bf16.msra.mxu0 0
    %3606 = vmatprep.subr.bf16.mxu0 0
    %3607 = vmatpush1.bf16.msra.mxu0 0
    %3608 = vmatprep.subr.bf16.mxu0 0
    %3609 = vmatpush1.bf16.msra.mxu0 0
    %3610 = vmatprep.subr.bf16.mxu0 0
    %3611 = vmatpush1.bf16.msra.mxu0 0
    %3612 = vmatprep.subr.bf16.mxu0 0
    %3613 = vmatpush1.bf16.msra.mxu0 0
    %3614 = vmatprep.mubr.bf16.mxu0 0
    %3615 = vmatmul.mubr.bf16.gmra.mrb[0].mxu0 %v2705
    %v3616 = vpop.f32.mrb[0].mxu0
    %v3617 = vadd.f32 %v3464, %v3616
    %v3618 = vpop.f32.mrb[0].mxu0
    %v3619 = vadd.f32 %v3466, %v3618
    %v3620 = vpop.f32.mrb[0].mxu0
    %v3621 = vadd.f32 %v3468, %v3620
    %v3622 = vpop.f32.mrb[0].mxu0
    %v3623 = vadd.f32 %v3470, %v3622
    %3624 = vmatprep.mubr.bf16.mxu0 0
    %3625 = vmatmul.mubr.bf16.gmra.mrb[0].mxu0 %v2715
    %v3626 = vpop.f32.mrb[0].mxu0
    %v3627 = vadd.f32 %v3474, %v3626
    %v3628 = vpop.f32.mrb[0].mxu0
    %v3629 = vadd.f32 %v3476, %v3628
    %v3630 = vpop.f32.mrb[0].mxu0
    %v3631 = vadd.f32 %v3478, %v3630
    %v3632 = vpop.f32.mrb[0].mxu0
    %v3633 = vadd.f32 %v3480, %v3632
    %3634 = vmatprep.mubr.bf16.mxu0 0
    %3635 = vmatmul.mubr.bf16.gmra.mrb[0].mxu0 %v2725
    %v3636 = vpop.f32.mrb[0].mxu0
    %v3637 = vadd.f32 %v3484, %v3636
    %v3638 = vpop.f32.mrb[0].mxu0
    %v3639 = vadd.f32 %v3486, %v3638
    %v3640 = vpop.f32.mrb[0].mxu0
    %v3641 = vadd.f32 %v3488, %v3640
    %v3642 = vpop.f32.mrb[0].mxu0
    %v3643 = vadd.f32 %v3490, %v3642
    %3644 = vmatprep.mubr.bf16.mxu0 0
    %3645 = vmatmul.mubr.bf16.gmra.mrb[0].mxu0 %v2735
    %v3646 = vpop.f32.mrb[0].mxu0
    %v3647 = vadd.f32 %v3494, %v3646
    %v3648 = vpop.f32.mrb[0].mxu0
    %v3649 = vadd.f32 %v3496, %v3648
    %v3650 = vpop.f32.mrb[0].mxu0
    %v3651 = vadd.f32 %v3498, %v3650
    %v3652 = vpop.f32.mrb[0].mxu0
    %v3653 = vadd.f32 %v3500, %v3652
    %3654 = vmatprep.mubr.bf16.mxu0 0
    %3655 = vmatmul.mubr.bf16.gmra.mrb[0].mxu0 %v2745
    %v3656 = vpop.f32.mrb[0].mxu0
    %v3657 = vadd.f32 %v3504, %v3656
    %v3658 = vpop.f32.mrb[0].mxu0
    %v3659 = vadd.f32 %v3506, %v3658
    %v3660 = vpop.f32.mrb[0].mxu0
    %v3661 = vadd.f32 %v3508, %v3660
    %v3662 = vpop.f32.mrb[0].mxu0
    %v3663 = vadd.f32 %v3510, %v3662
    %3664 = vmatprep.mubr.bf16.mxu0 0
    %3665 = vmatmul.mubr.bf16.gmra.mrb[0].mxu0 %v2755
    %v3666 = vpop.f32.mrb[0].mxu0
    %v3667 = vadd.f32 %v3514, %v3666
    %v3668 = vpop.f32.mrb[0].mxu0
    %v3669 = vadd.f32 %v3516, %v3668
    %v3670 = vpop.f32.mrb[0].mxu0
    %v3671 = vadd.f32 %v3518, %v3670
    %v3672 = vpop.f32.mrb[0].mxu0
    %v3673 = vadd.f32 %v3520, %v3672
    %3674 = vmatprep.mubr.bf16.mxu0 0
    %3675 = vmatmul.mubr.bf16.gmra.mrb[0].mxu0 %v2765
    %v3676 = vpop.f32.mrb[0].mxu0
    %v3677 = vadd.f32 %v3524, %v3676
    %v3678 = vpop.f32.mrb[0].mxu0
    %v3679 = vadd.f32 %v3526, %v3678
    %v3680 = vpop.f32.mrb[0].mxu0
    %v3681 = vadd.f32 %v3528, %v3680
    %v3682 = vpop.f32.mrb[0].mxu0
    %v3683 = vadd.f32 %v3530, %v3682
    %3684 = vmatprep.mubr.bf16.mxu0 0
    %3685 = vmatmul.mubr.bf16.gmra.mrb[0].mxu0 %v2775
    %v3686 = vpop.f32.mrb[0].mxu0
    %v3687 = vadd.f32 %v3534, %v3686
    %v3688 = vpop.f32.mrb[0].mxu0
    %v3689 = vadd.f32 %v3536, %v3688
    %v3690 = vpop.f32.mrb[0].mxu0
    %v3691 = vadd.f32 %v3538, %v3690
    %v3692 = vpop.f32.mrb[0].mxu0
    %v3693 = vadd.f32 %v3540, %v3692
    %3694 = vmatprep.mubr.bf16.mxu0 0
    %3695 = vmatmul.mubr.bf16.gmra.mrb[0].mxu0 %v2785
    %v3696 = vpop.f32.mrb[0].mxu0
    %v3697 = vadd.f32 %v3544, %v3696
    %v3698 = vpop.f32.mrb[0].mxu0
    %v3699 = vadd.f32 %v3546, %v3698
    %v3700 = vpop.f32.mrb[0].mxu0
    %v3701 = vadd.f32 %v3548, %v3700
    %v3702 = vpop.f32.mrb[0].mxu0
    %v3703 = vadd.f32 %v3550, %v3702
    %3704 = vmatprep.mubr.bf16.mxu0 0
    %3705 = vmatmul.mubr.bf16.gmra.mrb[0].mxu0 %v2795
    %v3706 = vpop.f32.mrb[0].mxu0
    %v3707 = vadd.f32 %v3554, %v3706
    %v3708 = vpop.f32.mrb[0].mxu0
    %v3709 = vadd.f32 %v3556, %v3708
    %v3710 = vpop.f32.mrb[0].mxu0
    %v3711 = vadd.f32 %v3558, %v3710
    %v3712 = vpop.f32.mrb[0].mxu0
    %v3713 = vadd.f32 %v3560, %v3712
    %3714 = vmatprep.mubr.bf16.mxu0 0
    %3715 = vmatmul.mubr.bf16.gmra.mrb[0].mxu0 %v2805
    %v3716 = vpop.f32.mrb[0].mxu0
    %v3717 = vadd.f32 %v3564, %v3716
    %v3718 = vpop.f32.mrb[0].mxu0
    %v3719 = vadd.f32 %v3566, %v3718
    %v3720 = vpop.f32.mrb[0].mxu0
    %v3721 = vadd.f32 %v3568, %v3720
    %v3722 = vpop.f32.mrb[0].mxu0
    %v3723 = vadd.f32 %v3570, %v3722
    %3724 = vmatprep.mubr.bf16.mxu0 0
    %3725 = vmatmul.mubr.bf16.gmra.mrb[0].mxu0 %v2815
    %v3726 = vpop.f32.mrb[0].mxu0
    %v3727 = vadd.f32 %v3574, %v3726
    %v3728 = vpop.f32.mrb[0].mxu0
    %v3729 = vadd.f32 %v3576, %v3728
    %v3730 = vpop.f32.mrb[0].mxu0
    %v3731 = vadd.f32 %v3578, %v3730
    %v3732 = vpop.f32.mrb[0].mxu0
    %v3733 = vadd.f32 %v3580, %v3732
    %3734 = vdwg.mxu0
    %v3735 = vpack.c.bf16 %v3621, %v3617
    %v3736 = vpack.c.bf16 %v3623, %v3619
    %v3737 = vpack.c.bf16 %v3631, %v3627
    %v3738 = vpack.c.bf16 %v3633, %v3629
    %v3739 = vpack.c.bf16 %v3641, %v3637
    %v3740 = vpack.c.bf16 %v3643, %v3639
    %v3741 = vpack.c.bf16 %v3651, %v3647
    %v3742 = vpack.c.bf16 %v3653, %v3649
    %v3743 = vpack.c.bf16 %v3661, %v3657
    %v3744 = vpack.c.bf16 %v3663, %v3659
    %v3745 = vpack.c.bf16 %v3671, %v3667
    %v3746 = vpack.c.bf16 %v3673, %v3669
    %v3747 = vpack.c.bf16 %v3681, %v3677
    %v3748 = vpack.c.bf16 %v3683, %v3679
    %v3749 = vpack.c.bf16 %v3691, %v3687
    %v3750 = vpack.c.bf16 %v3693, %v3689
    %v3751 = vpack.c.bf16 %v3701, %v3697
    %v3752 = vpack.c.bf16 %v3703, %v3699
    %v3753 = vpack.c.bf16 %v3711, %v3707
    %v3754 = vpack.c.bf16 %v3713, %v3709
    %v3755 = vpack.c.bf16 %v3721, %v3717
    %v3756 = vpack.c.bf16 %v3723, %v3719
    %v3757 = vpack.c.bf16 %v3731, %v3727
    %v3758 = vpack.c.bf16 %v3733, %v3729
    %v3759 = vtanh.bf16.pop %v3735
    %v3760 = vtanh.bf16.pop %v3737
    %v3761 = vtanh.bf16.pop %v3739
    %v3762 = vtanh.bf16.pop %v3741
    %v3763 = vtanh.bf16.pop %v3743
    %v3764 = vtanh.bf16.pop %v3745
    %v3765 = vtanh.bf16.pop %v3747
    %v3766 = vtanh.bf16.pop %v3749
    %v3767 = vtanh.bf16.pop %v3751
    %v3768 = vtanh.bf16.pop %v3753
    %v3769 = vtanh.bf16.pop %v3755
    %v3770 = vtanh.bf16.pop %v3757
    %v3771 = vxor.u32 %v3736, 2147516416
    %v3772 = vxor.u32 %v3738, 2147516416
    %v3773 = vxor.u32 %v3740, 2147516416
    %v3774 = vxor.u32 %v3742, 2147516416
    %v3775 = vxor.u32 %v3744, 2147516416
    %v3776 = vxor.u32 %v3746, 2147516416
    %v3777 = vxor.u32 %v3748, 2147516416
    %v3778 = vxor.u32 %v3750, 2147516416
    %v3779 = vxor.u32 %v3752, 2147516416
    %v3780 = vxor.u32 %v3754, 2147516416
    %v3781 = vxor.u32 %v3756, 2147516416
    %v3782 = vxor.u32 %v3758, 2147516416
    %v3784 = vmul.bf16 %v3771, 1069105081
    %v3785 = vpow.bf16.pop %v3784
    %v3787 = vmul.bf16 %v3772, 1069105081
    %v3788 = vpow.bf16.pop %v3787
    %v3790 = vmul.bf16 %v3773, 1069105081
    %v3791 = vpow.bf16.pop %v3790
    %v3793 = vmul.bf16 %v3774, 1069105081
    %v3794 = vpow.bf16.pop %v3793
    %v3796 = vmul.bf16 %v3775, 1069105081
    %v3797 = vpow.bf16.pop %v3796
    %v3799 = vmul.bf16 %v3776, 1069105081
    %v3800 = vpow.bf16.pop %v3799
    %v3802 = vmul.bf16 %v3777, 1069105081
    %v3803 = vpow.bf16.pop %v3802
    %v3805 = vmul.bf16 %v3778, 1069105081
    %v3806 = vpow.bf16.pop %v3805
    %v3808 = vmul.bf16 %v3779, 1069105081
    %v3809 = vpow.bf16.pop %v3808
    %v3811 = vmul.bf16 %v3780, 1069105081
    %v3812 = vpow.bf16.pop %v3811
    %v3814 = vmul.bf16 %v3781, 1069105081
    %v3815 = vpow.bf16.pop %v3814
    %v3817 = vmul.bf16 %v3782, 1069105081
    %v3818 = vpow.bf16.pop %v3817
    %v3819 = vadd.bf16 %v3785, 1065369472
    %v3820 = vadd.bf16 %v3788, 1065369472
    %v3821 = vadd.bf16 %v3791, 1065369472
    %v3822 = vadd.bf16 %v3794, 1065369472
    %v3823 = vadd.bf16 %v3797, 1065369472
    %v3824 = vadd.bf16 %v3800, 1065369472
    %v3825 = vadd.bf16 %v3803, 1065369472
    %v3826 = vadd.bf16 %v3806, 1065369472
    %v3827 = vadd.bf16 %v3809, 1065369472
    %v3828 = vadd.bf16 %v3812, 1065369472
    %v3829 = vadd.bf16 %v3815, 1065369472
    %v3830 = vadd.bf16 %v3818, 1065369472
    %v3831 = vrcp.bf16.pop %v3819
    %v3832 = vmul.bf16 1065369472, %v3831
    %v3833 = vrcp.bf16.pop %v3820
    %v3834 = vmul.bf16 1065369472, %v3833
    %v3835 = vrcp.bf16.pop %v3821
    %v3836 = vmul.bf16 1065369472, %v3835
    %v3837 = vrcp.bf16.pop %v3822
    %v3838 = vmul.bf16 1065369472, %v3837
    %v3839 = vrcp.bf16.pop %v3823
    %v3840 = vmul.bf16 1065369472, %v3839
    %v3841 = vrcp.bf16.pop %v3824
    %v3842 = vmul.bf16 1065369472, %v3841
    %v3843 = vrcp.bf16.pop %v3825
    %v3844 = vmul.bf16 1065369472, %v3843
    %v3845 = vrcp.bf16.pop %v3826
    %v3846 = vmul.bf16 1065369472, %v3845
    %v3847 = vrcp.bf16.pop %v3827
    %v3848 = vmul.bf16 1065369472, %v3847
    %v3849 = vrcp.bf16.pop %v3828
    %v3850 = vmul.bf16 1065369472, %v3849
    %v3851 = vrcp.bf16.pop %v3829
    %v3852 = vmul.bf16 1065369472, %v3851
    %v3853 = vrcp.bf16.pop %v3830
    %v3854 = vmul.bf16 1065369472, %v3853
    %v3855 = vmul.bf16 %v3759, %v3832
    %v3856 = vmul.bf16 %v3760, %v3834
    %v3857 = vmul.bf16 %v3761, %v3836
    %v3858 = vmul.bf16 %v3762, %v3838
    %v3859 = vmul.bf16 %v3763, %v3840
    %v3860 = vmul.bf16 %v3764, %v3842
    %v3861 = vmul.bf16 %v3765, %v3844
    %v3862 = vmul.bf16 %v3766, %v3846
    %v3863 = vmul.bf16 %v3767, %v3848
    %v3864 = vmul.bf16 %v3768, %v3850
    %v3865 = vmul.bf16 %v3769, %v3852
    %v3866 = vmul.bf16 %v3770, %v3854
    %s3867 = scalar_lea.vmem %s6, 128
    %v3868 = vld [vmem:[%s3867] sm:$0xff]
    %v3869 = vld [vmem:[%s3867 + $0x8] sm:$0xff]
    %v3870 = vld [vmem:[%s3867 + $0x10] sm:$0xff]
    %v3871 = vld [vmem:[%s3867 + $0x18] sm:$0xff]
    %v3872 = vld [vmem:[%s3867 + $0x20] sm:$0xff]
    %v3873 = vld [vmem:[%s3867 + $0x28] sm:$0xff]
    %v3874 = vld [vmem:[%s3867 + $0x30] sm:$0xff]
    %v3875 = vld [vmem:[%s3867 + $0x38] sm:$0xff]
    %v3876 = vld [vmem:[%s3867 + $0x40] sm:$0xff]
    %v3877 = vld [vmem:[%s3867 + $0x48] sm:$0xff]
    %v3878 = vld [vmem:[%s3867 + $0x50] sm:$0xff]
    %v3879 = vld [vmem:[%s3867 + $0x58] sm:$0xff]
    %v3880 = vld [vmem:[%s3867 + $0x60] sm:$0xff]
    %v3881 = vld [vmem:[%s3867 + $0x68] sm:$0xff]
    %v3882 = vld [vmem:[%s3867 + $0x70] sm:$0xff]
    %v3883 = vld [vmem:[%s3867 + $0x78] sm:$0xff]
    %s3884 = scalar_lea.vmem %s7, 2
    %v3885 = vld [vmem:[%s3884] sm:$0x3]
    %v3887 = vlaneseq
    %v3888 = vshrl.u32 %v3887, 7
    %v3889 = vsub.s32 0, %v3888
    %v3890 = vrot.slane %v3885, %v3889
    %v3891 = vlaneseq
    %v3892 = vshrl.u32 %v3891, 7
    %v3893 = vsub.s32 1, %v3892
    %v3894 = vrot.slane %v3885, %v3893
    %v3913 = vunpack.c.l.b16 %v3868
    %v3914 = vunpack.c.h.b16 %v3868
    %v3915 = vunpack.c.l.b16 %v3869
    %v3916 = vunpack.c.h.b16 %v3869
    %v3917 = vunpack.c.l.b16 %v3870
    %v3918 = vunpack.c.h.b16 %v3870
    %v3919 = vunpack.c.l.b16 %v3871
    %v3920 = vunpack.c.h.b16 %v3871
    %v3921 = vunpack.c.l.b16 %v3872
    %v3922 = vunpack.c.h.b16 %v3872
    %v3923 = vunpack.c.l.b16 %v3873
    %v3924 = vunpack.c.h.b16 %v3873
    %v3925 = vunpack.c.l.b16 %v3874
    %v3926 = vunpack.c.h.b16 %v3874
    %v3927 = vunpack.c.l.b16 %v3875
    %v3928 = vunpack.c.h.b16 %v3875
    %v3929 = vunpack.c.l.b16 %v3876
    %v3930 = vunpack.c.h.b16 %v3876
    %v3931 = vunpack.c.l.b16 %v3877
    %v3932 = vunpack.c.h.b16 %v3877
    %v3933 = vunpack.c.l.b16 %v3878
    %v3934 = vunpack.c.h.b16 %v3878
    %v3935 = vunpack.c.l.b16 %v3879
    %v3936 = vunpack.c.h.b16 %v3879
    %v3937 = vunpack.c.l.b16 %v3880
    %v3938 = vunpack.c.h.b16 %v3880
    %v3939 = vunpack.c.l.b16 %v3881
    %v3940 = vunpack.c.h.b16 %v3881
    %v3941 = vunpack.c.l.b16 %v3882
    %v3942 = vunpack.c.h.b16 %v3882
    %v3943 = vunpack.c.l.b16 %v3883
    %v3944 = vunpack.c.h.b16 %v3883
    %v3945 = vpack.c.b16 %v3915, %v3913
    %v3946 = vpack.c.b16 %v3916, %v3914
    %v3947 = vpack.c.b16 %v3919, %v3917
    %v3948 = vpack.c.b16 %v3920, %v3918
    %v3949 = vpack.c.b16 %v3923, %v3921
    %v3950 = vpack.c.b16 %v3924, %v3922
    %v3951 = vpack.c.b16 %v3927, %v3925
    %v3952 = vpack.c.b16 %v3928, %v3926
    %v3953 = vpack.c.b16 %v3931, %v3929
    %v3954 = vpack.c.b16 %v3932, %v3930
    %v3955 = vpack.c.b16 %v3935, %v3933
    %v3956 = vpack.c.b16 %v3936, %v3934
    %v3957 = vpack.c.b16 %v3939, %v3937
    %v3958 = vpack.c.b16 %v3940, %v3938
    %v3959 = vpack.c.b16 %v3943, %v3941
    %v3960 = vpack.c.b16 %v3944, %v3942
    %3977 = vmatprep.subr.bf16.mxu0 %v3946
    %3978 = vmatpush1.bf16.msra.mxu0 %v3945
    %3979 = vmatprep.subr.bf16.mxu0 %v3948
    %3980 = vmatpush1.bf16.msra.mxu0 %v3947
    %3981 = vmatprep.subr.bf16.mxu0 %v3950
    %3982 = vmatpush1.bf16.msra.mxu0 %v3949
    %3983 = vmatprep.subr.bf16.mxu0 %v3952
    %3984 = vmatpush1.bf16.msra.mxu0 %v3951
    %3985 = vmatprep.subr.bf16.mxu0 %v3954
    %3986 = vmatpush1.bf16.msra.mxu0 %v3953
    %3987 = vmatprep.subr.bf16.mxu0 %v3956
    %3988 = vmatpush1.bf16.msra.mxu0 %v3955
    %3989 = vmatprep.subr.bf16.mxu0 %v3958
    %3990 = vmatpush1.bf16.msra.mxu0 %v3957
    %3991 = vmatprep.subr.bf16.mxu0 %v3960
    %3992 = vmatpush1.bf16.msra.mxu0 %v3959
    %3993 = vmatprep.subr.bf16.mxu0 0
    %3994 = vmatpush1.bf16.msra.mxu0 0
    %3995 = vmatprep.subr.bf16.mxu0 0
    %3996 = vmatpush1.bf16.msra.mxu0 0
    %3997 = vmatprep.subr.bf16.mxu0 0
    %3998 = vmatpush1.bf16.msra.mxu0 0
    %3999 = vmatprep.subr.bf16.mxu0 0
    %4000 = vmatpush1.bf16.msra.mxu0 0
    %4001 = vmatprep.subr.bf16.mxu0 0
    %4002 = vmatpush1.bf16.msra.mxu0 0
    %4003 = vmatprep.subr.bf16.mxu0 0
    %4004 = vmatpush1.bf16.msra.mxu0 0
    %4005 = vmatprep.subr.bf16.mxu0 0
    %4006 = vmatpush1.bf16.msra.mxu0 0
    %4007 = vmatprep.subr.bf16.mxu0 0
    %4008 = vmatpush1.bf16.msra.mxu0 0
    %4009 = vmatprep.mubr.bf16.mxu0 0
    %4010 = vmatmul.mubr.bf16.gmra.mrb[0].mxu0 %v3855
    %v4011 = vpop.f32.mrb[0].mxu0
    %v4012 = vadd.f32 %v3890, %v4011
    %v4013 = vpop.f32.mrb[0].mxu0
    %v4014 = vadd.f32 %v3894, %v4013
    %v4015 = vpop.f32.mrb[0].mxu0
    %v4016 = vadd.f32 %v3890, %v4015
    %v4017 = vpop.f32.mrb[0].mxu0
    %v4018 = vadd.f32 %v3894, %v4017
    %4019 = vmatprep.mubr.bf16.mxu0 0
    %4020 = vmatmul.mubr.bf16.gmra.mrb[0].mxu0 %v3856
    %v4021 = vpop.f32.mrb[0].mxu0
    %v4022 = vadd.f32 %v3890, %v4021
    %v4023 = vpop.f32.mrb[0].mxu0
    %v4024 = vadd.f32 %v3894, %v4023
    %v4025 = vpop.f32.mrb[0].mxu0
    %v4026 = vadd.f32 %v3890, %v4025
    %v4027 = vpop.f32.mrb[0].mxu0
    %v4028 = vadd.f32 %v3894, %v4027
    %4029 = vmatprep.mubr.bf16.mxu0 0
    %4030 = vmatmul.mubr.bf16.gmra.mrb[0].mxu0 %v3857
    %v4031 = vpop.f32.mrb[0].mxu0
    %v4032 = vadd.f32 %v3890, %v4031
    %v4033 = vpop.f32.mrb[0].mxu0
    %v4034 = vadd.f32 %v3894, %v4033
    %v4035 = vpop.f32.mrb[0].mxu0
    %v4036 = vadd.f32 %v3890, %v4035
    %v4037 = vpop.f32.mrb[0].mxu0
    %v4038 = vadd.f32 %v3894, %v4037
    %4039 = vmatprep.mubr.bf16.mxu0 0
    %4040 = vmatmul.mubr.bf16.gmra.mrb[0].mxu0 %v3858
    %v4041 = vpop.f32.mrb[0].mxu0
    %v4042 = vadd.f32 %v3890, %v4041
    %v4043 = vpop.f32.mrb[0].mxu0
    %v4044 = vadd.f32 %v3894, %v4043
    %v4045 = vpop.f32.mrb[0].mxu0
    %v4046 = vadd.f32 %v3890, %v4045
    %v4047 = vpop.f32.mrb[0].mxu0
    %v4048 = vadd.f32 %v3894, %v4047
    %4049 = vmatprep.mubr.bf16.mxu0 0
    %4050 = vmatmul.mubr.bf16.gmra.mrb[0].mxu0 %v3859
    %v4051 = vpop.f32.mrb[0].mxu0
    %v4052 = vadd.f32 %v3890, %v4051
    %v4053 = vpop.f32.mrb[0].mxu0
    %v4054 = vadd.f32 %v3894, %v4053
    %v4055 = vpop.f32.mrb[0].mxu0
    %v4056 = vadd.f32 %v3890, %v4055
    %v4057 = vpop.f32.mrb[0].mxu0
    %v4058 = vadd.f32 %v3894, %v4057
    %4059 = vmatprep.mubr.bf16.mxu0 0
    %4060 = vmatmul.mubr.bf16.gmra.mrb[0].mxu0 %v3860
    %v4061 = vpop.f32.mrb[0].mxu0
    %v4062 = vadd.f32 %v3890, %v4061
    %v4063 = vpop.f32.mrb[0].mxu0
    %v4064 = vadd.f32 %v3894, %v4063
    %v4065 = vpop.f32.mrb[0].mxu0
    %v4066 = vadd.f32 %v3890, %v4065
    %v4067 = vpop.f32.mrb[0].mxu0
    %v4068 = vadd.f32 %v3894, %v4067
    %4069 = vmatprep.mubr.bf16.mxu0 0
    %4070 = vmatmul.mubr.bf16.gmra.mrb[0].mxu0 %v3861
    %v4071 = vpop.f32.mrb[0].mxu0
    %v4072 = vadd.f32 %v3890, %v4071
    %v4073 = vpop.f32.mrb[0].mxu0
    %v4074 = vadd.f32 %v3894, %v4073
    %v4075 = vpop.f32.mrb[0].mxu0
    %v4076 = vadd.f32 %v3890, %v4075
    %v4077 = vpop.f32.mrb[0].mxu0
    %v4078 = vadd.f32 %v3894, %v4077
    %4079 = vmatprep.mubr.bf16.mxu0 0
    %4080 = vmatmul.mubr.bf16.gmra.mrb[0].mxu0 %v3862
    %v4081 = vpop.f32.mrb[0].mxu0
    %v4082 = vadd.f32 %v3890, %v4081
    %v4083 = vpop.f32.mrb[0].mxu0
    %v4084 = vadd.f32 %v3894, %v4083
    %v4085 = vpop.f32.mrb[0].mxu0
    %v4086 = vadd.f32 %v3890, %v4085
    %v4087 = vpop.f32.mrb[0].mxu0
    %v4088 = vadd.f32 %v3894, %v4087
    %4089 = vmatprep.mubr.bf16.mxu0 0
    %4090 = vmatmul.mubr.bf16.gmra.mrb[0].mxu0 %v3863
    %v4091 = vpop.f32.mrb[0].mxu0
    %v4092 = vadd.f32 %v3890, %v4091
    %v4093 = vpop.f32.mrb[0].mxu0
    %v4094 = vadd.f32 %v3894, %v4093
    %v4095 = vpop.f32.mrb[0].mxu0
    %v4096 = vadd.f32 %v3890, %v4095
    %v4097 = vpop.f32.mrb[0].mxu0
    %v4098 = vadd.f32 %v3894, %v4097
    %4099 = vmatprep.mubr.bf16.mxu0 0
    %4100 = vmatmul.mubr.bf16.gmra.mrb[0].mxu0 %v3864
    %v4101 = vpop.f32.mrb[0].mxu0
    %v4102 = vadd.f32 %v3890, %v4101
    %v4103 = vpop.f32.mrb[0].mxu0
    %v4104 = vadd.f32 %v3894, %v4103
    %v4105 = vpop.f32.mrb[0].mxu0
    %v4106 = vadd.f32 %v3890, %v4105
    %v4107 = vpop.f32.mrb[0].mxu0
    %v4108 = vadd.f32 %v3894, %v4107
    %4109 = vmatprep.mubr.bf16.mxu0 0
    %4110 = vmatmul.mubr.bf16.gmra.mrb[0].mxu0 %v3865
    %v4111 = vpop.f32.mrb[0].mxu0
    %v4112 = vadd.f32 %v3890, %v4111
    %v4113 = vpop.f32.mrb[0].mxu0
    %v4114 = vadd.f32 %v3894, %v4113
    %v4115 = vpop.f32.mrb[0].mxu0
    %v4116 = vadd.f32 %v3890, %v4115
    %v4117 = vpop.f32.mrb[0].mxu0
    %v4118 = vadd.f32 %v3894, %v4117
    %4119 = vmatprep.mubr.bf16.mxu0 0
    %4120 = vmatmul.mubr.bf16.gmra.mrb[0].mxu0 %v3866
    %v4121 = vpop.f32.mrb[0].mxu0
    %v4122 = vadd.f32 %v3890, %v4121
    %v4123 = vpop.f32.mrb[0].mxu0
    %v4124 = vadd.f32 %v3894, %v4123
    %v4125 = vpop.f32.mrb[0].mxu0
    %v4126 = vadd.f32 %v3890, %v4125
    %v4127 = vpop.f32.mrb[0].mxu0
    %v4128 = vadd.f32 %v3894, %v4127
    %4129 = vdwg.mxu0
    %v4130 = vadd.f32 %v2362, %v4012
    %v4131 = vadd.f32 %v2363, %v4016
    %v4132 = vadd.f32 %v2364, %v4022
    %v4133 = vadd.f32 %v2365, %v4026
    %v4134 = vadd.f32 %v2366, %v4032
    %v4135 = vadd.f32 %v2367, %v4036
    %v4136 = vadd.f32 %v2368, %v4042
    %v4137 = vadd.f32 %v2369, %v4046
    %v4138 = vadd.f32 %v2370, %v4052
    %v4139 = vadd.f32 %v2371, %v4056
    %v4140 = vadd.f32 %v2372, %v4062
    %v4141 = vadd.f32 %v2373, %v4066
    %v4142 = vadd.f32 %v2374, %v4072
    %v4143 = vadd.f32 %v2375, %v4076
    %v4144 = vadd.f32 %v2376, %v4082
    %v4145 = vadd.f32 %v2377, %v4086
    %v4146 = vadd.f32 %v2378, %v4092
    %v4147 = vadd.f32 %v2379, %v4096
    %v4148 = vadd.f32 %v2380, %v4102
    %v4149 = vadd.f32 %v2381, %v4106
    %v4150 = vadd.f32 %v2382, %v4112
    %v4151 = vadd.f32 %v2383, %v4116
    %v4152 = vadd.f32 %v2384, %v4122
    %v4153 = vadd.f32 %v2385, %v4126
    %v4154 = vmul.f32 %v4130, %v85
    %v4155 = vmul.f32 %v4131, %v90
    %v4156 = vmul.f32 %v4132, %v95
    %v4157 = vmul.f32 %v4133, %v100
    %v4158 = vmul.f32 %v4134, %v105
    %v4159 = vmul.f32 %v4135, %v110
    %v4160 = vmul.f32 %v4136, %v115
    %v4161 = vmul.f32 %v4137, %v120
    %v4162 = vmul.f32 %v4138, %v125
    %v4163 = vmul.f32 %v4139, %v130
    %v4164 = vmul.f32 %v4140, %v135
    %v4165 = vmul.f32 %v4141, %v140
    %v4166 = vmul.f32 %v4142, %v145
    %v4167 = vmul.f32 %v4143, %v150
    %v4168 = vmul.f32 %v4144, %v155
    %v4169 = vmul.f32 %v4145, %v160
    %v4170 = vmul.f32 %v4146, %v165
    %v4171 = vmul.f32 %v4147, %v170
    %v4172 = vmul.f32 %v4148, %v175
    %v4173 = vmul.f32 %v4149, %v180
    %v4174 = vmul.f32 %v4150, %v185
    %v4175 = vmul.f32 %v4151, %v190
    %v4176 = vmul.f32 %v4152, %v195
    %v4177 = vmul.f32 %v4153, %v200
    %v4178 = vadd.f32 %v2386, %v4014
    %v4179 = vadd.f32 %v2387, %v4018
    %v4180 = vadd.f32 %v2388, %v4024
    %v4181 = vadd.f32 %v2389, %v4028
    %v4182 = vadd.f32 %v2390, %v4034
    %v4183 = vadd.f32 %v2391, %v4038
    %v4184 = vadd.f32 %v2392, %v4044
    %v4185 = vadd.f32 %v2393, %v4048
    %v4186 = vadd.f32 %v2394, %v4054
    %v4187 = vadd.f32 %v2395, %v4058
    %v4188 = vadd.f32 %v2396, %v4064
    %v4189 = vadd.f32 %v2397, %v4068
    %v4190 = vadd.f32 %v2398, %v4074
    %v4191 = vadd.f32 %v2399, %v4078
    %v4192 = vadd.f32 %v2400, %v4084
    %v4193 = vadd.f32 %v2401, %v4088
    %v4194 = vadd.f32 %v2402, %v4094
    %v4195 = vadd.f32 %v2403, %v4098
    %v4196 = vadd.f32 %v2404, %v4104
    %v4197 = vadd.f32 %v2405, %v4108
    %v4198 = vadd.f32 %v2406, %v4114
    %v4199 = vadd.f32 %v2407, %v4118
    %v4200 = vadd.f32 %v2408, %v4124
    %v4201 = vadd.f32 %v2409, %v4128
    %v4202 = vpack.c.bf16 %v4155, %v4154
    %v4203 = vpack.c.bf16 %v4157, %v4156
    %v4204 = vpack.c.bf16 %v4159, %v4158
    %v4205 = vpack.c.bf16 %v4161, %v4160
    %v4206 = vpack.c.bf16 %v4163, %v4162
    %v4207 = vpack.c.bf16 %v4165, %v4164
    %v4208 = vpack.c.bf16 %v4167, %v4166
    %v4209 = vpack.c.bf16 %v4169, %v4168
    %v4210 = vpack.c.bf16 %v4171, %v4170
    %v4211 = vpack.c.bf16 %v4173, %v4172
    %v4212 = vpack.c.bf16 %v4175, %v4174
    %v4213 = vpack.c.bf16 %v4177, %v4176
    %4214 = vst [vmem:[#allocation2 + $0x8] sm:$0xff] %v4202
    %4215 = vst [vmem:[#allocation2 + $0x10] sm:$0xff] %v4203
    %4216 = vst [vmem:[#allocation2 + $0x18] sm:$0xff] %v4204
    %4217 = vst [vmem:[#allocation2 + $0x20] sm:$0xff] %v4205
    %4218 = vst [vmem:[#allocation2 + $0x28] sm:$0xff] %v4206
    %4219 = vst [vmem:[#allocation2 + $0x30] sm:$0xff] %v4207
    %4220 = vst [vmem:[#allocation2 + $0x38] sm:$0xff] %v4208
    %4221 = vst [vmem:[#allocation2 + $0x40] sm:$0xff] %v4209
    %4222 = vst [vmem:[#allocation2 + $0x48] sm:$0xff] %v4210
    %4223 = vst [vmem:[#allocation2 + $0x50] sm:$0xff] %v4211
    %4224 = vst [vmem:[#allocation2 + $0x58] sm:$0xff] %v4212
    %4225 = vst [vmem:[#allocation2 + $0x60] sm:$0xff] %v4213
    %v4226 = vld [vmem:[#allocation2] sm:$0xf0]
    %v4227 = vld [vmem:[#allocation2 + $0x8] sm:$0xff]
    %v4228 = vld [vmem:[#allocation2 + $0x10] sm:$0xff]
    %v4229 = vld [vmem:[#allocation2 + $0x18] sm:$0xff]
    %v4230 = vld [vmem:[#allocation2 + $0x20] sm:$0xff]
    %v4231 = vld [vmem:[#allocation2 + $0x28] sm:$0xff]
    %v4232 = vld [vmem:[#allocation2 + $0x30] sm:$0xff]
    %v4233 = vld [vmem:[#allocation2 + $0x38] sm:$0xff]
    %v4234 = vld [vmem:[#allocation2 + $0x40] sm:$0xff]
    %v4235 = vld [vmem:[#allocation2 + $0x48] sm:$0xff]
    %v4236 = vld [vmem:[#allocation2 + $0x50] sm:$0xff]
    %v4237 = vld [vmem:[#allocation2 + $0x58] sm:$0xff]
    %v4238 = vld [vmem:[#allocation2 + $0x60] sm:$0xf]
    %v4239 = vld [vmem:[#allocation2] sm:$0xc0]
    %v4240 = vld [vmem:[#allocation2 + $0x60] sm:$0x3f]
    %v4241 = vld [vmem:[#allocation2 + $0x60] sm:$0xff]
    %v4242 = vld [vmem:[#allocation2 + $0x8] sm:$0xfc]
    %v4243 = vld [vmem:[#allocation2 + $0x10] sm:$0xff]
    %v4244 = vld [vmem:[#allocation2 + $0x18] sm:$0xff]
    %v4245 = vld [vmem:[#allocation2 + $0x20] sm:$0xff]
    %v4246 = vld [vmem:[#allocation2 + $0x28] sm:$0xff]
    %v4247 = vld [vmem:[#allocation2 + $0x30] sm:$0xff]
    %v4248 = vld [vmem:[#allocation2 + $0x38] sm:$0xff]
    %v4249 = vld [vmem:[#allocation2 + $0x40] sm:$0xff]
    %v4250 = vld [vmem:[#allocation2 + $0x48] sm:$0xff]
    %v4251 = vld [vmem:[#allocation2 + $0x50] sm:$0xff]
    %v4252 = vld [vmem:[#allocation2 + $0x58] sm:$0xff]
    %v4253 = vld [vmem:[#allocation2 + $0x60] sm:$0xff]
    %v4254 = vld [vmem:[#allocation2 + $0x68] sm:$0x3]
    %v4255 = vld [vmem:[#allocation2 + $0x8] sm:$0xf0]
    %v4256 = vld [vmem:[#allocation2 + $0x68] sm:$0xf]
    %v4270 = vrot.slane %v4239, 2
    %v4271 = vrot.slane %v4227, 2
    %v4272 = vsel %vm780, %v4270, %v4271
    %v4273 = vrot.slane %v4228, 2
    %v4274 = vsel %vm780, %v4271, %v4273
    %v4275 = vrot.slane %v4229, 2
    %v4276 = vsel %vm780, %v4273, %v4275
    %v4277 = vrot.slane %v4230, 2
    %v4278 = vsel %vm780, %v4275, %v4277
    %v4279 = vrot.slane %v4231, 2
    %v4280 = vsel %vm780, %v4277, %v4279
    %v4281 = vrot.slane %v4232, 2
    %v4282 = vsel %vm780, %v4279, %v4281
    %v4283 = vrot.slane %v4233, 2
    %v4284 = vsel %vm780, %v4281, %v4283
    %v4285 = vrot.slane %v4234, 2
    %v4286 = vsel %vm780, %v4283, %v4285
    %v4287 = vrot.slane %v4235, 2
    %v4288 = vsel %vm780, %v4285, %v4287
    %v4289 = vrot.slane %v4236, 2
    %v4290 = vsel %vm780, %v4287, %v4289
    %v4291 = vrot.slane %v4237, 2
    %v4292 = vsel %vm780, %v4289, %v4291
    %v4293 = vrot.slane %v4240, 2
    %v4294 = vsel %vm780, %v4291, %v4293
    %v4296 = vrot.slane %v4227, 4
    %v4297 = vrot.slane %v4228, 4
    %v4298 = vsel %vm2568, %v4296, %v4297
    %v4299 = vrot.slane %v4229, 4
    %v4300 = vsel %vm2568, %v4297, %v4299
    %v4301 = vrot.slane %v4230, 4
    %v4302 = vsel %vm2568, %v4299, %v4301
    %v4303 = vrot.slane %v4231, 4
    %v4304 = vsel %vm2568, %v4301, %v4303
    %v4305 = vrot.slane %v4232, 4
    %v4306 = vsel %vm2568, %v4303, %v4305
    %v4307 = vrot.slane %v4233, 4
    %v4308 = vsel %vm2568, %v4305, %v4307
    %v4309 = vrot.slane %v4234, 4
    %v4310 = vsel %vm2568, %v4307, %v4309
    %v4311 = vrot.slane %v4235, 4
    %v4312 = vsel %vm2568, %v4309, %v4311
    %v4313 = vrot.slane %v4236, 4
    %v4314 = vsel %vm2568, %v4311, %v4313
    %v4315 = vrot.slane %v4237, 4
    %v4316 = vsel %vm2568, %v4313, %v4315
    %v4317 = vrot.slane %v4241, 4
    %v4318 = vsel %vm2568, %v4315, %v4317
    %v4332 = vrot.slane %v4242, 6
    %v4333 = vrot.slane %v4243, 6
    %v4334 = vsel %vm2690, %v4332, %v4333
    %v4335 = vrot.slane %v4244, 6
    %v4336 = vsel %vm2690, %v4333, %v4335
    %v4337 = vrot.slane %v4245, 6
    %v4338 = vsel %vm2690, %v4335, %v4337
    %v4339 = vrot.slane %v4246, 6
    %v4340 = vsel %vm2690, %v4337, %v4339
    %v4341 = vrot.slane %v4247, 6
    %v4342 = vsel %vm2690, %v4339, %v4341
    %v4343 = vrot.slane %v4248, 6
    %v4344 = vsel %vm2690, %v4341, %v4343
    %v4345 = vrot.slane %v4249, 6
    %v4346 = vsel %vm2690, %v4343, %v4345
    %v4347 = vrot.slane %v4250, 6
    %v4348 = vsel %vm2690, %v4345, %v4347
    %v4349 = vrot.slane %v4251, 6
    %v4350 = vsel %vm2690, %v4347, %v4349
    %v4351 = vrot.slane %v4252, 6
    %v4352 = vsel %vm2690, %v4349, %v4351
    %v4353 = vrot.slane %v4253, 6
    %v4354 = vsel %vm2690, %v4351, %v4353
    %v4355 = vrot.slane %v4254, 6
    %v4356 = vsel %vm2690, %v4353, %v4355
    %s4357 = scalar_lea.vmem [#allocation3], 1280
    %v4358 = vld [vmem:[%s4357] sm:$0xff]
    %v4359 = vld [vmem:[%s4357 + $0x8] sm:$0xff]
    %v4360 = vld [vmem:[%s4357 + $0x10] sm:$0xff]
    %v4361 = vld [vmem:[%s4357 + $0x18] sm:$0xff]
    %v4362 = vld [vmem:[%s4357 + $0x20] sm:$0xff]
    %v4363 = vld [vmem:[%s4357 + $0x28] sm:$0xff]
    %v4364 = vld [vmem:[%s4357 + $0x30] sm:$0xff]
    %v4365 = vld [vmem:[%s4357 + $0x38] sm:$0xff]
    %v4366 = vld [vmem:[%s4357 + $0x40] sm:$0xff]
    %v4367 = vld [vmem:[%s4357 + $0x48] sm:$0xff]
    %v4368 = vld [vmem:[%s4357 + $0x50] sm:$0xff]
    %v4369 = vld [vmem:[%s4357 + $0x58] sm:$0xff]
    %v4370 = vld [vmem:[%s4357 + $0x60] sm:$0xff]
    %v4371 = vld [vmem:[%s4357 + $0x68] sm:$0xff]
    %v4372 = vld [vmem:[%s4357 + $0x70] sm:$0xff]
    %v4373 = vld [vmem:[%s4357 + $0x78] sm:$0xff]
    %v4374 = vld [vmem:[%s4357 + $0x80] sm:$0xff]
    %v4375 = vld [vmem:[%s4357 + $0x88] sm:$0xff]
    %v4376 = vld [vmem:[%s4357 + $0x90] sm:$0xff]
    %v4377 = vld [vmem:[%s4357 + $0x98] sm:$0xff]
    %v4378 = vld [vmem:[%s4357 + $0xa0] sm:$0xff]
    %v4379 = vld [vmem:[%s4357 + $0xa8] sm:$0xff]
    %v4380 = vld [vmem:[%s4357 + $0xb0] sm:$0xff]
    %v4381 = vld [vmem:[%s4357 + $0xb8] sm:$0xff]
    %v4382 = vld [vmem:[%s4357 + $0xc0] sm:$0xff]
    %v4383 = vld [vmem:[%s4357 + $0xc8] sm:$0xff]
    %v4384 = vld [vmem:[%s4357 + $0xd0] sm:$0xff]
    %v4385 = vld [vmem:[%s4357 + $0xd8] sm:$0xff]
    %v4386 = vld [vmem:[%s4357 + $0xe0] sm:$0xff]
    %v4387 = vld [vmem:[%s4357 + $0xe8] sm:$0xff]
    %v4388 = vld [vmem:[%s4357 + $0xf0] sm:$0xff]
    %v4389 = vld [vmem:[%s4357 + $0xf8] sm:$0xff]
    %v4390 = vld [vmem:[%s4357 + $0x100] sm:$0xff]
    %v4391 = vld [vmem:[%s4357 + $0x108] sm:$0xff]
    %v4392 = vld [vmem:[%s4357 + $0x110] sm:$0xff]
    %v4393 = vld [vmem:[%s4357 + $0x118] sm:$0xff]
    %v4394 = vld [vmem:[%s4357 + $0x120] sm:$0xff]
    %v4395 = vld [vmem:[%s4357 + $0x128] sm:$0xff]
    %v4396 = vld [vmem:[%s4357 + $0x130] sm:$0xff]
    %v4397 = vld [vmem:[%s4357 + $0x138] sm:$0xff]
    %v4398 = vld [vmem:[%s4357 + $0x140] sm:$0xff]
    %v4399 = vld [vmem:[%s4357 + $0x148] sm:$0xff]
    %v4400 = vld [vmem:[%s4357 + $0x150] sm:$0xff]
    %v4401 = vld [vmem:[%s4357 + $0x158] sm:$0xff]
    %v4402 = vld [vmem:[%s4357 + $0x160] sm:$0xff]
    %v4403 = vld [vmem:[%s4357 + $0x168] sm:$0xff]
    %v4404 = vld [vmem:[%s4357 + $0x170] sm:$0xff]
    %v4405 = vld [vmem:[%s4357 + $0x178] sm:$0xff]
    %v4406 = vld [vmem:[%s4357 + $0x180] sm:$0xff]
    %v4407 = vld [vmem:[%s4357 + $0x188] sm:$0xff]
    %v4408 = vld [vmem:[%s4357 + $0x190] sm:$0xff]
    %v4409 = vld [vmem:[%s4357 + $0x198] sm:$0xff]
    %v4410 = vld [vmem:[%s4357 + $0x1a0] sm:$0xff]
    %v4411 = vld [vmem:[%s4357 + $0x1a8] sm:$0xff]
    %v4412 = vld [vmem:[%s4357 + $0x1b0] sm:$0xff]
    %v4413 = vld [vmem:[%s4357 + $0x1b8] sm:$0xff]
    %v4414 = vld [vmem:[%s4357 + $0x1c0] sm:$0xff]
    %v4415 = vld [vmem:[%s4357 + $0x1c8] sm:$0xff]
    %v4416 = vld [vmem:[%s4357 + $0x1d0] sm:$0xff]
    %v4417 = vld [vmem:[%s4357 + $0x1d8] sm:$0xff]
    %v4418 = vld [vmem:[%s4357 + $0x1e0] sm:$0xff]
    %v4419 = vld [vmem:[%s4357 + $0x1e8] sm:$0xff]
    %v4420 = vld [vmem:[%s4357 + $0x1f0] sm:$0xff]
    %v4421 = vld [vmem:[%s4357 + $0x1f8] sm:$0xff]
    %v4422 = vld [vmem:[%s4357 + $0x200] sm:$0xff]
    %v4423 = vld [vmem:[%s4357 + $0x208] sm:$0xff]
    %v4424 = vld [vmem:[%s4357 + $0x210] sm:$0xff]
    %v4425 = vld [vmem:[%s4357 + $0x218] sm:$0xff]
    %v4426 = vld [vmem:[%s4357 + $0x220] sm:$0xff]
    %v4427 = vld [vmem:[%s4357 + $0x228] sm:$0xff]
    %v4428 = vld [vmem:[%s4357 + $0x230] sm:$0xff]
    %v4429 = vld [vmem:[%s4357 + $0x238] sm:$0xff]
    %v4430 = vld [vmem:[%s4357 + $0x240] sm:$0xff]
    %v4431 = vld [vmem:[%s4357 + $0x248] sm:$0xff]
    %v4432 = vld [vmem:[%s4357 + $0x250] sm:$0xff]
    %v4433 = vld [vmem:[%s4357 + $0x258] sm:$0xff]
    %v4434 = vld [vmem:[%s4357 + $0x260] sm:$0xff]
    %v4435 = vld [vmem:[%s4357 + $0x268] sm:$0xff]
    %v4436 = vld [vmem:[%s4357 + $0x270] sm:$0xff]
    %v4437 = vld [vmem:[%s4357 + $0x278] sm:$0xff]
    %s4438 = scalar_lea.vmem %s5, 4
    %v4439 = vld [vmem:[%s4438] sm:$0x3]
    %v4441 = vlaneseq
    %v4442 = vshrl.u32 %v4441, 7
    %v4443 = vsub.s32 0, %v4442
    %v4444 = vrot.slane %v4439, %v4443
    %v4445 = vlaneseq
    %v4446 = vshrl.u32 %v4445, 7
    %v4447 = vsub.s32 1, %v4446
    %v4448 = vrot.slane %v4439, %v4447
    %v4455 = vrot.slane %v4226, 4
    %v4456 = vsel %vm2568, %v4455, %v4296
    %v4457 = vrot.slane %v4272, 4
    %v4458 = vrot.slane %v4274, 4
    %v4459 = vsel %vm2568, %v4457, %v4458
    %v4460 = vrot.slane %v4296, 4
    %v4461 = vrot.slane %v4298, 4
    %v4462 = vsel %vm2568, %v4460, %v4461
    %v4463 = vrot.slane %v4332, 4
    %v4464 = vrot.slane %v4334, 4
    %v4465 = vsel %vm2568, %v4463, %v4464
    %v4466 = vrot.slane %v4255, 4
    %v4467 = vrot.slane %v4243, 4
    %v4468 = vsel %vm2568, %v4466, %v4467
    %v4469 = vrot.slane %v4276, 4
    %v4470 = vsel %vm2568, %v4458, %v4469
    %v4471 = vrot.slane %v4300, 4
    %v4472 = vsel %vm2568, %v4461, %v4471
    %v4473 = vrot.slane %v4336, 4
    %v4474 = vsel %vm2568, %v4464, %v4473
    %v4475 = vrot.slane %v4244, 4
    %v4476 = vsel %vm2568, %v4467, %v4475
    %v4477 = vrot.slane %v4278, 4
    %v4478 = vsel %vm2568, %v4469, %v4477
    %v4479 = vrot.slane %v4302, 4
    %v4480 = vsel %vm2568, %v4471, %v4479
    %v4481 = vrot.slane %v4338, 4
    %v4482 = vsel %vm2568, %v4473, %v4481
    %v4483 = vrot.slane %v4245, 4
    %v4484 = vsel %vm2568, %v4475, %v4483
    %v4485 = vrot.slane %v4280, 4
    %v4486 = vsel %vm2568, %v4477, %v4485
    %v4487 = vrot.slane %v4304, 4
    %v4488 = vsel %vm2568, %v4479, %v4487
    %v4489 = vrot.slane %v4340, 4
    %v4490 = vsel %vm2568, %v4481, %v4489
    %v4491 = vrot.slane %v4246, 4
    %v4492 = vsel %vm2568, %v4483, %v4491
    %v4493 = vrot.slane %v4282, 4
    %v4494 = vsel %vm2568, %v4485, %v4493
    %v4495 = vrot.slane %v4306, 4
    %v4496 = vsel %vm2568, %v4487, %v4495
    %v4497 = vrot.slane %v4342, 4
    %v4498 = vsel %vm2568, %v4489, %v4497
    %v4499 = vrot.slane %v4247, 4
    %v4500 = vsel %vm2568, %v4491, %v4499
    %v4501 = vrot.slane %v4284, 4
    %v4502 = vsel %vm2568, %v4493, %v4501
    %v4503 = vrot.slane %v4308, 4
    %v4504 = vsel %vm2568, %v4495, %v4503
    %v4505 = vrot.slane %v4344, 4
    %v4506 = vsel %vm2568, %v4497, %v4505
    %v4507 = vrot.slane %v4248, 4
    %v4508 = vsel %vm2568, %v4499, %v4507
    %v4509 = vrot.slane %v4286, 4
    %v4510 = vsel %vm2568, %v4501, %v4509
    %v4511 = vrot.slane %v4310, 4
    %v4512 = vsel %vm2568, %v4503, %v4511
    %v4513 = vrot.slane %v4346, 4
    %v4514 = vsel %vm2568, %v4505, %v4513
    %v4515 = vrot.slane %v4249, 4
    %v4516 = vsel %vm2568, %v4507, %v4515
    %v4517 = vrot.slane %v4288, 4
    %v4518 = vsel %vm2568, %v4509, %v4517
    %v4519 = vrot.slane %v4312, 4
    %v4520 = vsel %vm2568, %v4511, %v4519
    %v4521 = vrot.slane %v4348, 4
    %v4522 = vsel %vm2568, %v4513, %v4521
    %v4523 = vrot.slane %v4250, 4
    %v4524 = vsel %vm2568, %v4515, %v4523
    %v4525 = vrot.slane %v4290, 4
    %v4526 = vsel %vm2568, %v4517, %v4525
    %v4527 = vrot.slane %v4314, 4
    %v4528 = vsel %vm2568, %v4519, %v4527
    %v4529 = vrot.slane %v4350, 4
    %v4530 = vsel %vm2568, %v4521, %v4529
    %v4531 = vrot.slane %v4251, 4
    %v4532 = vsel %vm2568, %v4523, %v4531
    %v4533 = vrot.slane %v4292, 4
    %v4534 = vsel %vm2568, %v4525, %v4533
    %v4535 = vrot.slane %v4316, 4
    %v4536 = vsel %vm2568, %v4527, %v4535
    %v4537 = vrot.slane %v4352, 4
    %v4538 = vsel %vm2568, %v4529, %v4537
    %v4539 = vrot.slane %v4252, 4
    %v4540 = vsel %vm2568, %v4531, %v4539
    %v4541 = vrot.slane %v4294, 4
    %v4542 = vsel %vm2568, %v4533, %v4541
    %v4543 = vrot.slane %v4318, 4
    %v4544 = vsel %vm2568, %v4535, %v4543
    %v4545 = vrot.slane %v4354, 4
    %v4546 = vsel %vm2568, %v4537, %v4545
    %v4547 = vrot.slane %v4253, 4
    %v4548 = vsel %vm2568, %v4539, %v4547
    %v4549 = vrot.slane %v4238, 4
    %v4550 = vsel %vm2568, %v4315, %v4549
    %v4551 = vrot.slane %v4293, 4
    %v4552 = vsel %vm2568, %v4541, %v4551
    %v4553 = vrot.slane %v4317, 4
    %v4554 = vsel %vm2568, %v4543, %v4553
    %v4555 = vrot.slane %v4356, 4
    %v4556 = vsel %vm2568, %v4545, %v4555
    %v4557 = vrot.slane %v4256, 4
    %v4558 = vsel %vm2568, %v4547, %v4557
    %v4699 = vunpack.c.l.b16 %v4358
    %v4700 = vunpack.c.h.b16 %v4358
    %v4701 = vunpack.c.l.b16 %v4359
    %v4702 = vunpack.c.h.b16 %v4359
    %v4703 = vunpack.c.l.b16 %v4360
    %v4704 = vunpack.c.h.b16 %v4360
    %v4705 = vunpack.c.l.b16 %v4361
    %v4706 = vunpack.c.h.b16 %v4361
    %v4707 = vunpack.c.l.b16 %v4362
    %v4708 = vunpack.c.h.b16 %v4362
    %v4709 = vunpack.c.l.b16 %v4363
    %v4710 = vunpack.c.h.b16 %v4363
    %v4711 = vunpack.c.l.b16 %v4364
    %v4712 = vunpack.c.h.b16 %v4364
    %v4713 = vunpack.c.l.b16 %v4365
    %v4714 = vunpack.c.h.b16 %v4365
    %v4715 = vunpack.c.l.b16 %v4366
    %v4716 = vunpack.c.h.b16 %v4366
    %v4717 = vunpack.c.l.b16 %v4367
    %v4718 = vunpack.c.h.b16 %v4367
    %v4719 = vunpack.c.l.b16 %v4368
    %v4720 = vunpack.c.h.b16 %v4368
    %v4721 = vunpack.c.l.b16 %v4369
    %v4722 = vunpack.c.h.b16 %v4369
    %v4723 = vunpack.c.l.b16 %v4370
    %v4724 = vunpack.c.h.b16 %v4370
    %v4725 = vunpack.c.l.b16 %v4371
    %v4726 = vunpack.c.h.b16 %v4371
    %v4727 = vunpack.c.l.b16 %v4372
    %v4728 = vunpack.c.h.b16 %v4372
    %v4729 = vunpack.c.l.b16 %v4373
    %v4730 = vunpack.c.h.b16 %v4373
    %v4731 = vunpack.c.l.b16 %v4374
    %v4732 = vunpack.c.h.b16 %v4374
    %v4733 = vunpack.c.l.b16 %v4375
    %v4734 = vunpack.c.h.b16 %v4375
    %v4735 = vunpack.c.l.b16 %v4376
    %v4736 = vunpack.c.h.b16 %v4376
    %v4737 = vunpack.c.l.b16 %v4377
    %v4738 = vunpack.c.h.b16 %v4377
    %v4739 = vunpack.c.l.b16 %v4378
    %v4740 = vunpack.c.h.b16 %v4378
    %v4741 = vunpack.c.l.b16 %v4379
    %v4742 = vunpack.c.h.b16 %v4379
    %v4743 = vunpack.c.l.b16 %v4380
    %v4744 = vunpack.c.h.b16 %v4380
    %v4745 = vunpack.c.l.b16 %v4381
    %v4746 = vunpack.c.h.b16 %v4381
    %v4747 = vunpack.c.l.b16 %v4382
    %v4748 = vunpack.c.h.b16 %v4382
    %v4749 = vunpack.c.l.b16 %v4383
    %v4750 = vunpack.c.h.b16 %v4383
    %v4751 = vunpack.c.l.b16 %v4384
    %v4752 = vunpack.c.h.b16 %v4384
    %v4753 = vunpack.c.l.b16 %v4385
    %v4754 = vunpack.c.h.b16 %v4385
    %v4755 = vunpack.c.l.b16 %v4386
    %v4756 = vunpack.c.h.b16 %v4386
    %v4757 = vunpack.c.l.b16 %v4387
    %v4758 = vunpack.c.h.b16 %v4387
    %v4759 = vunpack.c.l.b16 %v4388
    %v4760 = vunpack.c.h.b16 %v4388
    %v4761 = vunpack.c.l.b16 %v4389
    %v4762 = vunpack.c.h.b16 %v4389
    %v4763 = vunpack.c.l.b16 %v4390
    %v4764 = vunpack.c.h.b16 %v4390
    %v4765 = vunpack.c.l.b16 %v4391
    %v4766 = vunpack.c.h.b16 %v4391
    %v4767 = vunpack.c.l.b16 %v4392
    %v4768 = vunpack.c.h.b16 %v4392
    %v4769 = vunpack.c.l.b16 %v4393
    %v4770 = vunpack.c.h.b16 %v4393
    %v4771 = vunpack.c.l.b16 %v4394
    %v4772 = vunpack.c.h.b16 %v4394
    %v4773 = vunpack.c.l.b16 %v4395
    %v4774 = vunpack.c.h.b16 %v4395
    %v4775 = vunpack.c.l.b16 %v4396
    %v4776 = vunpack.c.h.b16 %v4396
    %v4777 = vunpack.c.l.b16 %v4397
    %v4778 = vunpack.c.h.b16 %v4397
    %v4779 = vunpack.c.l.b16 %v4398
    %v4780 = vunpack.c.h.b16 %v4398
    %v4781 = vunpack.c.l.b16 %v4399
    %v4782 = vunpack.c.h.b16 %v4399
    %v4783 = vunpack.c.l.b16 %v4400
    %v4784 = vunpack.c.h.b16 %v4400
    %v4785 = vunpack.c.l.b16 %v4401
    %v4786 = vunpack.c.h.b16 %v4401
    %v4787 = vunpack.c.l.b16 %v4402
    %v4788 = vunpack.c.h.b16 %v4402
    %v4789 = vunpack.c.l.b16 %v4403
    %v4790 = vunpack.c.h.b16 %v4403
    %v4791 = vunpack.c.l.b16 %v4404
    %v4792 = vunpack.c.h.b16 %v4404
    %v4793 = vunpack.c.l.b16 %v4405
    %v4794 = vunpack.c.h.b16 %v4405
    %v4795 = vunpack.c.l.b16 %v4406
    %v4796 = vunpack.c.h.b16 %v4406
    %v4797 = vunpack.c.l.b16 %v4407
    %v4798 = vunpack.c.h.b16 %v4407
    %v4799 = vunpack.c.l.b16 %v4408
    %v4800 = vunpack.c.h.b16 %v4408
    %v4801 = vunpack.c.l.b16 %v4409
    %v4802 = vunpack.c.h.b16 %v4409
    %v4803 = vunpack.c.l.b16 %v4410
    %v4804 = vunpack.c.h.b16 %v4410
    %v4805 = vunpack.c.l.b16 %v4411
    %v4806 = vunpack.c.h.b16 %v4411
    %v4807 = vunpack.c.l.b16 %v4412
    %v4808 = vunpack.c.h.b16 %v4412
    %v4809 = vunpack.c.l.b16 %v4413
    %v4810 = vunpack.c.h.b16 %v4413
    %v4811 = vunpack.c.l.b16 %v4414
    %v4812 = vunpack.c.h.b16 %v4414
    %v4813 = vunpack.c.l.b16 %v4415
    %v4814 = vunpack.c.h.b16 %v4415
    %v4815 = vunpack.c.l.b16 %v4416
    %v4816 = vunpack.c.h.b16 %v4416
    %v4817 = vunpack.c.l.b16 %v4417
    %v4818 = vunpack.c.h.b16 %v4417
    %v4819 = vunpack.c.l.b16 %v4418
    %v4820 = vunpack.c.h.b16 %v4418
    %v4821 = vunpack.c.l.b16 %v4419
    %v4822 = vunpack.c.h.b16 %v4419
    %v4823 = vunpack.c.l.b16 %v4420
    %v4824 = vunpack.c.h.b16 %v4420
    %v4825 = vunpack.c.l.b16 %v4421
    %v4826 = vunpack.c.h.b16 %v4421
    %v4827 = vunpack.c.l.b16 %v4422
    %v4828 = vunpack.c.h.b16 %v4422
    %v4829 = vunpack.c.l.b16 %v4423
    %v4830 = vunpack.c.h.b16 %v4423
    %v4831 = vunpack.c.l.b16 %v4424
    %v4832 = vunpack.c.h.b16 %v4424
    %v4833 = vunpack.c.l.b16 %v4425
    %v4834 = vunpack.c.h.b16 %v4425
    %v4835 = vunpack.c.l.b16 %v4426
    %v4836 = vunpack.c.h.b16 %v4426
    %v4837 = vunpack.c.l.b16 %v4427
    %v4838 = vunpack.c.h.b16 %v4427
    %v4839 = vunpack.c.l.b16 %v4428
    %v4840 = vunpack.c.h.b16 %v4428
    %v4841 = vunpack.c.l.b16 %v4429
    %v4842 = vunpack.c.h.b16 %v4429
    %v4843 = vunpack.c.l.b16 %v4430
    %v4844 = vunpack.c.h.b16 %v4430
    %v4845 = vunpack.c.l.b16 %v4431
    %v4846 = vunpack.c.h.b16 %v4431
    %v4847 = vunpack.c.l.b16 %v4432
    %v4848 = vunpack.c.h.b16 %v4432
    %v4849 = vunpack.c.l.b16 %v4433
    %v4850 = vunpack.c.h.b16 %v4433
    %v4851 = vunpack.c.l.b16 %v4434
    %v4852 = vunpack.c.h.b16 %v4434
    %v4853 = vunpack.c.l.b16 %v4435
    %v4854 = vunpack.c.h.b16 %v4435
    %v4855 = vunpack.c.l.b16 %v4436
    %v4856 = vunpack.c.h.b16 %v4436
    %v4857 = vunpack.c.l.b16 %v4437
    %v4858 = vunpack.c.h.b16 %v4437
    %v4859 = vpack.c.b16 %v4701, %v4699
    %v4860 = vpack.c.b16 %v4702, %v4700
    %v4861 = vpack.c.b16 %v4705, %v4703
    %v4862 = vpack.c.b16 %v4706, %v4704
    %v4863 = vpack.c.b16 %v4709, %v4707
    %v4864 = vpack.c.b16 %v4710, %v4708
    %v4865 = vpack.c.b16 %v4713, %v4711
    %v4866 = vpack.c.b16 %v4714, %v4712
    %v4867 = vpack.c.b16 %v4717, %v4715
    %v4868 = vpack.c.b16 %v4718, %v4716
    %v4869 = vpack.c.b16 %v4721, %v4719
    %v4870 = vpack.c.b16 %v4722, %v4720
    %v4871 = vpack.c.b16 %v4725, %v4723
    %v4872 = vpack.c.b16 %v4726, %v4724
    %v4873 = vpack.c.b16 %v4729, %v4727
    %v4874 = vpack.c.b16 %v4730, %v4728
    %v4875 = vpack.c.b16 %v4733, %v4731
    %v4876 = vpack.c.b16 %v4734, %v4732
    %v4877 = vpack.c.b16 %v4737, %v4735
    %v4878 = vpack.c.b16 %v4738, %v4736
    %v4879 = vpack.c.b16 %v4741, %v4739
    %v4880 = vpack.c.b16 %v4742, %v4740
    %v4881 = vpack.c.b16 %v4745, %v4743
    %v4882 = vpack.c.b16 %v4746, %v4744
    %v4883 = vpack.c.b16 %v4749, %v4747
    %v4884 = vpack.c.b16 %v4750, %v4748
    %v4885 = vpack.c.b16 %v4753, %v4751
    %v4886 = vpack.c.b16 %v4754, %v4752
    %v4887 = vpack.c.b16 %v4757, %v4755
    %v4888 = vpack.c.b16 %v4758, %v4756
    %v4889 = vpack.c.b16 %v4761, %v4759
    %v4890 = vpack.c.b16 %v4762, %v4760
    %v4891 = vpack.c.b16 %v4765, %v4763
    %v4892 = vpack.c.b16 %v4766, %v4764
    %v4893 = vpack.c.b16 %v4769, %v4767
    %v4894 = vpack.c.b16 %v4770, %v4768
    %v4895 = vpack.c.b16 %v4773, %v4771
    %v4896 = vpack.c.b16 %v4774, %v4772
    %v4897 = vpack.c.b16 %v4777, %v4775
    %v4898 = vpack.c.b16 %v4778, %v4776
    %v4899 = vpack.c.b16 %v4781, %v4779
    %v4900 = vpack.c.b16 %v4782, %v4780
    %v4901 = vpack.c.b16 %v4785, %v4783
    %v4902 = vpack.c.b16 %v4786, %v4784
    %v4903 = vpack.c.b16 %v4789, %v4787
    %v4904 = vpack.c.b16 %v4790, %v4788
    %v4905 = vpack.c.b16 %v4793, %v4791
    %v4906 = vpack.c.b16 %v4794, %v4792
    %v4907 = vpack.c.b16 %v4797, %v4795
    %v4908 = vpack.c.b16 %v4798, %v4796
    %v4909 = vpack.c.b16 %v4801, %v4799
    %v4910 = vpack.c.b16 %v4802, %v4800
    %v4911 = vpack.c.b16 %v4805, %v4803
    %v4912 = vpack.c.b16 %v4806, %v4804
    %v4913 = vpack.c.b16 %v4809, %v4807
    %v4914 = vpack.c.b16 %v4810, %v4808
    %v4915 = vpack.c.b16 %v4813, %v4811
    %v4916 = vpack.c.b16 %v4814, %v4812
    %v4917 = vpack.c.b16 %v4817, %v4815
    %v4918 = vpack.c.b16 %v4818, %v4816
    %v4919 = vpack.c.b16 %v4821, %v4819
    %v4920 = vpack.c.b16 %v4822, %v4820
    %v4921 = vpack.c.b16 %v4825, %v4823
    %v4922 = vpack.c.b16 %v4826, %v4824
    %v4923 = vpack.c.b16 %v4829, %v4827
    %v4924 = vpack.c.b16 %v4830, %v4828
    %v4925 = vpack.c.b16 %v4833, %v4831
    %v4926 = vpack.c.b16 %v4834, %v4832
    %v4927 = vpack.c.b16 %v4837, %v4835
    %v4928 = vpack.c.b16 %v4838, %v4836
    %v4929 = vpack.c.b16 %v4841, %v4839
    %v4930 = vpack.c.b16 %v4842, %v4840
    %v4931 = vpack.c.b16 %v4845, %v4843
    %v4932 = vpack.c.b16 %v4846, %v4844
    %v4933 = vpack.c.b16 %v4849, %v4847
    %v4934 = vpack.c.b16 %v4850, %v4848
    %v4935 = vpack.c.b16 %v4853, %v4851
    %v4936 = vpack.c.b16 %v4854, %v4852
    %v4937 = vpack.c.b16 %v4857, %v4855
    %v4938 = vpack.c.b16 %v4858, %v4856
    %5019 = vmatprep.subr.bf16.mxu0 %v4860
    %5020 = vmatpush1.bf16.msra.mxu0 %v4859
    %5021 = vmatprep.subr.bf16.mxu0 %v4862
    %5022 = vmatpush1.bf16.msra.mxu0 %v4861
    %5023 = vmatprep.subr.bf16.mxu0 %v4864
    %5024 = vmatpush1.bf16.msra.mxu0 %v4863
    %5025 = vmatprep.subr.bf16.mxu0 %v4866
    %5026 = vmatpush1.bf16.msra.mxu0 %v4865
    %5027 = vmatprep.subr.bf16.mxu0 %v4868
    %5028 = vmatpush1.bf16.msra.mxu0 %v4867
    %5029 = vmatprep.subr.bf16.mxu0 %v4870
    %5030 = vmatpush1.bf16.msra.mxu0 %v4869
    %5031 = vmatprep.subr.bf16.mxu0 %v4872
    %5032 = vmatpush1.bf16.msra.mxu0 %v4871
    %5033 = vmatprep.subr.bf16.mxu0 %v4874
    %5034 = vmatpush1.bf16.msra.mxu0 %v4873
    %5035 = vmatprep.subr.bf16.mxu0 %v4876
    %5036 = vmatpush1.bf16.msra.mxu0 %v4875
    %5037 = vmatprep.subr.bf16.mxu0 %v4878
    %5038 = vmatpush1.bf16.msra.mxu0 %v4877
    %5039 = vmatprep.subr.bf16.mxu0 %v4880
    %5040 = vmatpush1.bf16.msra.mxu0 %v4879
    %5041 = vmatprep.subr.bf16.mxu0 %v4882
    %5042 = vmatpush1.bf16.msra.mxu0 %v4881
    %5043 = vmatprep.subr.bf16.mxu0 %v4884
    %5044 = vmatpush1.bf16.msra.mxu0 %v4883
    %5045 = vmatprep.subr.bf16.mxu0 %v4886
    %5046 = vmatpush1.bf16.msra.mxu0 %v4885
    %5047 = vmatprep.subr.bf16.mxu0 %v4888
    %5048 = vmatpush1.bf16.msra.mxu0 %v4887
    %5049 = vmatprep.subr.bf16.mxu0 %v4890
    %5050 = vmatpush1.bf16.msra.mxu0 %v4889
    %5051 = vmatprep.mubr.bf16.mxu0 %v4459
    %5052 = vmatmul.mubr.bf16.gmra.mrb[0].mxu0 %v4456
    %v5053 = vpop.f32.mrb[0].mxu0
    %v5054 = vadd.f32 %v4444, %v5053
    %v5055 = vpop.f32.mrb[0].mxu0
    %v5056 = vadd.f32 %v4448, %v5055
    %v5057 = vpop.f32.mrb[0].mxu0
    %v5058 = vadd.f32 %v4444, %v5057
    %v5059 = vpop.f32.mrb[0].mxu0
    %v5060 = vadd.f32 %v4448, %v5059
    %5061 = vmatprep.mubr.bf16.mxu0 %v4470
    %5062 = vmatmul.mubr.bf16.gmra.mrb[0].mxu0 %v4298
    %v5063 = vpop.f32.mrb[0].mxu0
    %v5064 = vadd.f32 %v4444, %v5063
    %v5065 = vpop.f32.mrb[0].mxu0
    %v5066 = vadd.f32 %v4448, %v5065
    %v5067 = vpop.f32.mrb[0].mxu0
    %v5068 = vadd.f32 %v4444, %v5067
    %v5069 = vpop.f32.mrb[0].mxu0
    %v5070 = vadd.f32 %v4448, %v5069
    %5071 = vmatprep.mubr.bf16.mxu0 %v4478
    %5072 = vmatmul.mubr.bf16.gmra.mrb[0].mxu0 %v4300
    %v5073 = vpop.f32.mrb[0].mxu0
    %v5074 = vadd.f32 %v4444, %v5073
    %v5075 = vpop.f32.mrb[0].mxu0
    %v5076 = vadd.f32 %v4448, %v5075
    %v5077 = vpop.f32.mrb[0].mxu0
    %v5078 = vadd.f32 %v4444, %v5077
    %v5079 = vpop.f32.mrb[0].mxu0
    %v5080 = vadd.f32 %v4448, %v5079
    %5081 = vmatprep.mubr.bf16.mxu0 %v4486
    %5082 = vmatmul.mubr.bf16.gmra.mrb[0].mxu0 %v4302
    %v5083 = vpop.f32.mrb[0].mxu0
    %v5084 = vadd.f32 %v4444, %v5083
    %v5085 = vpop.f32.mrb[0].mxu0
    %v5086 = vadd.f32 %v4448, %v5085
    %v5087 = vpop.f32.mrb[0].mxu0
    %v5088 = vadd.f32 %v4444, %v5087
    %v5089 = vpop.f32.mrb[0].mxu0
    %v5090 = vadd.f32 %v4448, %v5089
    %5091 = vmatprep.mubr.bf16.mxu0 %v4494
    %5092 = vmatmul.mubr.bf16.gmra.mrb[0].mxu0 %v4304
    %v5093 = vpop.f32.mrb[0].mxu0
    %v5094 = vadd.f32 %v4444, %v5093
    %v5095 = vpop.f32.mrb[0].mxu0
    %v5096 = vadd.f32 %v4448, %v5095
    %v5097 = vpop.f32.mrb[0].mxu0
    %v5098 = vadd.f32 %v4444, %v5097
    %v5099 = vpop.f32.mrb[0].mxu0
    %v5100 = vadd.f32 %v4448, %v5099
    %5101 = vmatprep.mubr.bf16.mxu0 %v4502
    %5102 = vmatmul.mubr.bf16.gmra.mrb[0].mxu0 %v4306
    %v5103 = vpop.f32.mrb[0].mxu0
    %v5104 = vadd.f32 %v4444, %v5103
    %v5105 = vpop.f32.mrb[0].mxu0
    %v5106 = vadd.f32 %v4448, %v5105
    %v5107 = vpop.f32.mrb[0].mxu0
    %v5108 = vadd.f32 %v4444, %v5107
    %v5109 = vpop.f32.mrb[0].mxu0
    %v5110 = vadd.f32 %v4448, %v5109
    %5111 = vmatprep.mubr.bf16.mxu0 %v4510
    %5112 = vmatmul.mubr.bf16.gmra.mrb[0].mxu0 %v4308
    %v5113 = vpop.f32.mrb[0].mxu0
    %v5114 = vadd.f32 %v4444, %v5113
    %v5115 = vpop.f32.mrb[0].mxu0
    %v5116 = vadd.f32 %v4448, %v5115
    %v5117 = vpop.f32.mrb[0].mxu0
    %v5118 = vadd.f32 %v4444, %v5117
    %v5119 = vpop.f32.mrb[0].mxu0
    %v5120 = vadd.f32 %v4448, %v5119
    %5121 = vmatprep.mubr.bf16.mxu0 %v4518
    %5122 = vmatmul.mubr.bf16.gmra.mrb[0].mxu0 %v4310
    %v5123 = vpop.f32.mrb[0].mxu0
    %v5124 = vadd.f32 %v4444, %v5123
    %v5125 = vpop.f32.mrb[0].mxu0
    %v5126 = vadd.f32 %v4448, %v5125
    %v5127 = vpop.f32.mrb[0].mxu0
    %v5128 = vadd.f32 %v4444, %v5127
    %v5129 = vpop.f32.mrb[0].mxu0
    %v5130 = vadd.f32 %v4448, %v5129
    %5131 = vmatprep.mubr.bf16.mxu0 %v4526
    %5132 = vmatmul.mubr.bf16.gmra.mrb[0].mxu0 %v4312
    %v5133 = vpop.f32.mrb[0].mxu0
    %v5134 = vadd.f32 %v4444, %v5133
    %v5135 = vpop.f32.mrb[0].mxu0
    %v5136 = vadd.f32 %v4448, %v5135
    %v5137 = vpop.f32.mrb[0].mxu0
    %v5138 = vadd.f32 %v4444, %v5137
    %v5139 = vpop.f32.mrb[0].mxu0
    %v5140 = vadd.f32 %v4448, %v5139
    %5141 = vmatprep.mubr.bf16.mxu0 %v4534
    %5142 = vmatmul.mubr.bf16.gmra.mrb[0].mxu0 %v4314
    %v5143 = vpop.f32.mrb[0].mxu0
    %v5144 = vadd.f32 %v4444, %v5143
    %v5145 = vpop.f32.mrb[0].mxu0
    %v5146 = vadd.f32 %v4448, %v5145
    %v5147 = vpop.f32.mrb[0].mxu0
    %v5148 = vadd.f32 %v4444, %v5147
    %v5149 = vpop.f32.mrb[0].mxu0
    %v5150 = vadd.f32 %v4448, %v5149
    %5151 = vmatprep.mubr.bf16.mxu0 %v4542
    %5152 = vmatmul.mubr.bf16.gmra.mrb[0].mxu0 %v4316
    %v5153 = vpop.f32.mrb[0].mxu0
    %v5154 = vadd.f32 %v4444, %v5153
    %v5155 = vpop.f32.mrb[0].mxu0
    %v5156 = vadd.f32 %v4448, %v5155
    %v5157 = vpop.f32.mrb[0].mxu0
    %v5158 = vadd.f32 %v4444, %v5157
    %v5159 = vpop.f32.mrb[0].mxu0
    %v5160 = vadd.f32 %v4448, %v5159
    %5161 = vmatprep.mubr.bf16.mxu0 %v4552
    %5162 = vmatmul.mubr.bf16.gmra.mrb[0].mxu0 %v4550
    %v5163 = vpop.f32.mrb[0].mxu0
    %v5164 = vadd.f32 %v4444, %v5163
    %v5165 = vpop.f32.mrb[0].mxu0
    %v5166 = vadd.f32 %v4448, %v5165
    %v5167 = vpop.f32.mrb[0].mxu0
    %v5168 = vadd.f32 %v4444, %v5167
    %v5169 = vpop.f32.mrb[0].mxu0
    %v5170 = vadd.f32 %v4448, %v5169
    %5171 = vdwg.mxu0
    %5172 = vmatprep.subr.bf16.mxu0 %v4892
    %5173 = vmatpush1.bf16.msra.mxu0 %v4891
    %5174 = vmatprep.subr.bf16.mxu0 %v4894
    %5175 = vmatpush1.bf16.msra.mxu0 %v4893
    %5176 = vmatprep.subr.bf16.mxu0 %v4896
    %5177 = vmatpush1.bf16.msra.mxu0 %v4895
    %5178 = vmatprep.subr.bf16.mxu0 %v4898
    %5179 = vmatpush1.bf16.msra.mxu0 %v4897
    %5180 = vmatprep.subr.bf16.mxu0 %v4900
    %5181 = vmatpush1.bf16.msra.mxu0 %v4899
    %5182 = vmatprep.subr.bf16.mxu0 %v4902
    %5183 = vmatpush1.bf16.msra.mxu0 %v4901
    %5184 = vmatprep.subr.bf16.mxu0 %v4904
    %5185 = vmatpush1.bf16.msra.mxu0 %v4903
    %5186 = vmatprep.subr.bf16.mxu0 %v4906
    %5187 = vmatpush1.bf16.msra.mxu0 %v4905
    %5188 = vmatprep.subr.bf16.mxu0 %v4908
    %5189 = vmatpush1.bf16.msra.mxu0 %v4907
    %5190 = vmatprep.subr.bf16.mxu0 %v4910
    %5191 = vmatpush1.bf16.msra.mxu0 %v4909
    %5192 = vmatprep.subr.bf16.mxu0 %v4912
    %5193 = vmatpush1.bf16.msra.mxu0 %v4911
    %5194 = vmatprep.subr.bf16.mxu0 %v4914
    %5195 = vmatpush1.bf16.msra.mxu0 %v4913
    %5196 = vmatprep.subr.bf16.mxu0 %v4916
    %5197 = vmatpush1.bf16.msra.mxu0 %v4915
    %5198 = vmatprep.subr.bf16.mxu0 %v4918
    %5199 = vmatpush1.bf16.msra.mxu0 %v4917
    %5200 = vmatprep.subr.bf16.mxu0 %v4920
    %5201 = vmatpush1.bf16.msra.mxu0 %v4919
    %5202 = vmatprep.subr.bf16.mxu0 %v4922
    %5203 = vmatpush1.bf16.msra.mxu0 %v4921
    %5204 = vmatprep.mubr.bf16.mxu0 %v4465
    %5205 = vmatmul.mubr.bf16.gmra.mrb[0].mxu0 %v4462
    %v5206 = vpop.f32.mrb[0].mxu0
    %v5207 = vadd.f32 %v5054, %v5206
    %v5208 = vpop.f32.mrb[0].mxu0
    %v5209 = vadd.f32 %v5056, %v5208
    %v5210 = vpop.f32.mrb[0].mxu0
    %v5211 = vadd.f32 %v5058, %v5210
    %v5212 = vpop.f32.mrb[0].mxu0
    %v5213 = vadd.f32 %v5060, %v5212
    %5214 = vmatprep.mubr.bf16.mxu0 %v4474
    %5215 = vmatmul.mubr.bf16.gmra.mrb[0].mxu0 %v4472
    %v5216 = vpop.f32.mrb[0].mxu0
    %v5217 = vadd.f32 %v5064, %v5216
    %v5218 = vpop.f32.mrb[0].mxu0
    %v5219 = vadd.f32 %v5066, %v5218
    %v5220 = vpop.f32.mrb[0].mxu0
    %v5221 = vadd.f32 %v5068, %v5220
    %v5222 = vpop.f32.mrb[0].mxu0
    %v5223 = vadd.f32 %v5070, %v5222
    %5224 = vmatprep.mubr.bf16.mxu0 %v4482
    %5225 = vmatmul.mubr.bf16.gmra.mrb[0].mxu0 %v4480
    %v5226 = vpop.f32.mrb[0].mxu0
    %v5227 = vadd.f32 %v5074, %v5226
    %v5228 = vpop.f32.mrb[0].mxu0
    %v5229 = vadd.f32 %v5076, %v5228
    %v5230 = vpop.f32.mrb[0].mxu0
    %v5231 = vadd.f32 %v5078, %v5230
    %v5232 = vpop.f32.mrb[0].mxu0
    %v5233 = vadd.f32 %v5080, %v5232
    %5234 = vmatprep.mubr.bf16.mxu0 %v4490
    %5235 = vmatmul.mubr.bf16.gmra.mrb[0].mxu0 %v4488
    %v5236 = vpop.f32.mrb[0].mxu0
    %v5237 = vadd.f32 %v5084, %v5236
    %v5238 = vpop.f32.mrb[0].mxu0
    %v5239 = vadd.f32 %v5086, %v5238
    %v5240 = vpop.f32.mrb[0].mxu0
    %v5241 = vadd.f32 %v5088, %v5240
    %v5242 = vpop.f32.mrb[0].mxu0
    %v5243 = vadd.f32 %v5090, %v5242
    %5244 = vmatprep.mubr.bf16.mxu0 %v4498
    %5245 = vmatmul.mubr.bf16.gmra.mrb[0].mxu0 %v4496
    %v5246 = vpop.f32.mrb[0].mxu0
    %v5247 = vadd.f32 %v5094, %v5246
    %v5248 = vpop.f32.mrb[0].mxu0
    %v5249 = vadd.f32 %v5096, %v5248
    %v5250 = vpop.f32.mrb[0].mxu0
    %v5251 = vadd.f32 %v5098, %v5250
    %v5252 = vpop.f32.mrb[0].mxu0
    %v5253 = vadd.f32 %v5100, %v5252
    %5254 = vmatprep.mubr.bf16.mxu0 %v4506
    %5255 = vmatmul.mubr.bf16.gmra.mrb[0].mxu0 %v4504
    %v5256 = vpop.f32.mrb[0].mxu0
    %v5257 = vadd.f32 %v5104, %v5256
    %v5258 = vpop.f32.mrb[0].mxu0
    %v5259 = vadd.f32 %v5106, %v5258
    %v5260 = vpop.f32.mrb[0].mxu0
    %v5261 = vadd.f32 %v5108, %v5260
    %v5262 = vpop.f32.mrb[0].mxu0
    %v5263 = vadd.f32 %v5110, %v5262
    %5264 = vmatprep.mubr.bf16.mxu0 %v4514
    %5265 = vmatmul.mubr.bf16.gmra.mrb[0].mxu0 %v4512
    %v5266 = vpop.f32.mrb[0].mxu0
    %v5267 = vadd.f32 %v5114, %v5266
    %v5268 = vpop.f32.mrb[0].mxu0
    %v5269 = vadd.f32 %v5116, %v5268
    %v5270 = vpop.f32.mrb[0].mxu0
    %v5271 = vadd.f32 %v5118, %v5270
    %v5272 = vpop.f32.mrb[0].mxu0
    %v5273 = vadd.f32 %v5120, %v5272
    %5274 = vmatprep.mubr.bf16.mxu0 %v4522
    %5275 = vmatmul.mubr.bf16.gmra.mrb[0].mxu0 %v4520
    %v5276 = vpop.f32.mrb[0].mxu0
    %v5277 = vadd.f32 %v5124, %v5276
    %v5278 = vpop.f32.mrb[0].mxu0
    %v5279 = vadd.f32 %v5126, %v5278
    %v5280 = vpop.f32.mrb[0].mxu0
    %v5281 = vadd.f32 %v5128, %v5280
    %v5282 = vpop.f32.mrb[0].mxu0
    %v5283 = vadd.f32 %v5130, %v5282
    %5284 = vmatprep.mubr.bf16.mxu0 %v4530
    %5285 = vmatmul.mubr.bf16.gmra.mrb[0].mxu0 %v4528
    %v5286 = vpop.f32.mrb[0].mxu0
    %v5287 = vadd.f32 %v5134, %v5286
    %v5288 = vpop.f32.mrb[0].mxu0
    %v5289 = vadd.f32 %v5136, %v5288
    %v5290 = vpop.f32.mrb[0].mxu0
    %v5291 = vadd.f32 %v5138, %v5290
    %v5292 = vpop.f32.mrb[0].mxu0
    %v5293 = vadd.f32 %v5140, %v5292
    %5294 = vmatprep.mubr.bf16.mxu0 %v4538
    %5295 = vmatmul.mubr.bf16.gmra.mrb[0].mxu0 %v4536
    %v5296 = vpop.f32.mrb[0].mxu0
    %v5297 = vadd.f32 %v5144, %v5296
    %v5298 = vpop.f32.mrb[0].mxu0
    %v5299 = vadd.f32 %v5146, %v5298
    %v5300 = vpop.f32.mrb[0].mxu0
    %v5301 = vadd.f32 %v5148, %v5300
    %v5302 = vpop.f32.mrb[0].mxu0
    %v5303 = vadd.f32 %v5150, %v5302
    %5304 = vmatprep.mubr.bf16.mxu0 %v4546
    %5305 = vmatmul.mubr.bf16.gmra.mrb[0].mxu0 %v4544
    %v5306 = vpop.f32.mrb[0].mxu0
    %v5307 = vadd.f32 %v5154, %v5306
    %v5308 = vpop.f32.mrb[0].mxu0
    %v5309 = vadd.f32 %v5156, %v5308
    %v5310 = vpop.f32.mrb[0].mxu0
    %v5311 = vadd.f32 %v5158, %v5310
    %v5312 = vpop.f32.mrb[0].mxu0
    %v5313 = vadd.f32 %v5160, %v5312
    %5314 = vmatprep.mubr.bf16.mxu0 %v4556
    %5315 = vmatmul.mubr.bf16.gmra.mrb[0].mxu0 %v4554
    %v5316 = vpop.f32.mrb[0].mxu0
    %v5317 = vadd.f32 %v5164, %v5316
    %v5318 = vpop.f32.mrb[0].mxu0
    %v5319 = vadd.f32 %v5166, %v5318
    %v5320 = vpop.f32.mrb[0].mxu0
    %v5321 = vadd.f32 %v5168, %v5320
    %v5322 = vpop.f32.mrb[0].mxu0
    %v5323 = vadd.f32 %v5170, %v5322
    %5324 = vdwg.mxu0
    %5325 = vmatprep.subr.bf16.mxu0 %v4924
    %5326 = vmatpush1.bf16.msra.mxu0 %v4923
    %5327 = vmatprep.subr.bf16.mxu0 %v4926
    %5328 = vmatpush1.bf16.msra.mxu0 %v4925
    %5329 = vmatprep.subr.bf16.mxu0 %v4928
    %5330 = vmatpush1.bf16.msra.mxu0 %v4927
    %5331 = vmatprep.subr.bf16.mxu0 %v4930
    %5332 = vmatpush1.bf16.msra.mxu0 %v4929
    %5333 = vmatprep.subr.bf16.mxu0 %v4932
    %5334 = vmatpush1.bf16.msra.mxu0 %v4931
    %5335 = vmatprep.subr.bf16.mxu0 %v4934
    %5336 = vmatpush1.bf16.msra.mxu0 %v4933
    %5337 = vmatprep.subr.bf16.mxu0 %v4936
    %5338 = vmatpush1.bf16.msra.mxu0 %v4935
    %5339 = vmatprep.subr.bf16.mxu0 %v4938
    %5340 = vmatpush1.bf16.msra.mxu0 %v4937
    %5341 = vmatprep.subr.bf16.mxu0 0
    %5342 = vmatpush1.bf16.msra.mxu0 0
    %5343 = vmatprep.subr.bf16.mxu0 0
    %5344 = vmatpush1.bf16.msra.mxu0 0
    %5345 = vmatprep.subr.bf16.mxu0 0
    %5346 = vmatpush1.bf16.msra.mxu0 0
    %5347 = vmatprep.subr.bf16.mxu0 0
    %5348 = vmatpush1.bf16.msra.mxu0 0
    %5349 = vmatprep.subr.bf16.mxu0 0
    %5350 = vmatpush1.bf16.msra.mxu0 0
    %5351 = vmatprep.subr.bf16.mxu0 0
    %5352 = vmatpush1.bf16.msra.mxu0 0
    %5353 = vmatprep.subr.bf16.mxu0 0
    %5354 = vmatpush1.bf16.msra.mxu0 0
    %5355 = vmatprep.subr.bf16.mxu0 0
    %5356 = vmatpush1.bf16.msra.mxu0 0
    %5357 = vmatprep.mubr.bf16.mxu0 0
    %5358 = vmatmul.mubr.bf16.gmra.mrb[0].mxu0 %v4468
    %v5359 = vpop.f32.mrb[0].mxu0
    %v5360 = vadd.f32 %v5207, %v5359
    %v5361 = vpop.f32.mrb[0].mxu0
    %v5362 = vadd.f32 %v5209, %v5361
    %v5363 = vpop.f32.mrb[0].mxu0
    %v5364 = vadd.f32 %v5211, %v5363
    %v5365 = vpop.f32.mrb[0].mxu0
    %v5366 = vadd.f32 %v5213, %v5365
    %5367 = vmatprep.mubr.bf16.mxu0 0
    %5368 = vmatmul.mubr.bf16.gmra.mrb[0].mxu0 %v4476
    %v5369 = vpop.f32.mrb[0].mxu0
    %v5370 = vadd.f32 %v5217, %v5369
    %v5371 = vpop.f32.mrb[0].mxu0
    %v5372 = vadd.f32 %v5219, %v5371
    %v5373 = vpop.f32.mrb[0].mxu0
    %v5374 = vadd.f32 %v5221, %v5373
    %v5375 = vpop.f32.mrb[0].mxu0
    %v5376 = vadd.f32 %v5223, %v5375
    %5377 = vmatprep.mubr.bf16.mxu0 0
    %5378 = vmatmul.mubr.bf16.gmra.mrb[0].mxu0 %v4484
    %v5379 = vpop.f32.mrb[0].mxu0
    %v5380 = vadd.f32 %v5227, %v5379
    %v5381 = vpop.f32.mrb[0].mxu0
    %v5382 = vadd.f32 %v5229, %v5381
    %v5383 = vpop.f32.mrb[0].mxu0
    %v5384 = vadd.f32 %v5231, %v5383
    %v5385 = vpop.f32.mrb[0].mxu0
    %v5386 = vadd.f32 %v5233, %v5385
    %5387 = vmatprep.mubr.bf16.mxu0 0
    %5388 = vmatmul.mubr.bf16.gmra.mrb[0].mxu0 %v4492
    %v5389 = vpop.f32.mrb[0].mxu0
    %v5390 = vadd.f32 %v5237, %v5389
    %v5391 = vpop.f32.mrb[0].mxu0
    %v5392 = vadd.f32 %v5239, %v5391
    %v5393 = vpop.f32.mrb[0].mxu0
    %v5394 = vadd.f32 %v5241, %v5393
    %v5395 = vpop.f32.mrb[0].mxu0
    %v5396 = vadd.f32 %v5243, %v5395
    %5397 = vmatprep.mubr.bf16.mxu0 0
    %5398 = vmatmul.mubr.bf16.gmra.mrb[0].mxu0 %v4500
    %v5399 = vpop.f32.mrb[0].mxu0
    %v5400 = vadd.f32 %v5247, %v5399
    %v5401 = vpop.f32.mrb[0].mxu0
    %v5402 = vadd.f32 %v5249, %v5401
    %v5403 = vpop.f32.mrb[0].mxu0
    %v5404 = vadd.f32 %v5251, %v5403
    %v5405 = vpop.f32.mrb[0].mxu0
    %v5406 = vadd.f32 %v5253, %v5405
    %5407 = vmatprep.mubr.bf16.mxu0 0
    %5408 = vmatmul.mubr.bf16.gmra.mrb[0].mxu0 %v4508
    %v5409 = vpop.f32.mrb[0].mxu0
    %v5410 = vadd.f32 %v5257, %v5409
    %v5411 = vpop.f32.mrb[0].mxu0
    %v5412 = vadd.f32 %v5259, %v5411
    %v5413 = vpop.f32.mrb[0].mxu0
    %v5414 = vadd.f32 %v5261, %v5413
    %v5415 = vpop.f32.mrb[0].mxu0
    %v5416 = vadd.f32 %v5263, %v5415
    %5417 = vmatprep.mubr.bf16.mxu0 0
    %5418 = vmatmul.mubr.bf16.gmra.mrb[0].mxu0 %v4516
    %v5419 = vpop.f32.mrb[0].mxu0
    %v5420 = vadd.f32 %v5267, %v5419
    %v5421 = vpop.f32.mrb[0].mxu0
    %v5422 = vadd.f32 %v5269, %v5421
    %v5423 = vpop.f32.mrb[0].mxu0
    %v5424 = vadd.f32 %v5271, %v5423
    %v5425 = vpop.f32.mrb[0].mxu0
    %v5426 = vadd.f32 %v5273, %v5425
    %5427 = vmatprep.mubr.bf16.mxu0 0
    %5428 = vmatmul.mubr.bf16.gmra.mrb[0].mxu0 %v4524
    %v5429 = vpop.f32.mrb[0].mxu0
    %v5430 = vadd.f32 %v5277, %v5429
    %v5431 = vpop.f32.mrb[0].mxu0
    %v5432 = vadd.f32 %v5279, %v5431
    %v5433 = vpop.f32.mrb[0].mxu0
    %v5434 = vadd.f32 %v5281, %v5433
    %v5435 = vpop.f32.mrb[0].mxu0
    %v5436 = vadd.f32 %v5283, %v5435
    %5437 = vmatprep.mubr.bf16.mxu0 0
    %5438 = vmatmul.mubr.bf16.gmra.mrb[0].mxu0 %v4532
    %v5439 = vpop.f32.mrb[0].mxu0
    %v5440 = vadd.f32 %v5287, %v5439
    %v5441 = vpop.f32.mrb[0].mxu0
    %v5442 = vadd.f32 %v5289, %v5441
    %v5443 = vpop.f32.mrb[0].mxu0
    %v5444 = vadd.f32 %v5291, %v5443
    %v5445 = vpop.f32.mrb[0].mxu0
    %v5446 = vadd.f32 %v5293, %v5445
    %5447 = vmatprep.mubr.bf16.mxu0 0
    %5448 = vmatmul.mubr.bf16.gmra.mrb[0].mxu0 %v4540
    %v5449 = vpop.f32.mrb[0].mxu0
    %v5450 = vadd.f32 %v5297, %v5449
    %v5451 = vpop.f32.mrb[0].mxu0
    %v5452 = vadd.f32 %v5299, %v5451
    %v5453 = vpop.f32.mrb[0].mxu0
    %v5454 = vadd.f32 %v5301, %v5453
    %v5455 = vpop.f32.mrb[0].mxu0
    %v5456 = vadd.f32 %v5303, %v5455
    %5457 = vmatprep.mubr.bf16.mxu0 0
    %5458 = vmatmul.mubr.bf16.gmra.mrb[0].mxu0 %v4548
    %v5459 = vpop.f32.mrb[0].mxu0
    %v5460 = vadd.f32 %v5307, %v5459
    %v5461 = vpop.f32.mrb[0].mxu0
    %v5462 = vadd.f32 %v5309, %v5461
    %v5463 = vpop.f32.mrb[0].mxu0
    %v5464 = vadd.f32 %v5311, %v5463
    %v5465 = vpop.f32.mrb[0].mxu0
    %v5466 = vadd.f32 %v5313, %v5465
    %5467 = vmatprep.mubr.bf16.mxu0 0
    %5468 = vmatmul.mubr.bf16.gmra.mrb[0].mxu0 %v4558
    %v5469 = vpop.f32.mrb[0].mxu0
    %v5470 = vadd.f32 %v5317, %v5469
    %v5471 = vpop.f32.mrb[0].mxu0
    %v5472 = vadd.f32 %v5319, %v5471
    %v5473 = vpop.f32.mrb[0].mxu0
    %v5474 = vadd.f32 %v5321, %v5473
    %v5475 = vpop.f32.mrb[0].mxu0
    %v5476 = vadd.f32 %v5323, %v5475
    %5477 = vdwg.mxu0
    %v5478 = vpack.c.bf16 %v5364, %v5360
    %v5479 = vpack.c.bf16 %v5366, %v5362
    %v5480 = vpack.c.bf16 %v5374, %v5370
    %v5481 = vpack.c.bf16 %v5376, %v5372
    %v5482 = vpack.c.bf16 %v5384, %v5380
    %v5483 = vpack.c.bf16 %v5386, %v5382
    %v5484 = vpack.c.bf16 %v5394, %v5390
    %v5485 = vpack.c.bf16 %v5396, %v5392
    %v5486 = vpack.c.bf16 %v5404, %v5400
    %v5487 = vpack.c.bf16 %v5406, %v5402
    %v5488 = vpack.c.bf16 %v5414, %v5410
    %v5489 = vpack.c.bf16 %v5416, %v5412
    %v5490 = vpack.c.bf16 %v5424, %v5420
    %v5491 = vpack.c.bf16 %v5426, %v5422
    %v5492 = vpack.c.bf16 %v5434, %v5430
    %v5493 = vpack.c.bf16 %v5436, %v5432
    %v5494 = vpack.c.bf16 %v5444, %v5440
    %v5495 = vpack.c.bf16 %v5446, %v5442
    %v5496 = vpack.c.bf16 %v5454, %v5450
    %v5497 = vpack.c.bf16 %v5456, %v5452
    %v5498 = vpack.c.bf16 %v5464, %v5460
    %v5499 = vpack.c.bf16 %v5466, %v5462
    %v5500 = vpack.c.bf16 %v5474, %v5470
    %v5501 = vpack.c.bf16 %v5476, %v5472
    %v5502 = vtanh.bf16.pop %v5478
    %v5503 = vtanh.bf16.pop %v5480
    %v5504 = vtanh.bf16.pop %v5482
    %v5505 = vtanh.bf16.pop %v5484
    %v5506 = vtanh.bf16.pop %v5486
    %v5507 = vtanh.bf16.pop %v5488
    %v5508 = vtanh.bf16.pop %v5490
    %v5509 = vtanh.bf16.pop %v5492
    %v5510 = vtanh.bf16.pop %v5494
    %v5511 = vtanh.bf16.pop %v5496
    %v5512 = vtanh.bf16.pop %v5498
    %v5513 = vtanh.bf16.pop %v5500
    %v5514 = vxor.u32 %v5479, 2147516416
    %v5515 = vxor.u32 %v5481, 2147516416
    %v5516 = vxor.u32 %v5483, 2147516416
    %v5517 = vxor.u32 %v5485, 2147516416
    %v5518 = vxor.u32 %v5487, 2147516416
    %v5519 = vxor.u32 %v5489, 2147516416
    %v5520 = vxor.u32 %v5491, 2147516416
    %v5521 = vxor.u32 %v5493, 2147516416
    %v5522 = vxor.u32 %v5495, 2147516416
    %v5523 = vxor.u32 %v5497, 2147516416
    %v5524 = vxor.u32 %v5499, 2147516416
    %v5525 = vxor.u32 %v5501, 2147516416
    %v5527 = vmul.bf16 %v5514, 1069105081
    %v5528 = vpow.bf16.pop %v5527
    %v5530 = vmul.bf16 %v5515, 1069105081
    %v5531 = vpow.bf16.pop %v5530
    %v5533 = vmul.bf16 %v5516, 1069105081
    %v5534 = vpow.bf16.pop %v5533
    %v5536 = vmul.bf16 %v5517, 1069105081
    %v5537 = vpow.bf16.pop %v5536
    %v5539 = vmul.bf16 %v5518, 1069105081
    %v5540 = vpow.bf16.pop %v5539
    %v5542 = vmul.bf16 %v5519, 1069105081
    %v5543 = vpow.bf16.pop %v5542
    %v5545 = vmul.bf16 %v5520, 1069105081
    %v5546 = vpow.bf16.pop %v5545
    %v5548 = vmul.bf16 %v5521, 1069105081
    %v5549 = vpow.bf16.pop %v5548
    %v5551 = vmul.bf16 %v5522, 1069105081
    %v5552 = vpow.bf16.pop %v5551
    %v5554 = vmul.bf16 %v5523, 1069105081
    %v5555 = vpow.bf16.pop %v5554
    %v5557 = vmul.bf16 %v5524, 1069105081
    %v5558 = vpow.bf16.pop %v5557
    %v5560 = vmul.bf16 %v5525, 1069105081
    %v5561 = vpow.bf16.pop %v5560
    %v5562 = vadd.bf16 %v5528, 1065369472
    %v5563 = vadd.bf16 %v5531, 1065369472
    %v5564 = vadd.bf16 %v5534, 1065369472
    %v5565 = vadd.bf16 %v5537, 1065369472
    %v5566 = vadd.bf16 %v5540, 1065369472
    %v5567 = vadd.bf16 %v5543, 1065369472
    %v5568 = vadd.bf16 %v5546, 1065369472
    %v5569 = vadd.bf16 %v5549, 1065369472
    %v5570 = vadd.bf16 %v5552, 1065369472
    %v5571 = vadd.bf16 %v5555, 1065369472
    %v5572 = vadd.bf16 %v5558, 1065369472
    %v5573 = vadd.bf16 %v5561, 1065369472
    %v5574 = vrcp.bf16.pop %v5562
    %v5575 = vmul.bf16 1065369472, %v5574
    %v5576 = vrcp.bf16.pop %v5563
    %v5577 = vmul.bf16 1065369472, %v5576
    %v5578 = vrcp.bf16.pop %v5564
    %v5579 = vmul.bf16 1065369472, %v5578
    %v5580 = vrcp.bf16.pop %v5565
    %v5581 = vmul.bf16 1065369472, %v5580
    %v5582 = vrcp.bf16.pop %v5566
    %v5583 = vmul.bf16 1065369472, %v5582
    %v5584 = vrcp.bf16.pop %v5567
    %v5585 = vmul.bf16 1065369472, %v5584
    %v5586 = vrcp.bf16.pop %v5568
    %v5587 = vmul.bf16 1065369472, %v5586
    %v5588 = vrcp.bf16.pop %v5569
    %v5589 = vmul.bf16 1065369472, %v5588
    %v5590 = vrcp.bf16.pop %v5570
    %v5591 = vmul.bf16 1065369472, %v5590
    %v5592 = vrcp.bf16.pop %v5571
    %v5593 = vmul.bf16 1065369472, %v5592
    %v5594 = vrcp.bf16.pop %v5572
    %v5595 = vmul.bf16 1065369472, %v5594
    %v5596 = vrcp.bf16.pop %v5573
    %v5597 = vmul.bf16 1065369472, %v5596
    %v5598 = vmul.bf16 %v5502, %v5575
    %v5599 = vmul.bf16 %v5503, %v5577
    %v5600 = vmul.bf16 %v5504, %v5579
    %v5601 = vmul.bf16 %v5505, %v5581
    %v5602 = vmul.bf16 %v5506, %v5583
    %v5603 = vmul.bf16 %v5507, %v5585
    %v5604 = vmul.bf16 %v5508, %v5587
    %v5605 = vmul.bf16 %v5509, %v5589
    %v5606 = vmul.bf16 %v5510, %v5591
    %v5607 = vmul.bf16 %v5511, %v5593
    %v5608 = vmul.bf16 %v5512, %v5595
    %v5609 = vmul.bf16 %v5513, %v5597
    %v5610 = vld [vmem:[%s8] sm:$0xf]
    %v5611 = vld [vmem:[%s8 + $0x4] sm:$0xf]
    %v5612 = vld [vmem:[%s8 + $0x8] sm:$0xf]
    %v5613 = vld [vmem:[%s8 + $0xc] sm:$0xf]
    %v5614 = vld [vmem:[%s8 + $0x10] sm:$0xf]
    %v5615 = vld [vmem:[%s8 + $0x14] sm:$0xf]
    %v5616 = vld [vmem:[%s8 + $0x18] sm:$0xf]
    %v5617 = vld [vmem:[%s8 + $0x1c] sm:$0xf]
    %v5618 = vld [vmem:[%s8 + $0x20] sm:$0xf]
    %v5619 = vld [vmem:[%s8 + $0x24] sm:$0xf]
    %v5620 = vld [vmem:[%s8 + $0x28] sm:$0xf]
    %v5621 = vld [vmem:[%s8 + $0x2c] sm:$0xf]
    %v5622 = vld [vmem:[%s8 + $0x30] sm:$0xf]
    %v5623 = vld [vmem:[%s8 + $0x34] sm:$0xf]
    %v5624 = vld [vmem:[%s8 + $0x38] sm:$0xf]
    %v5625 = vld [vmem:[%s8 + $0x3c] sm:$0xf]
    %v5626 = vld [vmem:[%s9] sm:$0x1]
    %v5628 = vlaneseq
    %v5629 = vshrl.u32 %v5628, 7
    %v5630 = vsub.s32 0, %v5629
    %v5631 = vrot.slane %v5626, %v5630
    %v5649 = vunpack.c.l.b16 %v5610
    %v5650 = vunpack.c.l.b16 %v5611
    %v5651 = vunpack.c.l.b16 %v5612
    %v5652 = vunpack.c.l.b16 %v5613
    %v5653 = vunpack.c.l.b16 %v5614
    %v5654 = vunpack.c.l.b16 %v5615
    %v5655 = vunpack.c.l.b16 %v5616
    %v5656 = vunpack.c.l.b16 %v5617
    %v5657 = vunpack.c.l.b16 %v5618
    %v5658 = vunpack.c.l.b16 %v5619
    %v5659 = vunpack.c.l.b16 %v5620
    %v5660 = vunpack.c.l.b16 %v5621
    %v5661 = vunpack.c.l.b16 %v5622
    %v5662 = vunpack.c.l.b16 %v5623
    %v5663 = vunpack.c.l.b16 %v5624
    %v5664 = vunpack.c.l.b16 %v5625
    %v5665 = vpack.c.b16 %v5650, %v5649
    %v5666 = vpack.c.b16 %v5652, %v5651
    %v5667 = vpack.c.b16 %v5654, %v5653
    %v5668 = vpack.c.b16 %v5656, %v5655
    %v5669 = vpack.c.b16 %v5658, %v5657
    %v5670 = vpack.c.b16 %v5660, %v5659
    %v5671 = vpack.c.b16 %v5662, %v5661
    %v5672 = vpack.c.b16 %v5664, %v5663
    %5681 = vmatprep.subr.bf16.mxu0 0
    %5682 = vmatpush1.bf16.msra.mxu0 %v5665
    %5683 = vmatprep.subr.bf16.mxu0 0
    %5684 = vmatpush1.bf16.msra.mxu0 %v5666
    %5685 = vmatprep.subr.bf16.mxu0 0
    %5686 = vmatpush1.bf16.msra.mxu0 %v5667
    %5687 = vmatprep.subr.bf16.mxu0 0
    %5688 = vmatpush1.bf16.msra.mxu0 %v5668
    %5689 = vmatprep.subr.bf16.mxu0 0
    %5690 = vmatpush1.bf16.msra.mxu0 %v5669
    %5691 = vmatprep.subr.bf16.mxu0 0
    %5692 = vmatpush1.bf16.msra.mxu0 %v5670
    %5693 = vmatprep.subr.bf16.mxu0 0
    %5694 = vmatpush1.bf16.msra.mxu0 %v5671
    %5695 = vmatprep.subr.bf16.mxu0 0
    %5696 = vmatpush1.bf16.msra.mxu0 %v5672
    %5697 = vmatprep.subr.bf16.mxu0 0
    %5698 = vmatpush1.bf16.msra.mxu0 0
    %5699 = vmatprep.subr.bf16.mxu0 0
    %5700 = vmatpush1.bf16.msra.mxu0 0
    %5701 = vmatprep.subr.bf16.mxu0 0
    %5702 = vmatpush1.bf16.msra.mxu0 0
    %5703 = vmatprep.subr.bf16.mxu0 0
    %5704 = vmatpush1.bf16.msra.mxu0 0
    %5705 = vmatprep.subr.bf16.mxu0 0
    %5706 = vmatpush1.bf16.msra.mxu0 0
    %5707 = vmatprep.subr.bf16.mxu0 0
    %5708 = vmatpush1.bf16.msra.mxu0 0
    %5709 = vmatprep.subr.bf16.mxu0 0
    %5710 = vmatpush1.bf16.msra.mxu0 0
    %5711 = vmatprep.subr.bf16.mxu0 0
    %5712 = vmatpush1.bf16.msra.mxu0 0
    %5713 = vmatprep.mubr.bf16.mxu0 0
    %5714 = vmatmul.mubr.bf16.gmra.mrb[0].mxu0 %v5598
    %v5715 = vpop.f32.mrb[0].mxu0
    %v5716 = vadd.f32 %v5631, %v5715
    %v5717 = vpop.f32.mrb[0].mxu0
    %v5718 = vpop.f32.mrb[0].mxu0
    %v5719 = vadd.f32 %v5631, %v5718
    %v5720 = vpop.f32.mrb[0].mxu0
    %5721 = vmatprep.mubr.bf16.mxu0 0
    %5722 = vmatmul.mubr.bf16.gmra.mrb[0].mxu0 %v5599
    %v5723 = vpop.f32.mrb[0].mxu0
    %v5724 = vadd.f32 %v5631, %v5723
    %v5725 = vpop.f32.mrb[0].mxu0
    %v5726 = vpop.f32.mrb[0].mxu0
    %v5727 = vadd.f32 %v5631, %v5726
    %v5728 = vpop.f32.mrb[0].mxu0
    %5729 = vmatprep.mubr.bf16.mxu0 0
    %5730 = vmatmul.mubr.bf16.gmra.mrb[0].mxu0 %v5600
    %v5731 = vpop.f32.mrb[0].mxu0
    %v5732 = vadd.f32 %v5631, %v5731
    %v5733 = vpop.f32.mrb[0].mxu0
    %v5734 = vpop.f32.mrb[0].mxu0
    %v5735 = vadd.f32 %v5631, %v5734
    %v5736 = vpop.f32.mrb[0].mxu0
    %5737 = vmatprep.mubr.bf16.mxu0 0
    %5738 = vmatmul.mubr.bf16.gmra.mrb[0].mxu0 %v5601
    %v5739 = vpop.f32.mrb[0].mxu0
    %v5740 = vadd.f32 %v5631, %v5739
    %v5741 = vpop.f32.mrb[0].mxu0
    %v5742 = vpop.f32.mrb[0].mxu0
    %v5743 = vadd.f32 %v5631, %v5742
    %v5744 = vpop.f32.mrb[0].mxu0
    %5745 = vmatprep.mubr.bf16.mxu0 0
    %5746 = vmatmul.mubr.bf16.gmra.mrb[0].mxu0 %v5602
    %v5747 = vpop.f32.mrb[0].mxu0
    %v5748 = vadd.f32 %v5631, %v5747
    %v5749 = vpop.f32.mrb[0].mxu0
    %v5750 = vpop.f32.mrb[0].mxu0
    %v5751 = vadd.f32 %v5631, %v5750
    %v5752 = vpop.f32.mrb[0].mxu0
    %5753 = vmatprep.mubr.bf16.mxu0 0
    %5754 = vmatmul.mubr.bf16.gmra.mrb[0].mxu0 %v5603
    %v5755 = vpop.f32.mrb[0].mxu0
    %v5756 = vadd.f32 %v5631, %v5755
    %v5757 = vpop.f32.mrb[0].mxu0
    %v5758 = vpop.f32.mrb[0].mxu0
    %v5759 = vadd.f32 %v5631, %v5758
    %v5760 = vpop.f32.mrb[0].mxu0
    %5761 = vmatprep.mubr.bf16.mxu0 0
    %5762 = vmatmul.mubr.bf16.gmra.mrb[0].mxu0 %v5604
    %v5763 = vpop.f32.mrb[0].mxu0
    %v5764 = vadd.f32 %v5631, %v5763
    %v5765 = vpop.f32.mrb[0].mxu0
    %v5766 = vpop.f32.mrb[0].mxu0
    %v5767 = vadd.f32 %v5631, %v5766
    %v5768 = vpop.f32.mrb[0].mxu0
    %5769 = vmatprep.mubr.bf16.mxu0 0
    %5770 = vmatmul.mubr.bf16.gmra.mrb[0].mxu0 %v5605
    %v5771 = vpop.f32.mrb[0].mxu0
    %v5772 = vadd.f32 %v5631, %v5771
    %v5773 = vpop.f32.mrb[0].mxu0
    %v5774 = vpop.f32.mrb[0].mxu0
    %v5775 = vadd.f32 %v5631, %v5774
    %v5776 = vpop.f32.mrb[0].mxu0
    %5777 = vmatprep.mubr.bf16.mxu0 0
    %5778 = vmatmul.mubr.bf16.gmra.mrb[0].mxu0 %v5606
    %v5779 = vpop.f32.mrb[0].mxu0
    %v5780 = vadd.f32 %v5631, %v5779
    %v5781 = vpop.f32.mrb[0].mxu0
    %v5782 = vpop.f32.mrb[0].mxu0
    %v5783 = vadd.f32 %v5631, %v5782
    %v5784 = vpop.f32.mrb[0].mxu0
    %5785 = vmatprep.mubr.bf16.mxu0 0
    %5786 = vmatmul.mubr.bf16.gmra.mrb[0].mxu0 %v5607
    %v5787 = vpop.f32.mrb[0].mxu0
    %v5788 = vadd.f32 %v5631, %v5787
    %v5789 = vpop.f32.mrb[0].mxu0
    %v5790 = vpop.f32.mrb[0].mxu0
    %v5791 = vadd.f32 %v5631, %v5790
    %v5792 = vpop.f32.mrb[0].mxu0
    %5793 = vmatprep.mubr.bf16.mxu0 0
    %5794 = vmatmul.mubr.bf16.gmra.mrb[0].mxu0 %v5608
    %v5795 = vpop.f32.mrb[0].mxu0
    %v5796 = vadd.f32 %v5631, %v5795
    %v5797 = vpop.f32.mrb[0].mxu0
    %v5798 = vpop.f32.mrb[0].mxu0
    %v5799 = vadd.f32 %v5631, %v5798
    %v5800 = vpop.f32.mrb[0].mxu0
    %5801 = vmatprep.mubr.bf16.mxu0 0
    %5802 = vmatmul.mubr.bf16.gmra.mrb[0].mxu0 %v5609
    %v5803 = vpop.f32.mrb[0].mxu0
    %v5804 = vadd.f32 %v5631, %v5803
    %v5805 = vpop.f32.mrb[0].mxu0
    %v5806 = vpop.f32.mrb[0].mxu0
    %v5807 = vadd.f32 %v5631, %v5806
    %v5808 = vpop.f32.mrb[0].mxu0
    %5809 = vdwg.mxu0
    %v5810 = vadd.f32 %v4178, %v5716
    %v5811 = vadd.f32 %v4179, %v5719
    %v5812 = vadd.f32 %v4180, %v5724
    %v5813 = vadd.f32 %v4181, %v5727
    %v5814 = vadd.f32 %v4182, %v5732
    %v5815 = vadd.f32 %v4183, %v5735
    %v5816 = vadd.f32 %v4184, %v5740
    %v5817 = vadd.f32 %v4185, %v5743
    %v5818 = vadd.f32 %v4186, %v5748
    %v5819 = vadd.f32 %v4187, %v5751
    %v5820 = vadd.f32 %v4188, %v5756
    %v5821 = vadd.f32 %v4189, %v5759
    %v5822 = vadd.f32 %v4190, %v5764
    %v5823 = vadd.f32 %v4191, %v5767
    %v5824 = vadd.f32 %v4192, %v5772
    %v5825 = vadd.f32 %v4193, %v5775
    %v5826 = vadd.f32 %v4194, %v5780
    %v5827 = vadd.f32 %v4195, %v5783
    %v5828 = vadd.f32 %v4196, %v5788
    %v5829 = vadd.f32 %v4197, %v5791
    %v5830 = vadd.f32 %v4198, %v5796
    %v5831 = vadd.f32 %v4199, %v5799
    %v5832 = vadd.f32 %v4200, %v5804
    %v5833 = vadd.f32 %v4201, %v5807
    %v5834 = vmul.f32 %v5810, %v85
    %v5835 = vmul.f32 %v5811, %v90
    %v5836 = vmul.f32 %v5812, %v95
    %v5837 = vmul.f32 %v5813, %v100
    %v5838 = vmul.f32 %v5814, %v105
    %v5839 = vmul.f32 %v5815, %v110
    %v5840 = vmul.f32 %v5816, %v115
    %v5841 = vmul.f32 %v5817, %v120
    %v5842 = vmul.f32 %v5818, %v125
    %v5843 = vmul.f32 %v5819, %v130
    %v5844 = vmul.f32 %v5820, %v135
    %v5845 = vmul.f32 %v5821, %v140
    %v5846 = vmul.f32 %v5822, %v145
    %v5847 = vmul.f32 %v5823, %v150
    %v5848 = vmul.f32 %v5824, %v155
    %v5849 = vmul.f32 %v5825, %v160
    %v5850 = vmul.f32 %v5826, %v165
    %v5851 = vmul.f32 %v5827, %v170
    %v5852 = vmul.f32 %v5828, %v175
    %v5853 = vmul.f32 %v5829, %v180
    %v5854 = vmul.f32 %v5830, %v185
    %v5855 = vmul.f32 %v5831, %v190
    %v5856 = vmul.f32 %v5832, %v195
    %v5857 = vmul.f32 %v5833, %v200
    %v5858 = vpack.c.bf16 %v5835, %v5834
    %v5859 = vpack.c.bf16 %v5837, %v5836
    %v5860 = vpack.c.bf16 %v5839, %v5838
    %v5861 = vpack.c.bf16 %v5841, %v5840
    %v5862 = vpack.c.bf16 %v5843, %v5842
    %v5863 = vpack.c.bf16 %v5845, %v5844
    %v5864 = vpack.c.bf16 %v5847, %v5846
    %v5865 = vpack.c.bf16 %v5849, %v5848
    %v5866 = vpack.c.bf16 %v5851, %v5850
    %v5867 = vpack.c.bf16 %v5853, %v5852
    %v5868 = vpack.c.bf16 %v5855, %v5854
    %v5869 = vpack.c.bf16 %v5857, %v5856
    %v5870 = vld [vmem:[%s10] sm:$0xf]
    %v5871 = vld [vmem:[%s10 + $0x4] sm:$0xf]
    %v5872 = vld [vmem:[%s10 + $0x8] sm:$0xf]
    %v5873 = vld [vmem:[%s10 + $0xc] sm:$0xf]
    %v5874 = vld [vmem:[%s10 + $0x10] sm:$0xf]
    %v5875 = vld [vmem:[%s10 + $0x14] sm:$0xf]
    %v5876 = vld [vmem:[%s10 + $0x18] sm:$0xf]
    %v5877 = vld [vmem:[%s10 + $0x1c] sm:$0xf]
    %v5878 = vld [vmem:[%s10 + $0x20] sm:$0xf]
    %v5879 = vld [vmem:[%s10 + $0x24] sm:$0xf]
    %v5880 = vld [vmem:[%s10 + $0x28] sm:$0xf]
    %v5881 = vld [vmem:[%s10 + $0x2c] sm:$0xf]
    %v5882 = vld [vmem:[%s10 + $0x30] sm:$0xf]
    %v5883 = vld [vmem:[%s10 + $0x34] sm:$0xf]
    %v5884 = vld [vmem:[%s10 + $0x38] sm:$0xf]
    %v5885 = vld [vmem:[%s10 + $0x3c] sm:$0xf]
    %v5886 = vld [vmem:[%s11] sm:$0x1]
    %v5888 = vlaneseq
    %v5889 = vshrl.u32 %v5888, 7
    %v5890 = vsub.s32 0, %v5889
    %v5891 = vrot.slane %v5886, %v5890
    %v5909 = vunpack.c.l.b16 %v5870
    %v5910 = vunpack.c.l.b16 %v5871
    %v5911 = vunpack.c.l.b16 %v5872
    %v5912 = vunpack.c.l.b16 %v5873
    %v5913 = vunpack.c.l.b16 %v5874
    %v5914 = vunpack.c.l.b16 %v5875
    %v5915 = vunpack.c.l.b16 %v5876
    %v5916 = vunpack.c.l.b16 %v5877
    %v5917 = vunpack.c.l.b16 %v5878
    %v5918 = vunpack.c.l.b16 %v5879
    %v5919 = vunpack.c.l.b16 %v5880
    %v5920 = vunpack.c.l.b16 %v5881
    %v5921 = vunpack.c.l.b16 %v5882
    %v5922 = vunpack.c.l.b16 %v5883
    %v5923 = vunpack.c.l.b16 %v5884
    %v5924 = vunpack.c.l.b16 %v5885
    %v5925 = vpack.c.b16 %v5910, %v5909
    %v5926 = vpack.c.b16 %v5912, %v5911
    %v5927 = vpack.c.b16 %v5914, %v5913
    %v5928 = vpack.c.b16 %v5916, %v5915
    %v5929 = vpack.c.b16 %v5918, %v5917
    %v5930 = vpack.c.b16 %v5920, %v5919
    %v5931 = vpack.c.b16 %v5922, %v5921
    %v5932 = vpack.c.b16 %v5924, %v5923
    %5941 = vmatprep.subr.bf16.mxu0 0
    %5942 = vmatpush1.bf16.msra.mxu0 %v5925
    %5943 = vmatprep.subr.bf16.mxu0 0
    %5944 = vmatpush1.bf16.msra.mxu0 %v5926
    %5945 = vmatprep.subr.bf16.mxu0 0
    %5946 = vmatpush1.bf16.msra.mxu0 %v5927
    %5947 = vmatprep.subr.bf16.mxu0 0
    %5948 = vmatpush1.bf16.msra.mxu0 %v5928
    %5949 = vmatprep.subr.bf16.mxu0 0
    %5950 = vmatpush1.bf16.msra.mxu0 %v5929
    %5951 = vmatprep.subr.bf16.mxu0 0
    %5952 = vmatpush1.bf16.msra.mxu0 %v5930
    %5953 = vmatprep.subr.bf16.mxu0 0
    %5954 = vmatpush1.bf16.msra.mxu0 %v5931
    %5955 = vmatprep.subr.bf16.mxu0 0
    %5956 = vmatpush1.bf16.msra.mxu0 %v5932
    %5957 = vmatprep.subr.bf16.mxu0 0
    %5958 = vmatpush1.bf16.msra.mxu0 0
    %5959 = vmatprep.subr.bf16.mxu0 0
    %5960 = vmatpush1.bf16.msra.mxu0 0
    %5961 = vmatprep.subr.bf16.mxu0 0
    %5962 = vmatpush1.bf16.msra.mxu0 0
    %5963 = vmatprep.subr.bf16.mxu0 0
    %5964 = vmatpush1.bf16.msra.mxu0 0
    %5965 = vmatprep.subr.bf16.mxu0 0
    %5966 = vmatpush1.bf16.msra.mxu0 0
    %5967 = vmatprep.subr.bf16.mxu0 0
    %5968 = vmatpush1.bf16.msra.mxu0 0
    %5969 = vmatprep.subr.bf16.mxu0 0
    %5970 = vmatpush1.bf16.msra.mxu0 0
    %5971 = vmatprep.subr.bf16.mxu0 0
    %5972 = vmatpush1.bf16.msra.mxu0 0
    %5973 = vmatprep.mubr.bf16.mxu0 0
    %5974 = vmatmul.mubr.bf16.gmra.mrb[0].mxu0 %v5858
    %v5975 = vpop.f32.mrb[0].mxu0
    %v5976 = vadd.f32 %v5891, %v5975
    %v5977 = vpop.f32.mrb[0].mxu0
    %v5978 = vpop.f32.mrb[0].mxu0
    %v5979 = vadd.f32 %v5891, %v5978
    %v5980 = vpop.f32.mrb[0].mxu0
    %5981 = vmatprep.mubr.bf16.mxu0 0
    %5982 = vmatmul.mubr.bf16.gmra.mrb[0].mxu0 %v5859
    %v5983 = vpop.f32.mrb[0].mxu0
    %v5984 = vadd.f32 %v5891, %v5983
    %v5985 = vpop.f32.mrb[0].mxu0
    %v5986 = vpop.f32.mrb[0].mxu0
    %v5987 = vadd.f32 %v5891, %v5986
    %v5988 = vpop.f32.mrb[0].mxu0
    %5989 = vmatprep.mubr.bf16.mxu0 0
    %5990 = vmatmul.mubr.bf16.gmra.mrb[0].mxu0 %v5860
    %v5991 = vpop.f32.mrb[0].mxu0
    %v5992 = vadd.f32 %v5891, %v5991
    %v5993 = vpop.f32.mrb[0].mxu0
    %v5994 = vpop.f32.mrb[0].mxu0
    %v5995 = vadd.f32 %v5891, %v5994
    %v5996 = vpop.f32.mrb[0].mxu0
    %5997 = vmatprep.mubr.bf16.mxu0 0
    %5998 = vmatmul.mubr.bf16.gmra.mrb[0].mxu0 %v5861
    %v5999 = vpop.f32.mrb[0].mxu0
    %v6000 = vadd.f32 %v5891, %v5999
    %v6001 = vpop.f32.mrb[0].mxu0
    %v6002 = vpop.f32.mrb[0].mxu0
    %v6003 = vadd.f32 %v5891, %v6002
    %v6004 = vpop.f32.mrb[0].mxu0
    %6005 = vmatprep.mubr.bf16.mxu0 0
    %6006 = vmatmul.mubr.bf16.gmra.mrb[0].mxu0 %v5862
    %v6007 = vpop.f32.mrb[0].mxu0
    %v6008 = vadd.f32 %v5891, %v6007
    %v6009 = vpop.f32.mrb[0].mxu0
    %v6010 = vpop.f32.mrb[0].mxu0
    %v6011 = vadd.f32 %v5891, %v6010
    %v6012 = vpop.f32.mrb[0].mxu0
    %6013 = vmatprep.mubr.bf16.mxu0 0
    %6014 = vmatmul.mubr.bf16.gmra.mrb[0].mxu0 %v5863
    %v6015 = vpop.f32.mrb[0].mxu0
    %v6016 = vadd.f32 %v5891, %v6015
    %v6017 = vpop.f32.mrb[0].mxu0
    %v6018 = vpop.f32.mrb[0].mxu0
    %v6019 = vadd.f32 %v5891, %v6018
    %v6020 = vpop.f32.mrb[0].mxu0
    %6021 = vmatprep.mubr.bf16.mxu0 0
    %6022 = vmatmul.mubr.bf16.gmra.mrb[0].mxu0 %v5864
    %v6023 = vpop.f32.mrb[0].mxu0
    %v6024 = vadd.f32 %v5891, %v6023
    %v6025 = vpop.f32.mrb[0].mxu0
    %v6026 = vpop.f32.mrb[0].mxu0
    %v6027 = vadd.f32 %v5891, %v6026
    %v6028 = vpop.f32.mrb[0].mxu0
    %6029 = vmatprep.mubr.bf16.mxu0 0
    %6030 = vmatmul.mubr.bf16.gmra.mrb[0].mxu0 %v5865
    %v6031 = vpop.f32.mrb[0].mxu0
    %v6032 = vadd.f32 %v5891, %v6031
    %v6033 = vpop.f32.mrb[0].mxu0
    %v6034 = vpop.f32.mrb[0].mxu0
    %v6035 = vadd.f32 %v5891, %v6034
    %v6036 = vpop.f32.mrb[0].mxu0
    %6037 = vmatprep.mubr.bf16.mxu0 0
    %6038 = vmatmul.mubr.bf16.gmra.mrb[0].mxu0 %v5866
    %v6039 = vpop.f32.mrb[0].mxu0
    %v6040 = vadd.f32 %v5891, %v6039
    %v6041 = vpop.f32.mrb[0].mxu0
    %v6042 = vpop.f32.mrb[0].mxu0
    %v6043 = vadd.f32 %v5891, %v6042
    %v6044 = vpop.f32.mrb[0].mxu0
    %6045 = vmatprep.mubr.bf16.mxu0 0
    %6046 = vmatmul.mubr.bf16.gmra.mrb[0].mxu0 %v5867
    %v6047 = vpop.f32.mrb[0].mxu0
    %v6048 = vadd.f32 %v5891, %v6047
    %v6049 = vpop.f32.mrb[0].mxu0
    %v6050 = vpop.f32.mrb[0].mxu0
    %v6051 = vadd.f32 %v5891, %v6050
    %v6052 = vpop.f32.mrb[0].mxu0
    %6053 = vmatprep.mubr.bf16.mxu0 0
    %6054 = vmatmul.mubr.bf16.gmra.mrb[0].mxu0 %v5868
    %v6055 = vpop.f32.mrb[0].mxu0
    %v6056 = vadd.f32 %v5891, %v6055
    %v6057 = vpop.f32.mrb[0].mxu0
    %v6058 = vpop.f32.mrb[0].mxu0
    %v6059 = vadd.f32 %v5891, %v6058
    %v6060 = vpop.f32.mrb[0].mxu0
    %6061 = vmatprep.mubr.bf16.mxu0 0
    %6062 = vmatmul.mubr.bf16.gmra.mrb[0].mxu0 %v5869
    %v6063 = vpop.f32.mrb[0].mxu0
    %v6064 = vadd.f32 %v5891, %v6063
    %v6065 = vpop.f32.mrb[0].mxu0
    %v6066 = vpop.f32.mrb[0].mxu0
    %v6067 = vadd.f32 %v5891, %v6066
    %v6068 = vpop.f32.mrb[0].mxu0
    %6069 = vdwg.mxu0
    %v6070 = vmul.f32 %v5976, %v85
    %v6071 = vmul.f32 %v5979, %v90
    %v6072 = vmul.f32 %v5984, %v95
    %v6073 = vmul.f32 %v5987, %v100
    %v6074 = vmul.f32 %v5992, %v105
    %v6075 = vmul.f32 %v5995, %v110
    %v6076 = vmul.f32 %v6000, %v115
    %v6077 = vmul.f32 %v6003, %v120
    %v6078 = vmul.f32 %v6008, %v125
    %v6079 = vmul.f32 %v6011, %v130
    %v6080 = vmul.f32 %v6016, %v135
    %v6081 = vmul.f32 %v6019, %v140
    %v6082 = vmul.f32 %v6024, %v145
    %v6083 = vmul.f32 %v6027, %v150
    %v6084 = vmul.f32 %v6032, %v155
    %v6085 = vmul.f32 %v6035, %v160
    %v6086 = vmul.f32 %v6040, %v165
    %v6087 = vmul.f32 %v6043, %v170
    %v6088 = vmul.f32 %v6048, %v175
    %v6089 = vmul.f32 %v6051, %v180
    %v6090 = vmul.f32 %v6056, %v185
    %v6091 = vmul.f32 %v6059, %v190
    %v6092 = vmul.f32 %v6064, %v195
    %v6093 = vmul.f32 %v6067, %v200
    %6094 = vst [vmem:[#allocation6] sm:$0xff] %v6070
    %6095 = vst [vmem:[#allocation6 + $0x8] sm:$0xff] %v6071
    %6096 = vst [vmem:[#allocation6 + $0x10] sm:$0xff] %v6072
    %6097 = vst [vmem:[#allocation6 + $0x18] sm:$0xff] %v6073
    %6098 = vst [vmem:[#allocation6 + $0x20] sm:$0xff] %v6074
    %6099 = vst [vmem:[#allocation6 + $0x28] sm:$0xff] %v6075
    %6100 = vst [vmem:[#allocation6 + $0x30] sm:$0xff] %v6076
    %6101 = vst [vmem:[#allocation6 + $0x38] sm:$0xff] %v6077
    %6102 = vst [vmem:[#allocation6 + $0x40] sm:$0xff] %v6078
    %6103 = vst [vmem:[#allocation6 + $0x48] sm:$0xff] %v6079
    %6104 = vst [vmem:[#allocation6 + $0x50] sm:$0xff] %v6080
    %6105 = vst [vmem:[#allocation6 + $0x58] sm:$0xff] %v6081
    %6106 = vst [vmem:[#allocation6 + $0x60] sm:$0xff] %v6082
    %6107 = vst [vmem:[#allocation6 + $0x68] sm:$0xff] %v6083
    %6108 = vst [vmem:[#allocation6 + $0x70] sm:$0xff] %v6084
    %6109 = vst [vmem:[#allocation6 + $0x78] sm:$0xff] %v6085
    %6110 = vst [vmem:[#allocation6 + $0x80] sm:$0xff] %v6086
    %6111 = vst [vmem:[#allocation6 + $0x88] sm:$0xff] %v6087
    %6112 = vst [vmem:[#allocation6 + $0x90] sm:$0xff] %v6088
    %6113 = vst [vmem:[#allocation6 + $0x98] sm:$0xff] %v6089
    %6114 = vst [vmem:[#allocation6 + $0xa0] sm:$0xff] %v6090
    %6115 = vst [vmem:[#allocation6 + $0xa8] sm:$0xff] %v6091
    %6116 = vst [vmem:[#allocation6 + $0xb0] sm:$0xff] %v6092
    %6117 = vst [vmem:[#allocation6 + $0xb8] sm:$0xff] %v6093
    // Predicated region
    $region54: #{tpu_custom_call.1} parent=1 // pred_check
      _
    $region55: #{tpu_custom_call.1} parent=1 // pred_check_branch
      %6119 = sbr.rel (0) target = $region57
    $region56: #{tpu_custom_call.1} parent=1 // pred_region
      %s6121 = ssub.s32 3072, 3072
      %6122 = vsyncadd [#allocation5], %s6121
      %s6123 = sshll.u32 [#allocation6], 4
      %s6124 = int_to_ptr.vmem [resolvable:$true] %s6123
      %6129 = dma.vmem_to_hbm [thread:$0]  %s6124, 3072, %s12, [#allocation5], 128, 128, 8
    $region57: #{tpu_custom_call.1} parent=1 // pred_fallthru
      _
    // Predicated region
    $region58: #{tpu_custom_call.1} parent=1 // pred_check
      _
    $region59: #{tpu_custom_call.1} parent=1 // pred_check_branch
      %6131 = sbr.rel (0) target = $region61
    $region60: #{tpu_custom_call.1} parent=1 // pred_region
      %6132 = dma.done [#allocation5], 3072
    $region61: #{tpu_custom_call.1} parent=1 // pred_fallthru
      _
    %6133 = vsyncpa [#allocation4], 1
    %6134 = vsyncpa [#allocation5], 1

</llo_original>
